<compile_context>
chip_gen: v7x
topology: tpu7x:2x2x1
jax: 0.10.0
libtpu: 0.0.40
codegen_flags: <defaults>
</compile_context>

<pallas_src>
import math

import jax
import jax.numpy as jnp
from jax.experimental import pallas as pl
from jax.experimental.pallas import tpu as pltpu


def _round_up(x, m):
    return ((x + m - 1) // m) * m


# ----------------------------------------------------------------------------
# Fused encoder kernel: embedding (l==0) + L encoder layers, x resident in VMEM
# ----------------------------------------------------------------------------
def _make_encoder_kernel(Bb, n_valid, Np, H, Dk):
    HDk = H * Dk

    def kernel(feat_ref, w_emb_ref, wqkv_ref, wc_ref, bc_ref, o_ref, x_ref):
        # feat_ref : (Bb*Np, F)      packed per-row features (grid-const over l)
        # w_emb_ref: (F, E)          fused embedding weight (biases folded in)
        # wqkv_ref : (1, E, 3*HDk)   this layer's packed Wq|Wk|Wv (Wq pre-scaled)
        # wc_ref   : (1, HDk, E)     multi_head_combine weight
        # bc_ref   : (1, 1, E)       multi_head_combine bias
        # o_ref    : (Bb*Np, E)      output block (written at last layer only)
        # x_ref    : VMEM scratch (Bb*Np, E), resident across the layer axis
        l = pl.program_id(1)

        @pl.when(l == 0)
        def _():
            x0 = jnp.dot(feat_ref[...], w_emb_ref[...],
                         preferred_element_type=jnp.float32)
            x_ref[...] = x0.astype(x_ref.dtype)

        x = x_ref[...]                                           # (Bb*Np, E)
        qkv = jnp.dot(x, wqkv_ref[0],
                      preferred_element_type=jnp.float32)        # (Bb*Np, 3*HDk)

        if Np != n_valid:
            col = jax.lax.broadcasted_iota(jnp.int32, (1, Np), 1)
            key_bias = jnp.where(col < n_valid, 0.0, -1e30).astype(jnp.float32)
        else:
            key_bias = None

        ctx_rows = []
        for i in range(Bb):                       # static unroll: small Bb
            r0 = i * Np
            q_i = qkv[r0:r0 + Np, 0:HDk]
            k_i = qkv[r0:r0 + Np, HDk:2 * HDk]
            v_i = qkv[r0:r0 + Np, 2 * HDk:3 * HDk]
            head_ctx = []
            for h in range(H):                    # static unroll over heads
                c0 = h * Dk
                q_h = q_i[:, c0:c0 + Dk]          # (Np, Dk), already /sqrt(Dk)
                k_h = k_i[:, c0:c0 + Dk]
                v_h = v_i[:, c0:c0 + Dk]
                s = jax.lax.dot_general(q_h, k_h, (((1,), (1,)), ((), ())),
                                        preferred_element_type=jnp.float32)
                if key_bias is not None:
                    s = s + key_bias
                m = jnp.max(s, axis=-1, keepdims=True)
                e = jnp.exp(s - m)
                p = e * pl.reciprocal(jnp.sum(e, axis=-1, keepdims=True),
                                      approx=True)
                head_ctx.append(jnp.dot(p, v_h,
                                        preferred_element_type=jnp.float32))
            ctx_rows.append(jnp.concatenate(head_ctx, axis=-1))   # (Np, HDk)
        ctx = jnp.concatenate(ctx_rows, axis=0)                   # (Bb*Np, HDk)

        y = jnp.dot(ctx.astype(wc_ref.dtype), wc_ref[0],
                    preferred_element_type=jnp.float32) + bc_ref[0]
        x_ref[...] = y.astype(x_ref.dtype)

        @pl.when(l == pl.num_programs(1) - 1)
        def _():
            o_ref[...] = y.astype(o_ref.dtype)

    return kernel


# ----------------------------------------------------------------------------
# Host-side feature packing (pure data movement; tiny: (B, N, 16))
# Column layout must match the w_embed row layout built in prepare_params:
#   0:2  node_xy   2:6 node_colors   6:8 depot_xy   8 depot-ind   9 node-ind
# ----------------------------------------------------------------------------
def _pack_features(depot_xy, node_xy, node_colors, feat_dim, dtype):
    B, P, _ = node_xy.shape
    depot_row = jnp.concatenate(
        [jnp.zeros((B, 1, 6), dtype), depot_xy.astype(dtype),
         jnp.ones((B, 1, 1), dtype), jnp.zeros((B, 1, 1), dtype)], axis=-1)
    node_rows = jnp.concatenate(
        [node_xy.astype(dtype), node_colors.astype(dtype),
         jnp.zeros((B, P, 2), dtype),
         jnp.zeros((B, P, 1), dtype), jnp.ones((B, P, 1), dtype)], axis=-1)
    feat = jnp.concatenate([depot_row, node_rows], axis=1)      # (B, 1+P, 10)
    return jnp.pad(feat, ((0, 0), (0, 0), (0, feat_dim - feat.shape[-1])))


# ----------------------------------------------------------------------------
# Full CVRP_Encoder forward (single pallas_call)
# ----------------------------------------------------------------------------
def cvrp_encoder(depot_xy, node_xy, node_colors, prep, head_num):
    w_embed, wqkv, wc, bc = prep["w_embed"], prep["wqkv"], prep["wc"], prep["bc"]
    dtype = w_embed.dtype
    F, E = w_embed.shape
    L, _, threeHDk = wqkv.shape
    HDk = threeHDk // 3
    H = head_num
    Dk = HDk // H

    B, P, _ = node_xy.shape
    N = P + 1

    feat = _pack_features(depot_xy, node_xy, node_colors, F, dtype)  # (B,N,F)

    # Pad the sequence axis to a sublane multiple and block Bb batch elements
    # per grid step (amortizes grid-step overhead, raises the matmul M dim).
    Np = _round_up(N, 8)
    Bb = min(8, B)
    Bp = _round_up(B, Bb)
    if Np != N or Bp != B:
        feat = jnp.pad(feat, ((0, Bp - B), (0, Np - N), (0, 0)))
    feat2 = feat.reshape(Bp * Np, F)

    itemsize = jnp.dtype(dtype).itemsize
    cost = pl.CostEstimate(
        flops=(2 * Bp * Np * F * E
               + L * (2 * Bp * Np * E * 3 * HDk
                      + 4 * Bp * H * Np * Np * Dk
                      + 2 * Bp * Np * HDk * E)),
        transcendentals=L * Bp * H * Np * Np,
        bytes_accessed=itemsize * (Bp * Np * (F + E) + F * E
                                   + L * (E * 3 * HDk + HDk * E + E)),
    )

    kernel = _make_encoder_kernel(Bb, N, Np, H, Dk)
    out = pl.pallas_call(
        kernel,
        out_shape=jax.ShapeDtypeStruct((Bp * Np, E), dtype),
        grid_spec=pltpu.PrefetchScalarGridSpec(
            num_scalar_prefetch=0,
            grid=(Bp // Bb, L),
            in_specs=[
                pl.BlockSpec((Bb * Np, F), lambda b, l: (b, 0)),       # features
                pl.BlockSpec((F, E), lambda b, l: (0, 0)),             # W_embed
                pl.BlockSpec((1, E, threeHDk), lambda b, l: (l, 0, 0)),  # Wqkv[l]
                pl.BlockSpec((1, HDk, E), lambda b, l: (l, 0, 0)),     # Wc[l]
                pl.BlockSpec((1, 1, E), lambda b, l: (l, 0, 0)),       # bc[l]
            ],
            out_specs=pl.BlockSpec((Bb * Np, E), lambda b, l: (b, 0)),
            scratch_shapes=[pltpu.VMEM((Bb * Np, E), dtype)],          # resident x
        ),
        compiler_params=pltpu.CompilerParams(
            dimension_semantics=("parallel", "arbitrary")),
        cost_estimate=cost,
    )(feat2, w_embed, wqkv, wc, bc)

    return out.reshape(Bp, Np, E)[:B, :N]


# ----------------------------------------------------------------------------
# Parameter init (mimics nn.Linear uniform(-1/sqrt(fan_in), +1/sqrt(fan_in)))
# and one-time prep into the packed kernel layout.
# ----------------------------------------------------------------------------
def init_encoder_params(key, embedding_dim, head_num, qkv_dim,
                        encoder_layer_num, dtype=jnp.float32):
    E, H, Dk = embedding_dim, head_num, qkv_dim

    def linear(k, fan_in, shape):
        bound = 1.0 / math.sqrt(fan_in)
        return jax.random.uniform(k, shape, dtype, -bound, bound)

    keys = jax.random.split(key, 8 + 8 * encoder_layer_num)
    params = {
        "w_depot": linear(keys[0], 2, (2, E)),
        "b_depot": linear(keys[1], 2, (1, E)),
        "w_depot_color": linear(keys[2], 4, (4, E)),
        "b_depot_color": linear(keys[3], 4, (1, E)),
        "w_node": linear(keys[4], 2, (2, E)),
        "b_node": linear(keys[5], 2, (1, E)),
        "w_color": linear(keys[6], 4, (4, E)),
        "b_color": linear(keys[7], 4, (1, E)),
        "layers": [],
    }
    for l in range(encoder_layer_num):
        k = keys[8 + 8 * l: 8 + 8 * (l + 1)]
        params["layers"].append({
            "wq": linear(k[0], E, (E, H * Dk)),
            "wk": linear(k[1], E, (E, H * Dk)),
            "wv": linear(k[2], E, (E, H * Dk)),
            "wc": linear(k[3], H * Dk, (H * Dk, E)),
            "bc": linear(k[4], H * Dk, (1, E)),
        })
    return params


def prepare_params(raw, head_num, qkv_dim, feat_dim=16):
    """One-time weight transform into the fused-kernel layout."""
    E = raw["w_node"].shape[1]
    dtype = raw["w_node"].dtype
    Dk = qkv_dim

    # Fused embedding weight: biases + constant depot color folded into rows
    # driven by the depot / node indicator feature columns.
    depot_bias = (raw["b_depot"] + raw["b_depot_color"]
                  + jnp.sum(raw["w_depot_color"], axis=0, keepdims=True))
    node_bias = raw["b_node"] + raw["b_color"]
    w_embed = jnp.zeros((feat_dim, E), dtype)
    w_embed = w_embed.at[0:2].set(raw["w_node"])
    w_embed = w_embed.at[2:6].set(raw["w_color"])
    w_embed = w_embed.at[6:8].set(raw["w_depot"])
    w_embed = w_embed.at[8].set(depot_bias[0])
    w_embed = w_embed.at[9].set(node_bias[0])

    scale = jnp.asarray(1.0 / math.sqrt(Dk), dtype)
    wqkv = jnp.stack([jnp.concatenate(
        [l["wq"] * scale, l["wk"], l["wv"]], axis=-1) for l in raw["layers"]])
    wc = jnp.stack([l["wc"] for l in raw["layers"]])
    bc = jnp.stack([l["bc"] for l in raw["layers"]])
    return {"w_embed": w_embed.astype(dtype), "wqkv": wqkv.astype(dtype),
            "wc": wc.astype(dtype), "bc": bc.astype(dtype)}


# ----------------------------------------------------------------------------
# Pure-JAX reference (same math as the PyTorch module, raw param layout)
# ----------------------------------------------------------------------------
def cvrp_encoder_ref(depot_xy, node_xy, node_colors, raw, head_num):
    dtype = raw["w_node"].dtype
    hi = jax.lax.Precision.HIGHEST
    B = depot_xy.shape[0]
    depot_color = jnp.ones((B, 1, 4), dtype)
    emb_depot = (jnp.matmul(depot_xy.astype(dtype), raw["w_depot"], precision=hi)
                 + raw["b_depot"]
                 + jnp.matmul(depot_color, raw["w_depot_color"], precision=hi)
                 + raw["b_depot_color"])
    emb_node = (jnp.matmul(node_xy.astype(dtype), raw["w_node"], precision=hi)
                + raw["b_node"]
                + jnp.matmul(node_colors.astype(dtype), raw["w_color"], precision=hi)
                + raw["b_color"])
    x = jnp.concatenate([emb_depot, emb_node], axis=1).astype(dtype)
    Bx, N, _ = x.shape
    for layer in raw["layers"]:
        HDk = layer["wq"].shape[1]
        Dk = HDk // head_num

        def heads(t):
            return t.reshape(Bx, N, head_num, Dk).transpose(0, 2, 1, 3)

        q = heads(jnp.matmul(x, layer["wq"], precision=hi))
        k = heads(jnp.matmul(x, layer["wk"], precision=hi))
        v = heads(jnp.matmul(x, layer["wv"], precision=hi))
        s = jnp.einsum("bhnd,bhmd->bhnm", q, k, precision=hi,
                       preferred_element_type=jnp.float32) / math.sqrt(Dk)
        p = jax.nn.softmax(s, axis=-1)
        ctx = jnp.einsum("bhnm,bhmd->bhnd", p, v.astype(jnp.float32),
                         precision=hi)
        ctx = ctx.transpose(0, 2, 1, 3).reshape(Bx, N, HDk)
        x = (jnp.matmul(ctx.astype(layer["wc"].dtype), layer["wc"], precision=hi,
                        preferred_element_type=jnp.float32)
             + layer["bc"]).astype(dtype)
    return x


if __name__ == "__main__":
    # Layout-realistic CVRP config: E = 128 keeps the lane axis dense;
    # head_num * qkv_dim == embedding_dim as in the POMO CVRP setup.
    embedding_dim = 128
    head_num = 8
    qkv_dim = 16
    encoder_layer_num = 2
    batch = 2
    problem = 15          # sequence length N = problem + 1 = 16

    key = jax.random.PRNGKey(0)
    k_d, k_n, k_c, k_p = jax.random.split(key, 4)
    depot_xy = jax.random.uniform(k_d, (batch, 1, 2), jnp.float32)
    node_xy = jax.random.uniform(k_n, (batch, problem, 2), jnp.float32)
    node_colors = jax.random.uniform(k_c, (batch, problem, 4), jnp.float32)

    raw32 = init_encoder_params(k_p, embedding_dim, head_num, qkv_dim,
                                encoder_layer_num, dtype=jnp.float32)
    prep32 = prepare_params(raw32, head_num, qkv_dim)

    encoder_fn = jax.jit(cvrp_encoder, static_argnames=("head_num",))

    # float32 run + check against the pure-JAX reference.
    out32 = jax.block_until_ready(
        encoder_fn(depot_xy, node_xy, node_colors, prep32, head_num=head_num))
    ref32 = cvrp_encoder_ref(depot_xy, node_xy, node_colors, raw32, head_num)
    assert out32.shape == (batch, problem + 1, embedding_dim)
    assert jnp.allclose(out32, ref32, atol=2e-2, rtol=2e-2), "f32 mismatch"

    # bfloat16 weights/activations with f32 MXU accumulation (perf config).
    raw16 = jax.tree_util.tree_map(lambda a: a.astype(jnp.bfloat16), raw32)
    prep16 = prepare_params(raw16, head_num, qkv_dim)
    out16 = jax.block_until_ready(
        encoder_fn(depot_xy, node_xy, node_colors, prep16, head_num=head_num))
    assert out16.shape == (batch, problem + 1, embedding_dim)
    assert jnp.allclose(out16.astype(jnp.float32), ref32,
                        atol=1e-1, rtol=1e-1), "bf16 mismatch"

    print("KERNEL_OK")
</pallas_src>

<mosaic_0001>
module attributes {stable_mosaic.version = 11 : i64} {
  func.func @kernel(%arg0: i32, %arg1: i32, %arg2: memref<32x16xf32, #tpu.memory_space<vmem>>, %arg3: memref<16x128xf32, #tpu.memory_space<vmem>>, %arg4: memref<1x128x384xf32, #tpu.memory_space<vmem>>, %arg5: memref<1x128x128xf32, #tpu.memory_space<vmem>>, %arg6: memref<1x1x128xf32, #tpu.memory_space<vmem>>, %arg7: memref<32x128xf32, #tpu.memory_space<vmem>>, %arg8: memref<32x128xf32, #tpu.memory_space<vmem>>) attributes {dimension_semantics = [#tpu.dimension_semantics<parallel>, #tpu.dimension_semantics<arbitrary>], iteration_bounds = array<i64: 1, 2>, scalar_prefetch = 0 : i64, scratch_operands = 1 : i64, tpu.core_type = #tpu.core_type<tc>, window_params = [{transform_indices = @transform_0, window_bounds = array<i64: 32, 16>}, {pipeline_mode = #tpu.pipeline_mode<synchronous>, transform_indices = @transform_1, window_bounds = array<i64: 16, 128>}, {transform_indices = @transform_2, window_bounds = array<i64: 1, 128, 384>}, {transform_indices = @transform_3, window_bounds = array<i64: 1, 128, 128>}, {transform_indices = @transform_4, window_bounds = array<i64: 1, 1, 128>}, {transform_indices = @transform_5, window_bounds = array<i64: 32, 128>}]} {
    %c0_i32 = arith.constant 0 : i32
    %0 = arith.cmpi eq, %arg1, %c0_i32 : i32
    %1 = arith.extui %0 : i1 to i32
    %c0_i32_0 = arith.constant 0 : i32
    %2 = arith.cmpi ne, %1, %c0_i32_0 : i32
    scf.if %2 {
      %c0_79 = arith.constant 0 : index
      %c0_80 = arith.constant 0 : index
      %267 = vector.load %arg2[%c0_79, %c0_80] : memref<32x16xf32, #tpu.memory_space<vmem>>, vector<32x16xf32>
      %c0_81 = arith.constant 0 : index
      %c0_82 = arith.constant 0 : index
      %268 = vector.load %arg3[%c0_81, %c0_82] : memref<16x128xf32, #tpu.memory_space<vmem>>, vector<16x128xf32>
      %cst_83 = arith.constant dense<0.000000e+00> : vector<32x128xf32>
      %269 = tpu.matmul %267, %268, %cst_83 {dimension_numbers = #tpu.dot_dimension_numbers<[1], [0], [0], [1], [0, 0, 1, 1], [], []>} : vector<32x16xf32>, vector<16x128xf32>, vector<32x128xf32> -> vector<32x128xf32>
      %c0_84 = arith.constant 0 : index
      %c0_85 = arith.constant 0 : index
      %270 = vector.load %arg8[%c0_84, %c0_85] : memref<32x128xf32, #tpu.memory_space<vmem>>, vector<32x128xf32>
      tpu.vector_store %arg8[%c0_84, %c0_85], %269 {strides = array<i32>} : memref<32x128xf32, #tpu.memory_space<vmem>>, vector<32x128xf32>,
    } else {
    }
    %c0 = arith.constant 0 : index
    %c0_1 = arith.constant 0 : index
    %3 = vector.load %arg8[%c0, %c0_1] : memref<32x128xf32, #tpu.memory_space<vmem>>, vector<32x128xf32>
    %c0_2 = arith.constant 0 : index
    %c0_3 = arith.constant 0 : index
    %c0_4 = arith.constant 0 : index
    %4 = vector.load %arg4[%c0_2, %c0_3, %c0_4] : memref<1x128x384xf32, #tpu.memory_space<vmem>>, vector<1x128x384xf32>
    %5 = vector.shape_cast %4 : vector<1x128x384xf32> to vector<128x384xf32>
    %cst = arith.constant dense<0.000000e+00> : vector<32x384xf32>
    %6 = tpu.matmul %3, %5, %cst {dimension_numbers = #tpu.dot_dimension_numbers<[1], [0], [0], [1], [0, 0, 1, 1], [], []>} : vector<32x128xf32>, vector<128x384xf32>, vector<32x384xf32> -> vector<32x384xf32>
    %7 = vector.extract_strided_slice %6 {offsets = [0, 0], sizes = [16, 128], strides = [1, 1]} : vector<32x384xf32> to vector<16x128xf32>
    %8 = vector.extract_strided_slice %6 {offsets = [0, 128], sizes = [16, 128], strides = [1, 1]} : vector<32x384xf32> to vector<16x128xf32>
    %9 = vector.extract_strided_slice %6 {offsets = [0, 256], sizes = [16, 128], strides = [1, 1]} : vector<32x384xf32> to vector<16x128xf32>
    %10 = vector.extract_strided_slice %7 {offsets = [0, 0], sizes = [16, 16], strides = [1, 1]} : vector<16x128xf32> to vector<16x16xf32>
    %11 = vector.extract_strided_slice %8 {offsets = [0, 0], sizes = [16, 16], strides = [1, 1]} : vector<16x128xf32> to vector<16x16xf32>
    %12 = vector.extract_strided_slice %9 {offsets = [0, 0], sizes = [16, 16], strides = [1, 1]} : vector<16x128xf32> to vector<16x16xf32>
    %cst_5 = arith.constant dense<0.000000e+00> : vector<16x16xf32>
    %13 = tpu.matmul %10, %11, %cst_5 {dimension_numbers = #tpu.dot_dimension_numbers<[1], [1], [0], [0], [0, 0, 1, 0], [], []>} : vector<16x16xf32>, vector<16x16xf32>, vector<16x16xf32> -> vector<16x16xf32>
    %cst_6 = arith.constant dense<0xFF800000> : vector<16xf32>
    %14 = vector.multi_reduction <maximumf>, %13, %cst_6 [1] : vector<16x16xf32> to vector<16xf32>
    %15 = vector.shape_cast %14 : vector<16xf32> to vector<16x1xf32>
    %16 = vector.broadcast %15 : vector<16x1xf32> to vector<16x16xf32>
    %17 = arith.subf %13, %16 : vector<16x16xf32>
    %18 = math.exp %17 : vector<16x16xf32>
    %cst_7 = arith.constant dense<0.000000e+00> : vector<16xf32>
    %19 = vector.multi_reduction <add>, %18, %cst_7 [1] : vector<16x16xf32> to vector<16xf32>
    %20 = vector.shape_cast %19 : vector<16xf32> to vector<16x1xf32>
    %21 = tpu.reciprocal %20 {approx = true} : vector<16x1xf32> -> vector<16x1xf32>
    %22 = vector.broadcast %21 : vector<16x1xf32> to vector<16x16xf32>
    %23 = arith.mulf %18, %22 : vector<16x16xf32>
    %cst_8 = arith.constant dense<0.000000e+00> : vector<16x16xf32>
    %24 = tpu.matmul %23, %12, %cst_8 {dimension_numbers = #tpu.dot_dimension_numbers<[1], [0], [0], [1], [0, 0, 1, 1], [], []>} : vector<16x16xf32>, vector<16x16xf32>, vector<16x16xf32> -> vector<16x16xf32>
    %25 = vector.extract_strided_slice %7 {offsets = [0, 16], sizes = [16, 16], strides = [1, 1]} : vector<16x128xf32> to vector<16x16xf32>
    %26 = vector.extract_strided_slice %8 {offsets = [0, 16], sizes = [16, 16], strides = [1, 1]} : vector<16x128xf32> to vector<16x16xf32>
    %27 = vector.extract_strided_slice %9 {offsets = [0, 16], sizes = [16, 16], strides = [1, 1]} : vector<16x128xf32> to vector<16x16xf32>
    %cst_9 = arith.constant dense<0.000000e+00> : vector<16x16xf32>
    %28 = tpu.matmul %25, %26, %cst_9 {dimension_numbers = #tpu.dot_dimension_numbers<[1], [1], [0], [0], [0, 0, 1, 0], [], []>} : vector<16x16xf32>, vector<16x16xf32>, vector<16x16xf32> -> vector<16x16xf32>
    %cst_10 = arith.constant dense<0xFF800000> : vector<16xf32>
    %29 = vector.multi_reduction <maximumf>, %28, %cst_10 [1] : vector<16x16xf32> to vector<16xf32>
    %30 = vector.shape_cast %29 : vector<16xf32> to vector<16x1xf32>
    %31 = vector.broadcast %30 : vector<16x1xf32> to vector<16x16xf32>
    %32 = arith.subf %28, %31 : vector<16x16xf32>
    %33 = math.exp %32 : vector<16x16xf32>
    %cst_11 = arith.constant dense<0.000000e+00> : vector<16xf32>
    %34 = vector.multi_reduction <add>, %33, %cst_11 [1] : vector<16x16xf32> to vector<16xf32>
    %35 = vector.shape_cast %34 : vector<16xf32> to vector<16x1xf32>
    %36 = tpu.reciprocal %35 {approx = true} : vector<16x1xf32> -> vector<16x1xf32>
    %37 = vector.broadcast %36 : vector<16x1xf32> to vector<16x16xf32>
    %38 = arith.mulf %33, %37 : vector<16x16xf32>
    %cst_12 = arith.constant dense<0.000000e+00> : vector<16x16xf32>
    %39 = tpu.matmul %38, %27, %cst_12 {dimension_numbers = #tpu.dot_dimension_numbers<[1], [0], [0], [1], [0, 0, 1, 1], [], []>} : vector<16x16xf32>, vector<16x16xf32>, vector<16x16xf32> -> vector<16x16xf32>
    %40 = vector.extract_strided_slice %7 {offsets = [0, 32], sizes = [16, 16], strides = [1, 1]} : vector<16x128xf32> to vector<16x16xf32>
    %41 = vector.extract_strided_slice %8 {offsets = [0, 32], sizes = [16, 16], strides = [1, 1]} : vector<16x128xf32> to vector<16x16xf32>
    %42 = vector.extract_strided_slice %9 {offsets = [0, 32], sizes = [16, 16], strides = [1, 1]} : vector<16x128xf32> to vector<16x16xf32>
    %cst_13 = arith.constant dense<0.000000e+00> : vector<16x16xf32>
    %43 = tpu.matmul %40, %41, %cst_13 {dimension_numbers = #tpu.dot_dimension_numbers<[1], [1], [0], [0], [0, 0, 1, 0], [], []>} : vector<16x16xf32>, vector<16x16xf32>, vector<16x16xf32> -> vector<16x16xf32>
    %cst_14 = arith.constant dense<0xFF800000> : vector<16xf32>
    %44 = vector.multi_reduction <maximumf>, %43, %cst_14 [1] : vector<16x16xf32> to vector<16xf32>
    %45 = vector.shape_cast %44 : vector<16xf32> to vector<16x1xf32>
    %46 = vector.broadcast %45 : vector<16x1xf32> to vector<16x16xf32>
    %47 = arith.subf %43, %46 : vector<16x16xf32>
    %48 = math.exp %47 : vector<16x16xf32>
    %cst_15 = arith.constant dense<0.000000e+00> : vector<16xf32>
    %49 = vector.multi_reduction <add>, %48, %cst_15 [1] : vector<16x16xf32> to vector<16xf32>
    %50 = vector.shape_cast %49 : vector<16xf32> to vector<16x1xf32>
    %51 = tpu.reciprocal %50 {approx = true} : vector<16x1xf32> -> vector<16x1xf32>
    %52 = vector.broadcast %51 : vector<16x1xf32> to vector<16x16xf32>
    %53 = arith.mulf %48, %52 : vector<16x16xf32>
    %cst_16 = arith.constant dense<0.000000e+00> : vector<16x16xf32>
    %54 = tpu.matmul %53, %42, %cst_16 {dimension_numbers = #tpu.dot_dimension_numbers<[1], [0], [0], [1], [0, 0, 1, 1], [], []>} : vector<16x16xf32>, vector<16x16xf32>, vector<16x16xf32> -> vector<16x16xf32>
    %55 = vector.extract_strided_slice %7 {offsets = [0, 48], sizes = [16, 16], strides = [1, 1]} : vector<16x128xf32> to vector<16x16xf32>
    %56 = vector.extract_strided_slice %8 {offsets = [0, 48], sizes = [16, 16], strides = [1, 1]} : vector<16x128xf32> to vector<16x16xf32>
    %57 = vector.extract_strided_slice %9 {offsets = [0, 48], sizes = [16, 16], strides = [1, 1]} : vector<16x128xf32> to vector<16x16xf32>
    %cst_17 = arith.constant dense<0.000000e+00> : vector<16x16xf32>
    %58 = tpu.matmul %55, %56, %cst_17 {dimension_numbers = #tpu.dot_dimension_numbers<[1], [1], [0], [0], [0, 0, 1, 0], [], []>} : vector<16x16xf32>, vector<16x16xf32>, vector<16x16xf32> -> vector<16x16xf32>
    %cst_18 = arith.constant dense<0xFF800000> : vector<16xf32>
    %59 = vector.multi_reduction <maximumf>, %58, %cst_18 [1] : vector<16x16xf32> to vector<16xf32>
    %60 = vector.shape_cast %59 : vector<16xf32> to vector<16x1xf32>
    %61 = vector.broadcast %60 : vector<16x1xf32> to vector<16x16xf32>
    %62 = arith.subf %58, %61 : vector<16x16xf32>
    %63 = math.exp %62 : vector<16x16xf32>
    %cst_19 = arith.constant dense<0.000000e+00> : vector<16xf32>
    %64 = vector.multi_reduction <add>, %63, %cst_19 [1] : vector<16x16xf32> to vector<16xf32>
    %65 = vector.shape_cast %64 : vector<16xf32> to vector<16x1xf32>
    %66 = tpu.reciprocal %65 {approx = true} : vector<16x1xf32> -> vector<16x1xf32>
    %67 = vector.broadcast %66 : vector<16x1xf32> to vector<16x16xf32>
    %68 = arith.mulf %63, %67 : vector<16x16xf32>
    %cst_20 = arith.constant dense<0.000000e+00> : vector<16x16xf32>
    %69 = tpu.matmul %68, %57, %cst_20 {dimension_numbers = #tpu.dot_dimension_numbers<[1], [0], [0], [1], [0, 0, 1, 1], [], []>} : vector<16x16xf32>, vector<16x16xf32>, vector<16x16xf32> -> vector<16x16xf32>
    %70 = vector.extract_strided_slice %7 {offsets = [0, 64], sizes = [16, 16], strides = [1, 1]} : vector<16x128xf32> to vector<16x16xf32>
    %71 = vector.extract_strided_slice %8 {offsets = [0, 64], sizes = [16, 16], strides = [1, 1]} : vector<16x128xf32> to vector<16x16xf32>
    %72 = vector.extract_strided_slice %9 {offsets = [0, 64], sizes = [16, 16], strides = [1, 1]} : vector<16x128xf32> to vector<16x16xf32>
    %cst_21 = arith.constant dense<0.000000e+00> : vector<16x16xf32>
    %73 = tpu.matmul %70, %71, %cst_21 {dimension_numbers = #tpu.dot_dimension_numbers<[1], [1], [0], [0], [0, 0, 1, 0], [], []>} : vector<16x16xf32>, vector<16x16xf32>, vector<16x16xf32> -> vector<16x16xf32>
    %cst_22 = arith.constant dense<0xFF800000> : vector<16xf32>
    %74 = vector.multi_reduction <maximumf>, %73, %cst_22 [1] : vector<16x16xf32> to vector<16xf32>
    %75 = vector.shape_cast %74 : vector<16xf32> to vector<16x1xf32>
    %76 = vector.broadcast %75 : vector<16x1xf32> to vector<16x16xf32>
    %77 = arith.subf %73, %76 : vector<16x16xf32>
    %78 = math.exp %77 : vector<16x16xf32>
    %cst_23 = arith.constant dense<0.000000e+00> : vector<16xf32>
    %79 = vector.multi_reduction <add>, %78, %cst_23 [1] : vector<16x16xf32> to vector<16xf32>
    %80 = vector.shape_cast %79 : vector<16xf32> to vector<16x1xf32>
    %81 = tpu.reciprocal %80 {approx = true} : vector<16x1xf32> -> vector<16x1xf32>
    %82 = vector.broadcast %81 : vector<16x1xf32> to vector<16x16xf32>
    %83 = arith.mulf %78, %82 : vector<16x16xf32>
    %cst_24 = arith.constant dense<0.000000e+00> : vector<16x16xf32>
    %84 = tpu.matmul %83, %72, %cst_24 {dimension_numbers = #tpu.dot_dimension_numbers<[1], [0], [0], [1], [0, 0, 1, 1], [], []>} : vector<16x16xf32>, vector<16x16xf32>, vector<16x16xf32> -> vector<16x16xf32>
    %85 = vector.extract_strided_slice %7 {offsets = [0, 80], sizes = [16, 16], strides = [1, 1]} : vector<16x128xf32> to vector<16x16xf32>
    %86 = vector.extract_strided_slice %8 {offsets = [0, 80], sizes = [16, 16], strides = [1, 1]} : vector<16x128xf32> to vector<16x16xf32>
    %87 = vector.extract_strided_slice %9 {offsets = [0, 80], sizes = [16, 16], strides = [1, 1]} : vector<16x128xf32> to vector<16x16xf32>
    %cst_25 = arith.constant dense<0.000000e+00> : vector<16x16xf32>
    %88 = tpu.matmul %85, %86, %cst_25 {dimension_numbers = #tpu.dot_dimension_numbers<[1], [1], [0], [0], [0, 0, 1, 0], [], []>} : vector<16x16xf32>, vector<16x16xf32>, vector<16x16xf32> -> vector<16x16xf32>
    %cst_26 = arith.constant dense<0xFF800000> : vector<16xf32>
    %89 = vector.multi_reduction <maximumf>, %88, %cst_26 [1] : vector<16x16xf32> to vector<16xf32>
    %90 = vector.shape_cast %89 : vector<16xf32> to vector<16x1xf32>
    %91 = vector.broadcast %90 : vector<16x1xf32> to vector<16x16xf32>
    %92 = arith.subf %88, %91 : vector<16x16xf32>
    %93 = math.exp %92 : vector<16x16xf32>
    %cst_27 = arith.constant dense<0.000000e+00> : vector<16xf32>
    %94 = vector.multi_reduction <add>, %93, %cst_27 [1] : vector<16x16xf32> to vector<16xf32>
    %95 = vector.shape_cast %94 : vector<16xf32> to vector<16x1xf32>
    %96 = tpu.reciprocal %95 {approx = true} : vector<16x1xf32> -> vector<16x1xf32>
    %97 = vector.broadcast %96 : vector<16x1xf32> to vector<16x16xf32>
    %98 = arith.mulf %93, %97 : vector<16x16xf32>
    %cst_28 = arith.constant dense<0.000000e+00> : vector<16x16xf32>
    %99 = tpu.matmul %98, %87, %cst_28 {dimension_numbers = #tpu.dot_dimension_numbers<[1], [0], [0], [1], [0, 0, 1, 1], [], []>} : vector<16x16xf32>, vector<16x16xf32>, vector<16x16xf32> -> vector<16x16xf32>
    %100 = vector.extract_strided_slice %7 {offsets = [0, 96], sizes = [16, 16], strides = [1, 1]} : vector<16x128xf32> to vector<16x16xf32>
    %101 = vector.extract_strided_slice %8 {offsets = [0, 96], sizes = [16, 16], strides = [1, 1]} : vector<16x128xf32> to vector<16x16xf32>
    %102 = vector.extract_strided_slice %9 {offsets = [0, 96], sizes = [16, 16], strides = [1, 1]} : vector<16x128xf32> to vector<16x16xf32>
    %cst_29 = arith.constant dense<0.000000e+00> : vector<16x16xf32>
    %103 = tpu.matmul %100, %101, %cst_29 {dimension_numbers = #tpu.dot_dimension_numbers<[1], [1], [0], [0], [0, 0, 1, 0], [], []>} : vector<16x16xf32>, vector<16x16xf32>, vector<16x16xf32> -> vector<16x16xf32>
    %cst_30 = arith.constant dense<0xFF800000> : vector<16xf32>
    %104 = vector.multi_reduction <maximumf>, %103, %cst_30 [1] : vector<16x16xf32> to vector<16xf32>
    %105 = vector.shape_cast %104 : vector<16xf32> to vector<16x1xf32>
    %106 = vector.broadcast %105 : vector<16x1xf32> to vector<16x16xf32>
    %107 = arith.subf %103, %106 : vector<16x16xf32>
    %108 = math.exp %107 : vector<16x16xf32>
    %cst_31 = arith.constant dense<0.000000e+00> : vector<16xf32>
    %109 = vector.multi_reduction <add>, %108, %cst_31 [1] : vector<16x16xf32> to vector<16xf32>
    %110 = vector.shape_cast %109 : vector<16xf32> to vector<16x1xf32>
    %111 = tpu.reciprocal %110 {approx = true} : vector<16x1xf32> -> vector<16x1xf32>
    %112 = vector.broadcast %111 : vector<16x1xf32> to vector<16x16xf32>
    %113 = arith.mulf %108, %112 : vector<16x16xf32>
    %cst_32 = arith.constant dense<0.000000e+00> : vector<16x16xf32>
    %114 = tpu.matmul %113, %102, %cst_32 {dimension_numbers = #tpu.dot_dimension_numbers<[1], [0], [0], [1], [0, 0, 1, 1], [], []>} : vector<16x16xf32>, vector<16x16xf32>, vector<16x16xf32> -> vector<16x16xf32>
    %115 = vector.extract_strided_slice %7 {offsets = [0, 112], sizes = [16, 16], strides = [1, 1]} : vector<16x128xf32> to vector<16x16xf32>
    %116 = vector.extract_strided_slice %8 {offsets = [0, 112], sizes = [16, 16], strides = [1, 1]} : vector<16x128xf32> to vector<16x16xf32>
    %117 = vector.extract_strided_slice %9 {offsets = [0, 112], sizes = [16, 16], strides = [1, 1]} : vector<16x128xf32> to vector<16x16xf32>
    %cst_33 = arith.constant dense<0.000000e+00> : vector<16x16xf32>
    %118 = tpu.matmul %115, %116, %cst_33 {dimension_numbers = #tpu.dot_dimension_numbers<[1], [1], [0], [0], [0, 0, 1, 0], [], []>} : vector<16x16xf32>, vector<16x16xf32>, vector<16x16xf32> -> vector<16x16xf32>
    %cst_34 = arith.constant dense<0xFF800000> : vector<16xf32>
    %119 = vector.multi_reduction <maximumf>, %118, %cst_34 [1] : vector<16x16xf32> to vector<16xf32>
    %120 = vector.shape_cast %119 : vector<16xf32> to vector<16x1xf32>
    %121 = vector.broadcast %120 : vector<16x1xf32> to vector<16x16xf32>
    %122 = arith.subf %118, %121 : vector<16x16xf32>
    %123 = math.exp %122 : vector<16x16xf32>
    %cst_35 = arith.constant dense<0.000000e+00> : vector<16xf32>
    %124 = vector.multi_reduction <add>, %123, %cst_35 [1] : vector<16x16xf32> to vector<16xf32>
    %125 = vector.shape_cast %124 : vector<16xf32> to vector<16x1xf32>
    %126 = tpu.reciprocal %125 {approx = true} : vector<16x1xf32> -> vector<16x1xf32>
    %127 = vector.broadcast %126 : vector<16x1xf32> to vector<16x16xf32>
    %128 = arith.mulf %123, %127 : vector<16x16xf32>
    %cst_36 = arith.constant dense<0.000000e+00> : vector<16x16xf32>
    %129 = tpu.matmul %128, %117, %cst_36 {dimension_numbers = #tpu.dot_dimension_numbers<[1], [0], [0], [1], [0, 0, 1, 1], [], []>} : vector<16x16xf32>, vector<16x16xf32>, vector<16x16xf32> -> vector<16x16xf32>
    %130 = tpu.concatenate %24, %39, %54, %69, %84, %99, %114, %129 in 1 : vector<16x16xf32>, vector<16x16xf32>, vector<16x16xf32>, vector<16x16xf32>, vector<16x16xf32>, vector<16x16xf32>, vector<16x16xf32>, vector<16x16xf32> -> vector<16x128xf32>
    %131 = vector.extract_strided_slice %6 {offsets = [16, 0], sizes = [16, 128], strides = [1, 1]} : vector<32x384xf32> to vector<16x128xf32>
    %132 = vector.extract_strided_slice %6 {offsets = [16, 128], sizes = [16, 128], strides = [1, 1]} : vector<32x384xf32> to vector<16x128xf32>
    %133 = vector.extract_strided_slice %6 {offsets = [16, 256], sizes = [16, 128], strides = [1, 1]} : vector<32x384xf32> to vector<16x128xf32>
    %134 = vector.extract_strided_slice %131 {offsets = [0, 0], sizes = [16, 16], strides = [1, 1]} : vector<16x128xf32> to vector<16x16xf32>
    %135 = vector.extract_strided_slice %132 {offsets = [0, 0], sizes = [16, 16], strides = [1, 1]} : vector<16x128xf32> to vector<16x16xf32>
    %136 = vector.extract_strided_slice %133 {offsets = [0, 0], sizes = [16, 16], strides = [1, 1]} : vector<16x128xf32> to vector<16x16xf32>
    %cst_37 = arith.constant dense<0.000000e+00> : vector<16x16xf32>
    %137 = tpu.matmul %134, %135, %cst_37 {dimension_numbers = #tpu.dot_dimension_numbers<[1], [1], [0], [0], [0, 0, 1, 0], [], []>} : vector<16x16xf32>, vector<16x16xf32>, vector<16x16xf32> -> vector<16x16xf32>
    %cst_38 = arith.constant dense<0xFF800000> : vector<16xf32>
    %138 = vector.multi_reduction <maximumf>, %137, %cst_38 [1] : vector<16x16xf32> to vector<16xf32>
    %139 = vector.shape_cast %138 : vector<16xf32> to vector<16x1xf32>
    %140 = vector.broadcast %139 : vector<16x1xf32> to vector<16x16xf32>
    %141 = arith.subf %137, %140 : vector<16x16xf32>
    %142 = math.exp %141 : vector<16x16xf32>
    %cst_39 = arith.constant dense<0.000000e+00> : vector<16xf32>
    %143 = vector.multi_reduction <add>, %142, %cst_39 [1] : vector<16x16xf32> to vector<16xf32>
    %144 = vector.shape_cast %143 : vector<16xf32> to vector<16x1xf32>
    %145 = tpu.reciprocal %144 {approx = true} : vector<16x1xf32> -> vector<16x1xf32>
    %146 = vector.broadcast %145 : vector<16x1xf32> to vector<16x16xf32>
    %147 = arith.mulf %142, %146 : vector<16x16xf32>
    %cst_40 = arith.constant dense<0.000000e+00> : vector<16x16xf32>
    %148 = tpu.matmul %147, %136, %cst_40 {dimension_numbers = #tpu.dot_dimension_numbers<[1], [0], [0], [1], [0, 0, 1, 1], [], []>} : vector<16x16xf32>, vector<16x16xf32>, vector<16x16xf32> -> vector<16x16xf32>
    %149 = vector.extract_strided_slice %131 {offsets = [0, 16], sizes = [16, 16], strides = [1, 1]} : vector<16x128xf32> to vector<16x16xf32>
    %150 = vector.extract_strided_slice %132 {offsets = [0, 16], sizes = [16, 16], strides = [1, 1]} : vector<16x128xf32> to vector<16x16xf32>
    %151 = vector.extract_strided_slice %133 {offsets = [0, 16], sizes = [16, 16], strides = [1, 1]} : vector<16x128xf32> to vector<16x16xf32>
    %cst_41 = arith.constant dense<0.000000e+00> : vector<16x16xf32>
    %152 = tpu.matmul %149, %150, %cst_41 {dimension_numbers = #tpu.dot_dimension_numbers<[1], [1], [0], [0], [0, 0, 1, 0], [], []>} : vector<16x16xf32>, vector<16x16xf32>, vector<16x16xf32> -> vector<16x16xf32>
    %cst_42 = arith.constant dense<0xFF800000> : vector<16xf32>
    %153 = vector.multi_reduction <maximumf>, %152, %cst_42 [1] : vector<16x16xf32> to vector<16xf32>
    %154 = vector.shape_cast %153 : vector<16xf32> to vector<16x1xf32>
    %155 = vector.broadcast %154 : vector<16x1xf32> to vector<16x16xf32>
    %156 = arith.subf %152, %155 : vector<16x16xf32>
    %157 = math.exp %156 : vector<16x16xf32>
    %cst_43 = arith.constant dense<0.000000e+00> : vector<16xf32>
    %158 = vector.multi_reduction <add>, %157, %cst_43 [1] : vector<16x16xf32> to vector<16xf32>
    %159 = vector.shape_cast %158 : vector<16xf32> to vector<16x1xf32>
    %160 = tpu.reciprocal %159 {approx = true} : vector<16x1xf32> -> vector<16x1xf32>
    %161 = vector.broadcast %160 : vector<16x1xf32> to vector<16x16xf32>
    %162 = arith.mulf %157, %161 : vector<16x16xf32>
    %cst_44 = arith.constant dense<0.000000e+00> : vector<16x16xf32>
    %163 = tpu.matmul %162, %151, %cst_44 {dimension_numbers = #tpu.dot_dimension_numbers<[1], [0], [0], [1], [0, 0, 1, 1], [], []>} : vector<16x16xf32>, vector<16x16xf32>, vector<16x16xf32> -> vector<16x16xf32>
    %164 = vector.extract_strided_slice %131 {offsets = [0, 32], sizes = [16, 16], strides = [1, 1]} : vector<16x128xf32> to vector<16x16xf32>
    %165 = vector.extract_strided_slice %132 {offsets = [0, 32], sizes = [16, 16], strides = [1, 1]} : vector<16x128xf32> to vector<16x16xf32>
    %166 = vector.extract_strided_slice %133 {offsets = [0, 32], sizes = [16, 16], strides = [1, 1]} : vector<16x128xf32> to vector<16x16xf32>
    %cst_45 = arith.constant dense<0.000000e+00> : vector<16x16xf32>
    %167 = tpu.matmul %164, %165, %cst_45 {dimension_numbers = #tpu.dot_dimension_numbers<[1], [1], [0], [0], [0, 0, 1, 0], [], []>} : vector<16x16xf32>, vector<16x16xf32>, vector<16x16xf32> -> vector<16x16xf32>
    %cst_46 = arith.constant dense<0xFF800000> : vector<16xf32>
    %168 = vector.multi_reduction <maximumf>, %167, %cst_46 [1] : vector<16x16xf32> to vector<16xf32>
    %169 = vector.shape_cast %168 : vector<16xf32> to vector<16x1xf32>
    %170 = vector.broadcast %169 : vector<16x1xf32> to vector<16x16xf32>
    %171 = arith.subf %167, %170 : vector<16x16xf32>
    %172 = math.exp %171 : vector<16x16xf32>
    %cst_47 = arith.constant dense<0.000000e+00> : vector<16xf32>
    %173 = vector.multi_reduction <add>, %172, %cst_47 [1] : vector<16x16xf32> to vector<16xf32>
    %174 = vector.shape_cast %173 : vector<16xf32> to vector<16x1xf32>
    %175 = tpu.reciprocal %174 {approx = true} : vector<16x1xf32> -> vector<16x1xf32>
    %176 = vector.broadcast %175 : vector<16x1xf32> to vector<16x16xf32>
    %177 = arith.mulf %172, %176 : vector<16x16xf32>
    %cst_48 = arith.constant dense<0.000000e+00> : vector<16x16xf32>
    %178 = tpu.matmul %177, %166, %cst_48 {dimension_numbers = #tpu.dot_dimension_numbers<[1], [0], [0], [1], [0, 0, 1, 1], [], []>} : vector<16x16xf32>, vector<16x16xf32>, vector<16x16xf32> -> vector<16x16xf32>
    %179 = vector.extract_strided_slice %131 {offsets = [0, 48], sizes = [16, 16], strides = [1, 1]} : vector<16x128xf32> to vector<16x16xf32>
    %180 = vector.extract_strided_slice %132 {offsets = [0, 48], sizes = [16, 16], strides = [1, 1]} : vector<16x128xf32> to vector<16x16xf32>
    %181 = vector.extract_strided_slice %133 {offsets = [0, 48], sizes = [16, 16], strides = [1, 1]} : vector<16x128xf32> to vector<16x16xf32>
    %cst_49 = arith.constant dense<0.000000e+00> : vector<16x16xf32>
    %182 = tpu.matmul %179, %180, %cst_49 {dimension_numbers = #tpu.dot_dimension_numbers<[1], [1], [0], [0], [0, 0, 1, 0], [], []>} : vector<16x16xf32>, vector<16x16xf32>, vector<16x16xf32> -> vector<16x16xf32>
    %cst_50 = arith.constant dense<0xFF800000> : vector<16xf32>
    %183 = vector.multi_reduction <maximumf>, %182, %cst_50 [1] : vector<16x16xf32> to vector<16xf32>
    %184 = vector.shape_cast %183 : vector<16xf32> to vector<16x1xf32>
    %185 = vector.broadcast %184 : vector<16x1xf32> to vector<16x16xf32>
    %186 = arith.subf %182, %185 : vector<16x16xf32>
    %187 = math.exp %186 : vector<16x16xf32>
    %cst_51 = arith.constant dense<0.000000e+00> : vector<16xf32>
    %188 = vector.multi_reduction <add>, %187, %cst_51 [1] : vector<16x16xf32> to vector<16xf32>
    %189 = vector.shape_cast %188 : vector<16xf32> to vector<16x1xf32>
    %190 = tpu.reciprocal %189 {approx = true} : vector<16x1xf32> -> vector<16x1xf32>
    %191 = vector.broadcast %190 : vector<16x1xf32> to vector<16x16xf32>
    %192 = arith.mulf %187, %191 : vector<16x16xf32>
    %cst_52 = arith.constant dense<0.000000e+00> : vector<16x16xf32>
    %193 = tpu.matmul %192, %181, %cst_52 {dimension_numbers = #tpu.dot_dimension_numbers<[1], [0], [0], [1], [0, 0, 1, 1], [], []>} : vector<16x16xf32>, vector<16x16xf32>, vector<16x16xf32> -> vector<16x16xf32>
    %194 = vector.extract_strided_slice %131 {offsets = [0, 64], sizes = [16, 16], strides = [1, 1]} : vector<16x128xf32> to vector<16x16xf32>
    %195 = vector.extract_strided_slice %132 {offsets = [0, 64], sizes = [16, 16], strides = [1, 1]} : vector<16x128xf32> to vector<16x16xf32>
    %196 = vector.extract_strided_slice %133 {offsets = [0, 64], sizes = [16, 16], strides = [1, 1]} : vector<16x128xf32> to vector<16x16xf32>
    %cst_53 = arith.constant dense<0.000000e+00> : vector<16x16xf32>
    %197 = tpu.matmul %194, %195, %cst_53 {dimension_numbers = #tpu.dot_dimension_numbers<[1], [1], [0], [0], [0, 0, 1, 0], [], []>} : vector<16x16xf32>, vector<16x16xf32>, vector<16x16xf32> -> vector<16x16xf32>
    %cst_54 = arith.constant dense<0xFF800000> : vector<16xf32>
    %198 = vector.multi_reduction <maximumf>, %197, %cst_54 [1] : vector<16x16xf32> to vector<16xf32>
    %199 = vector.shape_cast %198 : vector<16xf32> to vector<16x1xf32>
    %200 = vector.broadcast %199 : vector<16x1xf32> to vector<16x16xf32>
    %201 = arith.subf %197, %200 : vector<16x16xf32>
    %202 = math.exp %201 : vector<16x16xf32>
    %cst_55 = arith.constant dense<0.000000e+00> : vector<16xf32>
    %203 = vector.multi_reduction <add>, %202, %cst_55 [1] : vector<16x16xf32> to vector<16xf32>
    %204 = vector.shape_cast %203 : vector<16xf32> to vector<16x1xf32>
    %205 = tpu.reciprocal %204 {approx = true} : vector<16x1xf32> -> vector<16x1xf32>
    %206 = vector.broadcast %205 : vector<16x1xf32> to vector<16x16xf32>
    %207 = arith.mulf %202, %206 : vector<16x16xf32>
    %cst_56 = arith.constant dense<0.000000e+00> : vector<16x16xf32>
    %208 = tpu.matmul %207, %196, %cst_56 {dimension_numbers = #tpu.dot_dimension_numbers<[1], [0], [0], [1], [0, 0, 1, 1], [], []>} : vector<16x16xf32>, vector<16x16xf32>, vector<16x16xf32> -> vector<16x16xf32>
    %209 = vector.extract_strided_slice %131 {offsets = [0, 80], sizes = [16, 16], strides = [1, 1]} : vector<16x128xf32> to vector<16x16xf32>
    %210 = vector.extract_strided_slice %132 {offsets = [0, 80], sizes = [16, 16], strides = [1, 1]} : vector<16x128xf32> to vector<16x16xf32>
    %211 = vector.extract_strided_slice %133 {offsets = [0, 80], sizes = [16, 16], strides = [1, 1]} : vector<16x128xf32> to vector<16x16xf32>
    %cst_57 = arith.constant dense<0.000000e+00> : vector<16x16xf32>
    %212 = tpu.matmul %209, %210, %cst_57 {dimension_numbers = #tpu.dot_dimension_numbers<[1], [1], [0], [0], [0, 0, 1, 0], [], []>} : vector<16x16xf32>, vector<16x16xf32>, vector<16x16xf32> -> vector<16x16xf32>
    %cst_58 = arith.constant dense<0xFF800000> : vector<16xf32>
    %213 = vector.multi_reduction <maximumf>, %212, %cst_58 [1] : vector<16x16xf32> to vector<16xf32>
    %214 = vector.shape_cast %213 : vector<16xf32> to vector<16x1xf32>
    %215 = vector.broadcast %214 : vector<16x1xf32> to vector<16x16xf32>
    %216 = arith.subf %212, %215 : vector<16x16xf32>
    %217 = math.exp %216 : vector<16x16xf32>
    %cst_59 = arith.constant dense<0.000000e+00> : vector<16xf32>
    %218 = vector.multi_reduction <add>, %217, %cst_59 [1] : vector<16x16xf32> to vector<16xf32>
    %219 = vector.shape_cast %218 : vector<16xf32> to vector<16x1xf32>
    %220 = tpu.reciprocal %219 {approx = true} : vector<16x1xf32> -> vector<16x1xf32>
    %221 = vector.broadcast %220 : vector<16x1xf32> to vector<16x16xf32>
    %222 = arith.mulf %217, %221 : vector<16x16xf32>
    %cst_60 = arith.constant dense<0.000000e+00> : vector<16x16xf32>
    %223 = tpu.matmul %222, %211, %cst_60 {dimension_numbers = #tpu.dot_dimension_numbers<[1], [0], [0], [1], [0, 0, 1, 1], [], []>} : vector<16x16xf32>, vector<16x16xf32>, vector<16x16xf32> -> vector<16x16xf32>
    %224 = vector.extract_strided_slice %131 {offsets = [0, 96], sizes = [16, 16], strides = [1, 1]} : vector<16x128xf32> to vector<16x16xf32>
    %225 = vector.extract_strided_slice %132 {offsets = [0, 96], sizes = [16, 16], strides = [1, 1]} : vector<16x128xf32> to vector<16x16xf32>
    %226 = vector.extract_strided_slice %133 {offsets = [0, 96], sizes = [16, 16], strides = [1, 1]} : vector<16x128xf32> to vector<16x16xf32>
    %cst_61 = arith.constant dense<0.000000e+00> : vector<16x16xf32>
    %227 = tpu.matmul %224, %225, %cst_61 {dimension_numbers = #tpu.dot_dimension_numbers<[1], [1], [0], [0], [0, 0, 1, 0], [], []>} : vector<16x16xf32>, vector<16x16xf32>, vector<16x16xf32> -> vector<16x16xf32>
    %cst_62 = arith.constant dense<0xFF800000> : vector<16xf32>
    %228 = vector.multi_reduction <maximumf>, %227, %cst_62 [1] : vector<16x16xf32> to vector<16xf32>
    %229 = vector.shape_cast %228 : vector<16xf32> to vector<16x1xf32>
    %230 = vector.broadcast %229 : vector<16x1xf32> to vector<16x16xf32>
    %231 = arith.subf %227, %230 : vector<16x16xf32>
    %232 = math.exp %231 : vector<16x16xf32>
    %cst_63 = arith.constant dense<0.000000e+00> : vector<16xf32>
    %233 = vector.multi_reduction <add>, %232, %cst_63 [1] : vector<16x16xf32> to vector<16xf32>
    %234 = vector.shape_cast %233 : vector<16xf32> to vector<16x1xf32>
    %235 = tpu.reciprocal %234 {approx = true} : vector<16x1xf32> -> vector<16x1xf32>
    %236 = vector.broadcast %235 : vector<16x1xf32> to vector<16x16xf32>
    %237 = arith.mulf %232, %236 : vector<16x16xf32>
    %cst_64 = arith.constant dense<0.000000e+00> : vector<16x16xf32>
    %238 = tpu.matmul %237, %226, %cst_64 {dimension_numbers = #tpu.dot_dimension_numbers<[1], [0], [0], [1], [0, 0, 1, 1], [], []>} : vector<16x16xf32>, vector<16x16xf32>, vector<16x16xf32> -> vector<16x16xf32>
    %239 = vector.extract_strided_slice %131 {offsets = [0, 112], sizes = [16, 16], strides = [1, 1]} : vector<16x128xf32> to vector<16x16xf32>
    %240 = vector.extract_strided_slice %132 {offsets = [0, 112], sizes = [16, 16], strides = [1, 1]} : vector<16x128xf32> to vector<16x16xf32>
    %241 = vector.extract_strided_slice %133 {offsets = [0, 112], sizes = [16, 16], strides = [1, 1]} : vector<16x128xf32> to vector<16x16xf32>
    %cst_65 = arith.constant dense<0.000000e+00> : vector<16x16xf32>
    %242 = tpu.matmul %239, %240, %cst_65 {dimension_numbers = #tpu.dot_dimension_numbers<[1], [1], [0], [0], [0, 0, 1, 0], [], []>} : vector<16x16xf32>, vector<16x16xf32>, vector<16x16xf32> -> vector<16x16xf32>
    %cst_66 = arith.constant dense<0xFF800000> : vector<16xf32>
    %243 = vector.multi_reduction <maximumf>, %242, %cst_66 [1] : vector<16x16xf32> to vector<16xf32>
    %244 = vector.shape_cast %243 : vector<16xf32> to vector<16x1xf32>
    %245 = vector.broadcast %244 : vector<16x1xf32> to vector<16x16xf32>
    %246 = arith.subf %242, %245 : vector<16x16xf32>
    %247 = math.exp %246 : vector<16x16xf32>
    %cst_67 = arith.constant dense<0.000000e+00> : vector<16xf32>
    %248 = vector.multi_reduction <add>, %247, %cst_67 [1] : vector<16x16xf32> to vector<16xf32>
    %249 = vector.shape_cast %248 : vector<16xf32> to vector<16x1xf32>
    %250 = tpu.reciprocal %249 {approx = true} : vector<16x1xf32> -> vector<16x1xf32>
    %251 = vector.broadcast %250 : vector<16x1xf32> to vector<16x16xf32>
    %252 = arith.mulf %247, %251 : vector<16x16xf32>
    %cst_68 = arith.constant dense<0.000000e+00> : vector<16x16xf32>
    %253 = tpu.matmul %252, %241, %cst_68 {dimension_numbers = #tpu.dot_dimension_numbers<[1], [0], [0], [1], [0, 0, 1, 1], [], []>} : vector<16x16xf32>, vector<16x16xf32>, vector<16x16xf32> -> vector<16x16xf32>
    %254 = tpu.concatenate %148, %163, %178, %193, %208, %223, %238, %253 in 1 : vector<16x16xf32>, vector<16x16xf32>, vector<16x16xf32>, vector<16x16xf32>, vector<16x16xf32>, vector<16x16xf32>, vector<16x16xf32>, vector<16x16xf32> -> vector<16x128xf32>
    %255 = tpu.concatenate %130, %254 in 0 : vector<16x128xf32>, vector<16x128xf32> -> vector<32x128xf32>
    %c0_69 = arith.constant 0 : index
    %c0_70 = arith.constant 0 : index
    %c0_71 = arith.constant 0 : index
    %256 = vector.load %arg5[%c0_69, %c0_70, %c0_71] : memref<1x128x128xf32, #tpu.memory_space<vmem>>, vector<1x128x128xf32>
    %257 = vector.shape_cast %256 : vector<1x128x128xf32> to vector<128x128xf32>
    %cst_72 = arith.constant dense<0.000000e+00> : vector<32x128xf32>
    %258 = tpu.matmul %255, %257, %cst_72 {dimension_numbers = #tpu.dot_dimension_numbers<[1], [0], [0], [1], [0, 0, 1, 1], [], []>} : vector<32x128xf32>, vector<128x128xf32>, vector<32x128xf32> -> vector<32x128xf32>
    %c0_73 = arith.constant 0 : index
    %c0_74 = arith.constant 0 : index
    %c0_75 = arith.constant 0 : index
    %259 = vector.load %arg6[%c0_73, %c0_74, %c0_75] : memref<1x1x128xf32, #tpu.memory_space<vmem>>, vector<1x1x128xf32>
    %260 = vector.shape_cast %259 : vector<1x1x128xf32> to vector<1x128xf32>
    %261 = vector.broadcast %260 : vector<1x128xf32> to vector<32x128xf32>
    %262 = arith.addf %258, %261 : vector<32x128xf32>
    %c0_76 = arith.constant 0 : index
    %c0_77 = arith.constant 0 : index
    %263 = vector.load %arg8[%c0_76, %c0_77] : memref<32x128xf32, #tpu.memory_space<vmem>>, vector<32x128xf32>
    tpu.vector_store %arg8[%c0_76, %c0_77], %262 {strides = array<i32>} : memref<32x128xf32, #tpu.memory_space<vmem>>, vector<32x128xf32>,
    %c1_i32 = arith.constant 1 : i32
    %264 = arith.cmpi eq, %arg1, %c1_i32 : i32
    %265 = arith.extui %264 : i1 to i32
    %c0_i32_78 = arith.constant 0 : i32
    %266 = arith.cmpi ne, %265, %c0_i32_78 : i32
    scf.if %266 {
      %c0_79 = arith.constant 0 : index
      %c0_80 = arith.constant 0 : index
      %267 = vector.load %arg7[%c0_79, %c0_80] : memref<32x128xf32, #tpu.memory_space<vmem>>, vector<32x128xf32>
      tpu.vector_store %arg7[%c0_79, %c0_80], %262 {strides = array<i32>} : memref<32x128xf32, #tpu.memory_space<vmem>>, vector<32x128xf32>,
    } else {
    }
    return
  }
  func.func @transform_0(%arg0: i32, %arg1: i32) -> (i32, i32) {
    %c0_i32 = arith.constant 0 : i32
    %c0_i32_0 = arith.constant 0 : i32
    return %arg0, %c0_i32 : i32, i32
  }
  func.func @transform_1(%arg0: i32, %arg1: i32) -> (i32, i32) {
    %c0_i32 = arith.constant 0 : i32
    %c0_i32_0 = arith.constant 0 : i32
    %c0_i32_1 = arith.constant 0 : i32
    return %c0_i32, %c0_i32_0 : i32, i32
  }
  func.func @transform_2(%arg0: i32, %arg1: i32) -> (i32, i32, i32) {
    %c0_i32 = arith.constant 0 : i32
    %c0_i32_0 = arith.constant 0 : i32
    %c0_i32_1 = arith.constant 0 : i32
    return %arg1, %c0_i32, %c0_i32_0 : i32, i32, i32
  }
  func.func @transform_3(%arg0: i32, %arg1: i32) -> (i32, i32, i32) {
    %c0_i32 = arith.constant 0 : i32
    %c0_i32_0 = arith.constant 0 : i32
    %c0_i32_1 = arith.constant 0 : i32
    return %arg1, %c0_i32, %c0_i32_0 : i32, i32, i32
  }
  func.func @transform_4(%arg0: i32, %arg1: i32) -> (i32, i32, i32) {
    %c0_i32 = arith.constant 0 : i32
    %c0_i32_0 = arith.constant 0 : i32
    %c0_i32_1 = arith.constant 0 : i32
    return %arg1, %c0_i32, %c0_i32_0 : i32, i32, i32
  }
  func.func @transform_5(%arg0: i32, %arg1: i32) -> (i32, i32) {
    %c0_i32 = arith.constant 0 : i32
    %c0_i32_0 = arith.constant 0 : i32
    return %arg0, %c0_i32 : i32, i32
  }
}

</mosaic_0001>

<llo_original>
// kernel: cvrp_encoder.1
$region0: #{cvrp_encoder.1}
  #allocation0 [shape = 'u32[]', space=smem, size = 0x4, offset = 0x4, fixed_abs, tag = 'smem constant byte address 0x4 - core index']
  #allocation1 [shape = 'u32[144,128]{1,0:T(1,128)}', space=vmem, size = 0x12000, scoped, tag = 'internal scratch']
  #allocation2 [shape = 'f32[32,128]{1,0:T(8,128)}', space=vmem, size = 0x4000, scoped, tag = 'scratch operand']
  %s0 = inlined_call_operand.vmem [shape: f32[32,16], index: 0, kind: input, shape index: {}]
  %s1 = inlined_call_operand.vmem [shape: f32[16,128], index: 1, kind: input, shape index: {}]
  %s2 = inlined_call_operand.hbm [shape: f32[2,128,384], index: 2, kind: input, shape index: {}]
  %s3 = inlined_call_operand.vmem [shape: f32[2,128,128], index: 3, kind: input, shape index: {}]
  %s4 = inlined_call_operand.vmem [shape: f32[2,1,128], index: 4, kind: input, shape index: {}]
  %s5 = inlined_call_operand.hbm [shape: f32[32,128], index: 5, kind: output, shape index: {}]
  %s6 = sld [smem:[#allocation0]]
  $region65: #{cvrp_encoder.1} parent=0
    _
  %s8 = ssub.s32 1, %s6
  %s9 = scalar_select 0, %s8, %s6
  $region1: #{cvrp_encoder.1} parent=0
    #allocation3 [shape = 'u8[393216]{0}', space=vmem, size = 0x60000, scoped, tag = 'input window, operand 2']
    #allocation4 [shape = 's32[2]{0}', space=sflag, size = 0x8, scoped, tag = 'scoped memory for cvrp_encoder.1']
    #allocation5 [shape = 's32[2]{0}', space=sflag, size = 0x8, scoped, tag = 'scoped memory for cvrp_encoder.1']
    #allocation6 [shape = 'u8[16384]{0}', space=vmem, size = 0x4000, scoped, tag = 'output window, operand 0, single buffered']
    %10 = vsyncpa [#allocation4], 0
    %s11 = scalar_lea.sflag [#allocation4], 1
    %12 = vsyncpa %s11, 0
    %13 = vsyncpa [#allocation5], 0
    loop: start=0, step=1, limit=4
    $region2: #{cvrp_encoder.1} parent=1 // loop_pre_header
      _
    $region3: #{cvrp_encoder.1} parent=1 // loop_header
      %s15 = sphi 0, %s19
      %p16 = scmp.ge.s32.totalorder %s15, 4
      %s22 = sphi 0, %s34
      %s23 = sphi 0, %s30
      %s24 = sphi 0, %s22
      %s25 = sphi 0, %s23
      %s26 = sphi 0, %s24
      %s27 = sphi 0, %s25
      %s37 = sphi 0, %s39
      %s40 = sphi 0, %s37
      %s41 = sphi 0, %s40
      %s57 = sphi 0, %s41
      %s61 = sphi 0, %s61
      %s63 = sphi 0, %s61
      %s64 = sphi 0, %s63
      %s78 = sphi 0, %s64
      %s84 = sphi 0, %s86
      %s87 = sphi 0, %s84
      %s88 = sphi 0, %s87
      %s104 = sphi 0, %s88
      %s110 = sphi 0, %s112
      %s113 = sphi 0, %s110
      %s114 = sphi 0, %s113
      %s130 = sphi 0, %s114
      %s136 = sphi 0, %s138
      %s139 = sphi 0, %s136
      %s140 = sphi 0, %s139
      %s156 = sphi 0, %s140
      %s162 = sphi 0, %s164
      %s165 = sphi 0, %s162
      %s166 = sphi 0, %s165
      %s182 = sphi 0, %s166
    $region4: #{cvrp_encoder.1} parent=1 // loop_header_branch
      %18 = sbr.rel (%p16) target = $region8
    $region5: #{cvrp_encoder.1} parent=1 // loop_body
      %s20 = ssub.s32 %s15, 1
      %s21 = ssub.s32 %s15, 2
      %s28 = sadd.s32 1, %s23
      %p29 = scmp.ge.s32.totalorder %s28, 2
      %s30 = scalar_select %p29, 0, %s28
      %s31 = sadd.s32 1, %s22
      %s32 = scalar_select %p29, %s31, %s22
      %p33 = scmp.ge.s32.totalorder %s32, 1
      %s34 = scalar_select %p33, 0, %s32
      %s35 = ssub.s32 %s22, %s34
      %p36 = scmp.eq.s32.totalorder %s35, 0
      %s38 = sadd.s32 %s37, 1
      %s39 = scalar_select %p36, %s37, %s38
      %p42 = pneg %p36
      %p43 = scmp.eq.s32.totalorder %s15, 1
      %p44 = por %p42, %p43
      %p45 = scmp.ne.s32.totalorder %s37, %s40
      %p46 = scmp.eq.s32.totalorder %s15, 0
      %p47 = por %p45, %p46
      %p48 = scmp.ne.s32.totalorder %s37, %s40
      %p49 = scmp.eq.s32.totalorder %s20, 1
      %p50 = por %p48, %p49
      %p51 = scmp.ne.s32.totalorder %s40, %s41
      %p52 = scmp.eq.s32.totalorder %s20, 0
      %p53 = por %p51, %p52
      %p54 = scmp.ne.s32.totalorder %s40, %s41
      %p55 = scmp.eq.s32.totalorder %s21, 1
      %p56 = por %p54, %p55
      %p58 = scmp.ne.s32.totalorder %s41, %s57
      %p59 = scmp.eq.s32.totalorder %s21, 0
      %p60 = por %p58, %p59
      %s62 = sadd.s32 %s61, 1
      %p65 = scmp.eq.s32.totalorder %s15, 1
      %p66 = scmp.ne.s32.totalorder %s61, %s63
      %p67 = scmp.eq.s32.totalorder %s15, 0
      %p68 = por %p66, %p67
      %p69 = scmp.ne.s32.totalorder %s61, %s63
      %p70 = scmp.eq.s32.totalorder %s20, 1
      %p71 = por %p69, %p70
      %p72 = scmp.ne.s32.totalorder %s63, %s64
      %p73 = scmp.eq.s32.totalorder %s20, 0
      %p74 = por %p72, %p73
      %p75 = scmp.ne.s32.totalorder %s63, %s64
      %p76 = scmp.eq.s32.totalorder %s21, 1
      %p77 = por %p75, %p76
      %p79 = scmp.ne.s32.totalorder %s64, %s78
      %p80 = scmp.eq.s32.totalorder %s21, 0
      %p81 = por %p79, %p80
      %s82 = ssub.s32 %s23, %s30
      %p83 = scmp.eq.s32.totalorder %s82, 0
      %s85 = sadd.s32 %s84, 1
      %s86 = scalar_select %p83, %s84, %s85
      %p89 = pneg %p83
      %p90 = scmp.eq.s32.totalorder %s15, 1
      %p91 = por %p89, %p90
      %p92 = scmp.ne.s32.totalorder %s84, %s87
      %p93 = scmp.eq.s32.totalorder %s15, 0
      %p94 = por %p92, %p93
      %p95 = scmp.ne.s32.totalorder %s84, %s87
      %p96 = scmp.eq.s32.totalorder %s20, 1
      %p97 = por %p95, %p96
      %p98 = scmp.ne.s32.totalorder %s87, %s88
      %p99 = scmp.eq.s32.totalorder %s20, 0
      %p100 = por %p98, %p99
      %p101 = scmp.ne.s32.totalorder %s87, %s88
      %p102 = scmp.eq.s32.totalorder %s21, 1
      %p103 = por %p101, %p102
      %p105 = scmp.ne.s32.totalorder %s88, %s104
      %p106 = scmp.eq.s32.totalorder %s21, 0
      %p107 = por %p105, %p106
      %s108 = ssub.s32 %s23, %s30
      %p109 = scmp.eq.s32.totalorder %s108, 0
      %s111 = sadd.s32 %s110, 1
      %s112 = scalar_select %p109, %s110, %s111
      %p115 = pneg %p109
      %p116 = scmp.eq.s32.totalorder %s15, 1
      %p117 = por %p115, %p116
      %p118 = scmp.ne.s32.totalorder %s110, %s113
      %p119 = scmp.eq.s32.totalorder %s15, 0
      %p120 = por %p118, %p119
      %p121 = scmp.ne.s32.totalorder %s110, %s113
      %p122 = scmp.eq.s32.totalorder %s20, 1
      %p123 = por %p121, %p122
      %p124 = scmp.ne.s32.totalorder %s113, %s114
      %p125 = scmp.eq.s32.totalorder %s20, 0
      %p126 = por %p124, %p125
      %p127 = scmp.ne.s32.totalorder %s113, %s114
      %p128 = scmp.eq.s32.totalorder %s21, 1
      %p129 = por %p127, %p128
      %p131 = scmp.ne.s32.totalorder %s114, %s130
      %p132 = scmp.eq.s32.totalorder %s21, 0
      %p133 = por %p131, %p132
      %s134 = ssub.s32 %s23, %s30
      %p135 = scmp.eq.s32.totalorder %s134, 0
      %s137 = sadd.s32 %s136, 1
      %s138 = scalar_select %p135, %s136, %s137
      %p141 = pneg %p135
      %p142 = scmp.eq.s32.totalorder %s15, 1
      %p143 = por %p141, %p142
      %p144 = scmp.ne.s32.totalorder %s136, %s139
      %p145 = scmp.eq.s32.totalorder %s15, 0
      %p146 = por %p144, %p145
      %p147 = scmp.ne.s32.totalorder %s136, %s139
      %p148 = scmp.eq.s32.totalorder %s20, 1
      %p149 = por %p147, %p148
      %p150 = scmp.ne.s32.totalorder %s139, %s140
      %p151 = scmp.eq.s32.totalorder %s20, 0
      %p152 = por %p150, %p151
      %p153 = scmp.ne.s32.totalorder %s139, %s140
      %p154 = scmp.eq.s32.totalorder %s21, 1
      %p155 = por %p153, %p154
      %p157 = scmp.ne.s32.totalorder %s140, %s156
      %p158 = scmp.eq.s32.totalorder %s21, 0
      %p159 = por %p157, %p158
      %s160 = ssub.s32 %s22, %s34
      %p161 = scmp.eq.s32.totalorder %s160, 0
      %s163 = sadd.s32 %s162, 1
      %s164 = scalar_select %p161, %s162, %s163
      %p167 = pneg %p161
      %p168 = scmp.eq.s32.totalorder %s15, 1
      %p169 = por %p167, %p168
      %p170 = scmp.ne.s32.totalorder %s162, %s165
      %p171 = scmp.eq.s32.totalorder %s15, 0
      %p172 = por %p170, %p171
      %p173 = scmp.ne.s32.totalorder %s162, %s165
      %p174 = scmp.eq.s32.totalorder %s20, 1
      %p175 = por %p173, %p174
      %p176 = scmp.ne.s32.totalorder %s165, %s166
      %p177 = scmp.eq.s32.totalorder %s20, 0
      %p178 = por %p176, %p177
      %p179 = scmp.ne.s32.totalorder %s165, %s166
      %p180 = scmp.eq.s32.totalorder %s21, 1
      %p181 = por %p179, %p180
      %p183 = scmp.ne.s32.totalorder %s166, %s182
      %p184 = scmp.eq.s32.totalorder %s21, 0
      %p185 = por %p183, %p184
      %p186 = scmp.le.s32.totalorder 1, %s15
      %p187 = scmp.lt.s32.totalorder %s15, 3
      %p188 = pnand %p186, %p187
      %p189 = pneg %p188
      // Predicated region
      $region9: #{cvrp_encoder.1} parent=5 // pred_check
        _
      $region10: #{cvrp_encoder.1} parent=5 // pred_check_branch
        %191 = sbr.rel (%p188) target = $region12
      $region11: #{cvrp_encoder.1} parent=5 // pred_region
        %s192 = ssub.s32 %s15, 1
        // Predicated region
        $region13: #{cvrp_encoder.1} parent=11 // pred_check
          %p193 = pneg %p53
        $region14: #{cvrp_encoder.1} parent=11 // pred_check_branch
          %195 = sbr.rel (%p193) target = $region16
        $region15: #{cvrp_encoder.1} parent=11 // pred_region
          %s196 = smul.u32 4, %s24
          %p197 = scmp.lt.s32.totalorder %s196, 3
          %s198 = scalar_select %p197, %s196, 3
          %s199 = smul.addr %s198, 8
          %s200 = scalar_lea.vmem %s0, %s199
          %s201 = smul.u32 4, %s24
        $region16: #{cvrp_encoder.1} parent=11 // pred_fallthru
          _
        // Predicated region
        $region17: #{cvrp_encoder.1} parent=11 // pred_check
          %p202 = pneg %p74
        $region18: #{cvrp_encoder.1} parent=11 // pred_check_branch
          %204 = sbr.rel (%p202) target = $region20
        $region19: #{cvrp_encoder.1} parent=11 // pred_region
          _
        $region20: #{cvrp_encoder.1} parent=11 // pred_fallthru
          _
      $region12: #{cvrp_encoder.1} parent=5 // pred_fallthru
        _
      %p205 = scmp.lt.s32.totalorder %s15, 2
      // Predicated region
      $region21: #{cvrp_encoder.1} parent=5 // pred_check
        %p206 = pneg %p205
      $region22: #{cvrp_encoder.1} parent=5 // pred_check_branch
        %208 = sbr.rel (%p206) target = $region24
      $region23: #{cvrp_encoder.1} parent=5 // pred_region
        // Predicated region
        $region25: #{cvrp_encoder.1} parent=23 // pred_check
          %p209 = pneg %p94
        $region26: #{cvrp_encoder.1} parent=23 // pred_check_branch
          %211 = sbr.rel (%p209) target = $region28
        $region27: #{cvrp_encoder.1} parent=23 // pred_region
          %s212 = sand.u32 %s84, 1
          %s213 = scalar_lea.sflag [#allocation4], %s212
          %s214 = sand.u32 %s84, 1
          %s215 = smul.addr %s214, 384
          %s216 = scalar_lea.vmem [#allocation3], %s215
          %s218 = ssub.s32 6144, 6144
          %219 = vsyncadd %s213, %s218
          %s220 = smul.addr %s23, 48
          %s221 = smul.addr %s220, 128
          %s222 = scalar_lea.hbm %s2, %s221
          %s223 = sshll.u32 %s216, 4
          %s224 = int_to_ptr.vmem [resolvable:$true] %s223
          %229 = dma.hbm_to_vmem [thread:$0]  %s222, 6144, %s224, %s213, 384, 384, 24
        $region28: #{cvrp_encoder.1} parent=23 // pred_fallthru
          _
        // Predicated region
        $region29: #{cvrp_encoder.1} parent=23 // pred_check
          %p230 = pneg %p120
        $region30: #{cvrp_encoder.1} parent=23 // pred_check_branch
          %232 = sbr.rel (%p230) target = $region32
        $region31: #{cvrp_encoder.1} parent=23 // pred_region
          %p233 = scmp.lt.s32.totalorder %s23, 1
          %s234 = scalar_select %p233, %s23, 1
          %s235 = smul.addr %s234, 16
          %s236 = smul.addr %s235, 8
          %s237 = scalar_lea.vmem %s3, %s236
        $region32: #{cvrp_encoder.1} parent=23 // pred_fallthru
          _
        // Predicated region
        $region33: #{cvrp_encoder.1} parent=23 // pred_check
          %p238 = pneg %p146
        $region34: #{cvrp_encoder.1} parent=23 // pred_check_branch
          %240 = sbr.rel (%p238) target = $region36
        $region35: #{cvrp_encoder.1} parent=23 // pred_region
          %p241 = scmp.lt.s32.totalorder %s23, 1
          %s242 = scalar_select %p241, %s23, 1
          %s243 = scalar_lea.vmem %s4, %s242
        $region36: #{cvrp_encoder.1} parent=23 // pred_fallthru
          _
      $region24: #{cvrp_encoder.1} parent=5 // pred_fallthru
        _
      %p244 = scmp.le.s32.totalorder 1, %s15
      %p245 = scmp.lt.s32.totalorder %s15, 3
      %p246 = pnand %p244, %p245
      %p247 = pneg %p246
      // Predicated region
      $region37: #{cvrp_encoder.1} parent=5 // pred_check
        _
      $region38: #{cvrp_encoder.1} parent=5 // pred_check_branch
        %249 = sbr.rel (%p246) target = $region40
      $region39: #{cvrp_encoder.1} parent=5 // pred_region
        %s250 = ssub.s32 %s15, 1
        %s251 = sand.u32 %s87, 1
        %s252 = scalar_lea.sflag [#allocation4], %s251
        %s253 = sand.u32 %s87, 1
        %s254 = smul.addr %s253, 384
        %s255 = scalar_lea.vmem [#allocation3], %s254
        // Predicated region
        $region41: #{cvrp_encoder.1} parent=39 // pred_check
          %p256 = pneg %p100
        $region42: #{cvrp_encoder.1} parent=39 // pred_check_branch
          %258 = sbr.rel (%p256) target = $region44
        $region43: #{cvrp_encoder.1} parent=39 // pred_region
          %259 = dma.done %s252, 6144
        $region44: #{cvrp_encoder.1} parent=39 // pred_fallthru
          _
        %s260 = smul.u32 4, %s24
        %p261 = scmp.lt.s32.totalorder %s260, 3
        %s262 = scalar_select %p261, %s260, 3
        %s263 = smul.addr %s262, 8
        %s264 = scalar_lea.vmem %s0, %s263
        %p265 = pneg %p53
        %p266 = pneg %p50
        %p267 = pneg %p74
        %p268 = pneg %p71
        %s269 = sand.u32 %s87, 1
        %s270 = scalar_lea.sflag [#allocation4], %s269
        %s271 = sand.u32 %s87, 1
        %s272 = smul.addr %s271, 384
        %s273 = scalar_lea.vmem [#allocation3], %s272
        %p274 = pneg %p100
        %p275 = pneg %p97
        %p276 = scmp.lt.s32.totalorder %s25, 1
        %s277 = scalar_select %p276, %s25, 1
        %s278 = smul.addr %s277, 16
        %s279 = smul.addr %s278, 8
        %s280 = scalar_lea.vmem %s3, %s279
        %p281 = pneg %p126
        %p282 = pneg %p123
        %p283 = scmp.lt.s32.totalorder %s25, 1
        %s284 = scalar_select %p283, %s25, 1
        %s285 = scalar_lea.vmem %s4, %s284
        %p286 = pneg %p152
        %p287 = pneg %p149
        %p288 = pneg %p178
        %p289 = pneg %p175
        %s290 = smul.u32 4, %s24
        %p291 = scmp.lt.s32.totalorder %s290, 3
        %s292 = scalar_select %p291, %s290, 3
        %s293 = smul.addr %s292, 8
        %s294 = scalar_lea.vmem %s0, %s293
        %s295 = smul.u32 4, %s24
        %p296 = scmp.lt.s32.totalorder %s25, 1
        %s297 = scalar_select %p296, %s25, 1
        %s298 = smul.addr %s297, 16
        %s299 = smul.addr %s298, 8
        %s300 = scalar_lea.vmem %s3, %s299
        %p301 = scmp.lt.s32.totalorder %s25, 1
        %s302 = scalar_select %p301, %s25, 1
        %s303 = scalar_lea.vmem %s4, %s302
        %s304 = smul.u32 4, %s24
        %p305 = scmp.eq.s32.totalorder %s25, 0
        // Predicated region
        $region45: #{cvrp_encoder.1} parent=39 // pred_check
          %p306 = pneg %p305
        $region46: #{cvrp_encoder.1} parent=39 // pred_check_branch
          %308 = sbr.rel (%p306) target = $region48
        $region47: #{cvrp_encoder.1} parent=39 // pred_region
          %v309 = vld [vmem:[%s294] sm:$0xff]
          %v310 = vld [vmem:[%s294 + $0x8] sm:$0xff]
          %v311 = vld [vmem:[%s294 + $0x10] sm:$0xff]
          %v312 = vld [vmem:[%s294 + $0x18] sm:$0xff]
          %v313 = vld [vmem:[%s1] sm:$0xff]
          %v314 = vld [vmem:[%s1 + $0x8] sm:$0xff]
          %vm315 = vcmask 130048
          %v317 = vsel %vm315, %v309, 0
          %v320 = vsel %vm315, %v310, 0
          %v323 = vsel %vm315, %v311, 0
          %v326 = vsel %vm315, %v312, 0
          %328 = vmatprep.subr.mxu0 0.0
          %329 = vmatpush1.msra.mxu0 %v313
          %330 = vmatprep.subr.mxu0 0.0
          %331 = vmatpush1.msra.mxu0 %v314
          %332 = vmatprep.subr.mxu0 0.0
          %333 = vmatpush1.msra.mxu0 0.0
          %334 = vmatprep.subr.mxu0 0.0
          %335 = vmatpush1.msra.mxu0 0.0
          %336 = vmatprep.subr.mxu0 0.0
          %337 = vmatpush1.msra.mxu0 0.0
          %338 = vmatprep.subr.mxu0 0.0
          %339 = vmatpush1.msra.mxu0 0.0
          %340 = vmatprep.subr.mxu0 0.0
          %341 = vmatpush1.msra.mxu0 0.0
          %342 = vmatprep.subr.mxu0 0.0
          %343 = vmatpush1.msra.mxu0 0.0
          %344 = vmatprep.subr.mxu0 0.0
          %345 = vmatpush1.msra.mxu0 0.0
          %346 = vmatprep.subr.mxu0 0.0
          %347 = vmatpush1.msra.mxu0 0.0
          %348 = vmatprep.subr.mxu0 0.0
          %349 = vmatpush1.msra.mxu0 0.0
          %350 = vmatprep.subr.mxu0 0.0
          %351 = vmatpush1.msra.mxu0 0.0
          %352 = vmatprep.subr.mxu0 0.0
          %353 = vmatpush1.msra.mxu0 0.0
          %354 = vmatprep.subr.mxu0 0.0
          %355 = vmatpush1.msra.mxu0 0.0
          %356 = vmatprep.subr.mxu0 0.0
          %357 = vmatpush1.msra.mxu0 0.0
          %358 = vmatprep.subr.mxu0 0.0
          %359 = vmatpush1.msra.mxu0 0.0
          %360 = vmatprep.subr.mxu0 0.0
          %361 = vmatpush1.msra.mxu0 0.0
          %362 = vmatprep.subr.mxu0 0.0
          %363 = vmatpush1.msra.mxu0 0.0
          %364 = vmatprep.subr.mxu0 0.0
          %365 = vmatpush1.msra.mxu0 0.0
          %366 = vmatprep.subr.mxu0 0.0
          %367 = vmatpush1.msra.mxu0 0.0
          %368 = vmatprep.subr.mxu0 0.0
          %369 = vmatpush1.msra.mxu0 0.0
          %370 = vmatprep.subr.mxu0 0.0
          %371 = vmatpush1.msra.mxu0 0.0
          %372 = vmatprep.subr.mxu0 0.0
          %373 = vmatpush1.msra.mxu0 0.0
          %374 = vmatprep.subr.mxu0 0.0
          %375 = vmatpush1.msra.mxu0 0.0
          %376 = vmatprep.subr.mxu0 0.0
          %377 = vmatpush1.msra.mxu0 0.0
          %378 = vmatprep.subr.mxu0 0.0
          %379 = vmatpush1.msra.mxu0 0.0
          %380 = vmatprep.subr.mxu0 0.0
          %381 = vmatpush1.msra.mxu0 0.0
          %382 = vmatprep.subr.mxu0 0.0
          %383 = vmatpush1.msra.mxu0 0.0
          %384 = vmatprep.subr.mxu0 0.0
          %385 = vmatpush1.msra.mxu0 0.0
          %386 = vmatprep.subr.mxu0 0.0
          %387 = vmatpush1.msra.mxu0 0.0
          %388 = vmatprep.subr.mxu0 0.0
          %389 = vmatpush1.msra.mxu0 0.0
          %390 = vmatprep.subr.mxu0 0.0
          %391 = vmatpush1.msra.mxu0 0.0
          %392 = vmatprep.mubr.f32.mxu0 0.0
          %393 = vmatmul.mubr.f32.gmra.mrb[0].mxu0 %v317
          %v394 = vpop.f32.mrb[0].mxu0
          %v395 = vadd.f32 0.0, %v394
          %v396 = vpop.f32.mrb[0].mxu0
          %397 = vmatprep.mubr.f32.mxu0 0.0
          %398 = vmatmul.mubr.f32.gmra.mrb[0].mxu0 %v320
          %v399 = vpop.f32.mrb[0].mxu0
          %v400 = vadd.f32 0.0, %v399
          %v401 = vpop.f32.mrb[0].mxu0
          %402 = vmatprep.mubr.f32.mxu0 0.0
          %403 = vmatmul.mubr.f32.gmra.mrb[0].mxu0 %v323
          %v404 = vpop.f32.mrb[0].mxu0
          %v405 = vadd.f32 0.0, %v404
          %v406 = vpop.f32.mrb[0].mxu0
          %407 = vmatprep.mubr.f32.mxu0 0.0
          %408 = vmatmul.mubr.f32.gmra.mrb[0].mxu0 %v326
          %v409 = vpop.f32.mrb[0].mxu0
          %v410 = vadd.f32 0.0, %v409
          %v411 = vpop.f32.mrb[0].mxu0
          %412 = vdwg.mxu0
          %413 = vst [vmem:[#allocation2] sm:$0xff] %v395
          %414 = vst [vmem:[#allocation2 + $0x8] sm:$0xff] %v400
          %415 = vst [vmem:[#allocation2 + $0x10] sm:$0xff] %v405
          %416 = vst [vmem:[#allocation2 + $0x18] sm:$0xff] %v410
        $region48: #{cvrp_encoder.1} parent=39 // pred_fallthru
          _
        %v417 = vld [vmem:[#allocation2] sm:$0xff]
        %v418 = vld [vmem:[#allocation2 + $0x8] sm:$0xff]
        %v419 = vld [vmem:[#allocation2 + $0x10] sm:$0xff]
        %v420 = vld [vmem:[#allocation2 + $0x18] sm:$0xff]
        %v421 = vld [vmem:[%s255] sm:$0xff]
        %v422 = vld [vmem:[%s255 + $0x8] sm:$0xff]
        %v423 = vld [vmem:[%s255 + $0x10] sm:$0xff]
        %v424 = vld [vmem:[%s255 + $0x18] sm:$0xff]
        %v425 = vld [vmem:[%s255 + $0x20] sm:$0xff]
        %v426 = vld [vmem:[%s255 + $0x28] sm:$0xff]
        %v427 = vld [vmem:[%s255 + $0x30] sm:$0xff]
        %v428 = vld [vmem:[%s255 + $0x38] sm:$0xff]
        %v429 = vld [vmem:[%s255 + $0x40] sm:$0xff]
        %v430 = vld [vmem:[%s255 + $0x48] sm:$0xff]
        %v431 = vld [vmem:[%s255 + $0x50] sm:$0xff]
        %v432 = vld [vmem:[%s255 + $0x58] sm:$0xff]
        %v433 = vld [vmem:[%s255 + $0x60] sm:$0xff]
        %v434 = vld [vmem:[%s255 + $0x68] sm:$0xff]
        %v435 = vld [vmem:[%s255 + $0x70] sm:$0xff]
        %v436 = vld [vmem:[%s255 + $0x78] sm:$0xff]
        %v437 = vld [vmem:[%s255 + $0x80] sm:$0xff]
        %v438 = vld [vmem:[%s255 + $0x88] sm:$0xff]
        %v439 = vld [vmem:[%s255 + $0x90] sm:$0xff]
        %v440 = vld [vmem:[%s255 + $0x98] sm:$0xff]
        %v441 = vld [vmem:[%s255 + $0xa0] sm:$0xff]
        %v442 = vld [vmem:[%s255 + $0xa8] sm:$0xff]
        %v443 = vld [vmem:[%s255 + $0xb0] sm:$0xff]
        %v444 = vld [vmem:[%s255 + $0xb8] sm:$0xff]
        %v445 = vld [vmem:[%s255 + $0xc0] sm:$0xff]
        %v446 = vld [vmem:[%s255 + $0xc8] sm:$0xff]
        %v447 = vld [vmem:[%s255 + $0xd0] sm:$0xff]
        %v448 = vld [vmem:[%s255 + $0xd8] sm:$0xff]
        %v449 = vld [vmem:[%s255 + $0xe0] sm:$0xff]
        %v450 = vld [vmem:[%s255 + $0xe8] sm:$0xff]
        %v451 = vld [vmem:[%s255 + $0xf0] sm:$0xff]
        %v452 = vld [vmem:[%s255 + $0xf8] sm:$0xff]
        %v453 = vld [vmem:[%s255 + $0x100] sm:$0xff]
        %v454 = vld [vmem:[%s255 + $0x108] sm:$0xff]
        %v455 = vld [vmem:[%s255 + $0x110] sm:$0xff]
        %v456 = vld [vmem:[%s255 + $0x118] sm:$0xff]
        %v457 = vld [vmem:[%s255 + $0x120] sm:$0xff]
        %v458 = vld [vmem:[%s255 + $0x128] sm:$0xff]
        %v459 = vld [vmem:[%s255 + $0x130] sm:$0xff]
        %v460 = vld [vmem:[%s255 + $0x138] sm:$0xff]
        %v461 = vld [vmem:[%s255 + $0x140] sm:$0xff]
        %v462 = vld [vmem:[%s255 + $0x148] sm:$0xff]
        %v463 = vld [vmem:[%s255 + $0x150] sm:$0xff]
        %v464 = vld [vmem:[%s255 + $0x158] sm:$0xff]
        %v465 = vld [vmem:[%s255 + $0x160] sm:$0xff]
        %v466 = vld [vmem:[%s255 + $0x168] sm:$0xff]
        %v467 = vld [vmem:[%s255 + $0x170] sm:$0xff]
        %v468 = vld [vmem:[%s255 + $0x178] sm:$0xff]
        %469 = vmatprep.subr.mxu0 %v422
        %470 = vmatpush1.msra.mxu0 %v421
        %471 = vmatprep.subr.mxu0 %v425
        %472 = vmatpush1.msra.mxu0 %v424
        %473 = vmatprep.subr.mxu0 %v428
        %474 = vmatpush1.msra.mxu0 %v427
        %475 = vmatprep.subr.mxu0 %v431
        %476 = vmatpush1.msra.mxu0 %v430
        %477 = vmatprep.subr.mxu0 %v434
        %478 = vmatpush1.msra.mxu0 %v433
        %479 = vmatprep.subr.mxu0 %v437
        %480 = vmatpush1.msra.mxu0 %v436
        %481 = vmatprep.subr.mxu0 %v440
        %482 = vmatpush1.msra.mxu0 %v439
        %483 = vmatprep.subr.mxu0 %v443
        %484 = vmatpush1.msra.mxu0 %v442
        %485 = vmatprep.subr.mxu0 %v446
        %486 = vmatpush1.msra.mxu0 %v445
        %487 = vmatprep.subr.mxu0 %v449
        %488 = vmatpush1.msra.mxu0 %v448
        %489 = vmatprep.subr.mxu0 %v452
        %490 = vmatpush1.msra.mxu0 %v451
        %491 = vmatprep.subr.mxu0 %v455
        %492 = vmatpush1.msra.mxu0 %v454
        %493 = vmatprep.subr.mxu0 %v458
        %494 = vmatpush1.msra.mxu0 %v457
        %495 = vmatprep.subr.mxu0 %v461
        %496 = vmatpush1.msra.mxu0 %v460
        %497 = vmatprep.subr.mxu0 %v464
        %498 = vmatpush1.msra.mxu0 %v463
        %499 = vmatprep.subr.mxu0 %v467
        %500 = vmatpush1.msra.mxu0 %v466
        %501 = vmatprep.subr.mxu0 0.0
        %502 = vmatpush1.msra.mxu0 0.0
        %503 = vmatprep.subr.mxu0 0.0
        %504 = vmatpush1.msra.mxu0 0.0
        %505 = vmatprep.subr.mxu0 0.0
        %506 = vmatpush1.msra.mxu0 0.0
        %507 = vmatprep.subr.mxu0 0.0
        %508 = vmatpush1.msra.mxu0 0.0
        %509 = vmatprep.subr.mxu0 0.0
        %510 = vmatpush1.msra.mxu0 0.0
        %511 = vmatprep.subr.mxu0 0.0
        %512 = vmatpush1.msra.mxu0 0.0
        %513 = vmatprep.subr.mxu0 0.0
        %514 = vmatpush1.msra.mxu0 0.0
        %515 = vmatprep.subr.mxu0 0.0
        %516 = vmatpush1.msra.mxu0 0.0
        %517 = vmatprep.subr.mxu0 0.0
        %518 = vmatpush1.msra.mxu0 0.0
        %519 = vmatprep.subr.mxu0 0.0
        %520 = vmatpush1.msra.mxu0 0.0
        %521 = vmatprep.subr.mxu0 0.0
        %522 = vmatpush1.msra.mxu0 0.0
        %523 = vmatprep.subr.mxu0 0.0
        %524 = vmatpush1.msra.mxu0 0.0
        %525 = vmatprep.subr.mxu0 0.0
        %526 = vmatpush1.msra.mxu0 0.0
        %527 = vmatprep.subr.mxu0 0.0
        %528 = vmatpush1.msra.mxu0 0.0
        %529 = vmatprep.subr.mxu0 0.0
        %530 = vmatpush1.msra.mxu0 0.0
        %531 = vmatprep.subr.mxu0 0.0
        %532 = vmatpush1.msra.mxu0 0.0
        %533 = vmatprep.mubr.f32.mxu0 0.0
        %534 = vmatmul.mubr.f32.gmra.mrb[0].mxu0 %v417
        %v535 = vpop.f32.mrb[0].mxu0
        %v536 = vadd.f32 0.0, %v535
        %v537 = vpop.f32.mrb[0].mxu0
        %v538 = vadd.f32 0.0, %v537
        %539 = vmatprep.mubr.f32.mxu0 0.0
        %540 = vmatmul.mubr.f32.gmra.mrb[0].mxu0 %v418
        %v541 = vpop.f32.mrb[0].mxu0
        %v542 = vadd.f32 0.0, %v541
        %v543 = vpop.f32.mrb[0].mxu0
        %v544 = vadd.f32 0.0, %v543
        %545 = vmatprep.mubr.f32.mxu0 0.0
        %546 = vmatmul.mubr.f32.gmra.mrb[0].mxu0 %v419
        %v547 = vpop.f32.mrb[0].mxu0
        %v548 = vadd.f32 0.0, %v547
        %v549 = vpop.f32.mrb[0].mxu0
        %v550 = vadd.f32 0.0, %v549
        %551 = vmatprep.mubr.f32.mxu0 0.0
        %552 = vmatmul.mubr.f32.gmra.mrb[0].mxu0 %v420
        %v553 = vpop.f32.mrb[0].mxu0
        %v554 = vadd.f32 0.0, %v553
        %v555 = vpop.f32.mrb[0].mxu0
        %v556 = vadd.f32 0.0, %v555
        %557 = vdwg.mxu0
        %558 = vmatprep.subr.mxu0 0.0
        %559 = vmatpush1.msra.mxu0 %v423
        %560 = vmatprep.subr.mxu0 0.0
        %561 = vmatpush1.msra.mxu0 %v426
        %562 = vmatprep.subr.mxu0 0.0
        %563 = vmatpush1.msra.mxu0 %v429
        %564 = vmatprep.subr.mxu0 0.0
        %565 = vmatpush1.msra.mxu0 %v432
        %566 = vmatprep.subr.mxu0 0.0
        %567 = vmatpush1.msra.mxu0 %v435
        %568 = vmatprep.subr.mxu0 0.0
        %569 = vmatpush1.msra.mxu0 %v438
        %570 = vmatprep.subr.mxu0 0.0
        %571 = vmatpush1.msra.mxu0 %v441
        %572 = vmatprep.subr.mxu0 0.0
        %573 = vmatpush1.msra.mxu0 %v444
        %574 = vmatprep.subr.mxu0 0.0
        %575 = vmatpush1.msra.mxu0 %v447
        %576 = vmatprep.subr.mxu0 0.0
        %577 = vmatpush1.msra.mxu0 %v450
        %578 = vmatprep.subr.mxu0 0.0
        %579 = vmatpush1.msra.mxu0 %v453
        %580 = vmatprep.subr.mxu0 0.0
        %581 = vmatpush1.msra.mxu0 %v456
        %582 = vmatprep.subr.mxu0 0.0
        %583 = vmatpush1.msra.mxu0 %v459
        %584 = vmatprep.subr.mxu0 0.0
        %585 = vmatpush1.msra.mxu0 %v462
        %586 = vmatprep.subr.mxu0 0.0
        %587 = vmatpush1.msra.mxu0 %v465
        %588 = vmatprep.subr.mxu0 0.0
        %589 = vmatpush1.msra.mxu0 %v468
        %590 = vmatprep.subr.mxu0 0.0
        %591 = vmatpush1.msra.mxu0 0.0
        %592 = vmatprep.subr.mxu0 0.0
        %593 = vmatpush1.msra.mxu0 0.0
        %594 = vmatprep.subr.mxu0 0.0
        %595 = vmatpush1.msra.mxu0 0.0
        %596 = vmatprep.subr.mxu0 0.0
        %597 = vmatpush1.msra.mxu0 0.0
        %598 = vmatprep.subr.mxu0 0.0
        %599 = vmatpush1.msra.mxu0 0.0
        %600 = vmatprep.subr.mxu0 0.0
        %601 = vmatpush1.msra.mxu0 0.0
        %602 = vmatprep.subr.mxu0 0.0
        %603 = vmatpush1.msra.mxu0 0.0
        %604 = vmatprep.subr.mxu0 0.0
        %605 = vmatpush1.msra.mxu0 0.0
        %606 = vmatprep.subr.mxu0 0.0
        %607 = vmatpush1.msra.mxu0 0.0
        %608 = vmatprep.subr.mxu0 0.0
        %609 = vmatpush1.msra.mxu0 0.0
        %610 = vmatprep.subr.mxu0 0.0
        %611 = vmatpush1.msra.mxu0 0.0
        %612 = vmatprep.subr.mxu0 0.0
        %613 = vmatpush1.msra.mxu0 0.0
        %614 = vmatprep.subr.mxu0 0.0
        %615 = vmatpush1.msra.mxu0 0.0
        %616 = vmatprep.subr.mxu0 0.0
        %617 = vmatpush1.msra.mxu0 0.0
        %618 = vmatprep.subr.mxu0 0.0
        %619 = vmatpush1.msra.mxu0 0.0
        %620 = vmatprep.subr.mxu0 0.0
        %621 = vmatpush1.msra.mxu0 0.0
        %622 = vmatprep.mubr.f32.mxu0 0.0
        %623 = vmatmul.mubr.f32.gmra.mrb[0].mxu0 %v417
        %v624 = vpop.f32.mrb[0].mxu0
        %v625 = vadd.f32 0.0, %v624
        %v626 = vpop.f32.mrb[0].mxu0
        %627 = vmatprep.mubr.f32.mxu0 0.0
        %628 = vmatmul.mubr.f32.gmra.mrb[0].mxu0 %v418
        %v629 = vpop.f32.mrb[0].mxu0
        %v630 = vadd.f32 0.0, %v629
        %v631 = vpop.f32.mrb[0].mxu0
        %632 = vmatprep.mubr.f32.mxu0 0.0
        %633 = vmatmul.mubr.f32.gmra.mrb[0].mxu0 %v419
        %v634 = vpop.f32.mrb[0].mxu0
        %v635 = vadd.f32 0.0, %v634
        %v636 = vpop.f32.mrb[0].mxu0
        %637 = vmatprep.mubr.f32.mxu0 0.0
        %638 = vmatmul.mubr.f32.gmra.mrb[0].mxu0 %v420
        %v639 = vpop.f32.mrb[0].mxu0
        %v640 = vadd.f32 0.0, %v639
        %v641 = vpop.f32.mrb[0].mxu0
        %642 = vdwg.mxu0
        %vm643 = vcmask 130048
        %v645 = vsel %vm643, %v536, 0
        %v648 = vsel %vm643, %v542, 0
        %v651 = vsel %vm643, %v538, 0
        %v654 = vsel %vm643, %v544, 0
        %656 = vmatprep.subr.mxu0 0.0
        %657 = vmatpush1.xpose.msra.mxu0 %v651
        %658 = vmatprep.subr.mxu0 0.0
        %659 = vmatpush1.xpose.msra.mxu0 %v654
        %660 = vmatprep.subr.mxu0 0.0
        %661 = vmatpush1.xpose.msra.mxu0 0.0
        %662 = vmatprep.subr.mxu0 0.0
        %663 = vmatpush1.xpose.msra.mxu0 0.0
        %664 = vmatprep.subr.mxu0 0.0
        %665 = vmatpush1.xpose.msra.mxu0 0.0
        %666 = vmatprep.subr.mxu0 0.0
        %667 = vmatpush1.xpose.msra.mxu0 0.0
        %668 = vmatprep.subr.mxu0 0.0
        %669 = vmatpush1.xpose.msra.mxu0 0.0
        %670 = vmatprep.subr.mxu0 0.0
        %671 = vmatpush1.xpose.msra.mxu0 0.0
        %672 = vmatprep.subr.mxu0 0.0
        %673 = vmatpush1.xpose.msra.mxu0 0.0
        %674 = vmatprep.subr.mxu0 0.0
        %675 = vmatpush1.xpose.msra.mxu0 0.0
        %676 = vmatprep.subr.mxu0 0.0
        %677 = vmatpush1.xpose.msra.mxu0 0.0
        %678 = vmatprep.subr.mxu0 0.0
        %679 = vmatpush1.xpose.msra.mxu0 0.0
        %680 = vmatprep.subr.mxu0 0.0
        %681 = vmatpush1.xpose.msra.mxu0 0.0
        %682 = vmatprep.subr.mxu0 0.0
        %683 = vmatpush1.xpose.msra.mxu0 0.0
        %684 = vmatprep.subr.mxu0 0.0
        %685 = vmatpush1.xpose.msra.mxu0 0.0
        %686 = vmatprep.subr.mxu0 0.0
        %687 = vmatpush1.xpose.msra.mxu0 0.0
        %688 = vmatprep.subr.mxu0 0.0
        %689 = vmatpush1.xpose.msra.mxu0 0.0
        %690 = vmatprep.subr.mxu0 0.0
        %691 = vmatpush1.xpose.msra.mxu0 0.0
        %692 = vmatprep.subr.mxu0 0.0
        %693 = vmatpush1.xpose.msra.mxu0 0.0
        %694 = vmatprep.subr.mxu0 0.0
        %695 = vmatpush1.xpose.msra.mxu0 0.0
        %696 = vmatprep.subr.mxu0 0.0
        %697 = vmatpush1.xpose.msra.mxu0 0.0
        %698 = vmatprep.subr.mxu0 0.0
        %699 = vmatpush1.xpose.msra.mxu0 0.0
        %700 = vmatprep.subr.mxu0 0.0
        %701 = vmatpush1.xpose.msra.mxu0 0.0
        %702 = vmatprep.subr.mxu0 0.0
        %703 = vmatpush1.xpose.msra.mxu0 0.0
        %704 = vmatprep.subr.mxu0 0.0
        %705 = vmatpush1.xpose.msra.mxu0 0.0
        %706 = vmatprep.subr.mxu0 0.0
        %707 = vmatpush1.xpose.msra.mxu0 0.0
        %708 = vmatprep.subr.mxu0 0.0
        %709 = vmatpush1.xpose.msra.mxu0 0.0
        %710 = vmatprep.subr.mxu0 0.0
        %711 = vmatpush1.xpose.msra.mxu0 0.0
        %712 = vmatprep.subr.mxu0 0.0
        %713 = vmatpush1.xpose.msra.mxu0 0.0
        %714 = vmatprep.subr.mxu0 0.0
        %715 = vmatpush1.xpose.msra.mxu0 0.0
        %716 = vmatprep.subr.mxu0 0.0
        %717 = vmatpush1.xpose.msra.mxu0 0.0
        %718 = vmatprep.subr.mxu0 0.0
        %719 = vmatpush1.xpose.msra.mxu0 0.0
        %720 = vmatprep.mubr.f32.mxu0 0.0
        %721 = vmatmul.mubr.f32.gmra.mrb[0].mxu0 %v645
        %v722 = vpop.f32.mrb[0].mxu0
        %v723 = vadd.f32 0.0, %v722
        %v724 = vpop.f32.mrb[0].mxu0
        %725 = vmatprep.mubr.f32.mxu0 0.0
        %726 = vmatmul.mubr.f32.gmra.mrb[0].mxu0 %v648
        %v727 = vpop.f32.mrb[0].mxu0
        %v728 = vadd.f32 0.0, %v727
        %v729 = vpop.f32.mrb[0].mxu0
        %730 = vdwg.mxu0
        %v731 = vsel %vm643, %v723, -inf
        %732 = vmax.xlane.f32.xlu0 %v731
        %v733 = vpop.xlane.xlu0 %732
        %v734 = vsel %vm643, %v728, -inf
        %735 = vmax.xlane.f32.xlu0 %v734
        %v736 = vpop.xlane.xlu0 %735
        %v737 = vsub.f32 %v723, %v733
        %v738 = vsub.f32 %v728, %v736
        %v739 = vmul.f32 %v737, 1.442695
        %v740 = vpow.pop %v739
        %v741 = vmul.f32 %v738, 1.442695
        %v742 = vpow.pop %v741
        %v743 = vsel %vm643, %v740, 0.0
        %744 = vadd.xlane.f32.xlu0 %v743
        %v745 = vpop.xlane.xlu0 %744
        %v746 = vsel %vm643, %v742, 0.0
        %747 = vadd.xlane.f32.xlu0 %v746
        %v748 = vpop.xlane.xlu0 %747
        %v749 = vrcp.pop %v745
        %v750 = vrcp.pop %v748
        %v751 = vmul.f32 %v740, %v749
        %v752 = vmul.f32 %v742, %v750
        %v754 = vsel %vm643, %v751, 0
        %v757 = vsel %vm643, %v752, 0
        %759 = vmatprep.subr.mxu0 0.0
        %760 = vmatpush1.msra.mxu0 %v625
        %761 = vmatprep.subr.mxu0 0.0
        %762 = vmatpush1.msra.mxu0 %v630
        %763 = vmatprep.subr.mxu0 0.0
        %764 = vmatpush1.msra.mxu0 0.0
        %765 = vmatprep.subr.mxu0 0.0
        %766 = vmatpush1.msra.mxu0 0.0
        %767 = vmatprep.subr.mxu0 0.0
        %768 = vmatpush1.msra.mxu0 0.0
        %769 = vmatprep.subr.mxu0 0.0
        %770 = vmatpush1.msra.mxu0 0.0
        %771 = vmatprep.subr.mxu0 0.0
        %772 = vmatpush1.msra.mxu0 0.0
        %773 = vmatprep.subr.mxu0 0.0
        %774 = vmatpush1.msra.mxu0 0.0
        %775 = vmatprep.subr.mxu0 0.0
        %776 = vmatpush1.msra.mxu0 0.0
        %777 = vmatprep.subr.mxu0 0.0
        %778 = vmatpush1.msra.mxu0 0.0
        %779 = vmatprep.subr.mxu0 0.0
        %780 = vmatpush1.msra.mxu0 0.0
        %781 = vmatprep.subr.mxu0 0.0
        %782 = vmatpush1.msra.mxu0 0.0
        %783 = vmatprep.subr.mxu0 0.0
        %784 = vmatpush1.msra.mxu0 0.0
        %785 = vmatprep.subr.mxu0 0.0
        %786 = vmatpush1.msra.mxu0 0.0
        %787 = vmatprep.subr.mxu0 0.0
        %788 = vmatpush1.msra.mxu0 0.0
        %789 = vmatprep.subr.mxu0 0.0
        %790 = vmatpush1.msra.mxu0 0.0
        %791 = vmatprep.subr.mxu0 0.0
        %792 = vmatpush1.msra.mxu0 0.0
        %793 = vmatprep.subr.mxu0 0.0
        %794 = vmatpush1.msra.mxu0 0.0
        %795 = vmatprep.subr.mxu0 0.0
        %796 = vmatpush1.msra.mxu0 0.0
        %797 = vmatprep.subr.mxu0 0.0
        %798 = vmatpush1.msra.mxu0 0.0
        %799 = vmatprep.subr.mxu0 0.0
        %800 = vmatpush1.msra.mxu0 0.0
        %801 = vmatprep.subr.mxu0 0.0
        %802 = vmatpush1.msra.mxu0 0.0
        %803 = vmatprep.subr.mxu0 0.0
        %804 = vmatpush1.msra.mxu0 0.0
        %805 = vmatprep.subr.mxu0 0.0
        %806 = vmatpush1.msra.mxu0 0.0
        %807 = vmatprep.subr.mxu0 0.0
        %808 = vmatpush1.msra.mxu0 0.0
        %809 = vmatprep.subr.mxu0 0.0
        %810 = vmatpush1.msra.mxu0 0.0
        %811 = vmatprep.subr.mxu0 0.0
        %812 = vmatpush1.msra.mxu0 0.0
        %813 = vmatprep.subr.mxu0 0.0
        %814 = vmatpush1.msra.mxu0 0.0
        %815 = vmatprep.subr.mxu0 0.0
        %816 = vmatpush1.msra.mxu0 0.0
        %817 = vmatprep.subr.mxu0 0.0
        %818 = vmatpush1.msra.mxu0 0.0
        %819 = vmatprep.subr.mxu0 0.0
        %820 = vmatpush1.msra.mxu0 0.0
        %821 = vmatprep.subr.mxu0 0.0
        %822 = vmatpush1.msra.mxu0 0.0
        %823 = vmatprep.mubr.f32.mxu0 0.0
        %824 = vmatmul.mubr.f32.gmra.mrb[0].mxu0 %v754
        %v825 = vpop.f32.mrb[0].mxu0
        %v826 = vadd.f32 0.0, %v825
        %v827 = vpop.f32.mrb[0].mxu0
        %828 = vmatprep.mubr.f32.mxu0 0.0
        %829 = vmatmul.mubr.f32.gmra.mrb[0].mxu0 %v757
        %v830 = vpop.f32.mrb[0].mxu0
        %v831 = vadd.f32 0.0, %v830
        %v832 = vpop.f32.mrb[0].mxu0
        %833 = vdwg.mxu0
        %834 = vrot.lane.b32.xlu0 %v536, 112
        %v835 = vpop.permute.xlu0 %834
        %836 = vrot.lane.b32.xlu0 %v542, 112
        %v837 = vpop.permute.xlu0 %836
        %838 = vrot.lane.b32.xlu0 %v538, 112
        %v839 = vpop.permute.xlu0 %838
        %840 = vrot.lane.b32.xlu0 %v544, 112
        %v841 = vpop.permute.xlu0 %840
        %v842 = vsel %vm643, %v835, 0
        %v844 = vsel %vm643, %v837, 0
        %v846 = vsel %vm643, %v839, 0
        %v848 = vsel %vm643, %v841, 0
        %850 = vmatprep.subr.mxu0 0.0
        %851 = vmatpush1.xpose.msra.mxu0 %v846
        %852 = vmatprep.subr.mxu0 0.0
        %853 = vmatpush1.xpose.msra.mxu0 %v848
        %854 = vmatprep.subr.mxu0 0.0
        %855 = vmatpush1.xpose.msra.mxu0 0.0
        %856 = vmatprep.subr.mxu0 0.0
        %857 = vmatpush1.xpose.msra.mxu0 0.0
        %858 = vmatprep.subr.mxu0 0.0
        %859 = vmatpush1.xpose.msra.mxu0 0.0
        %860 = vmatprep.subr.mxu0 0.0
        %861 = vmatpush1.xpose.msra.mxu0 0.0
        %862 = vmatprep.subr.mxu0 0.0
        %863 = vmatpush1.xpose.msra.mxu0 0.0
        %864 = vmatprep.subr.mxu0 0.0
        %865 = vmatpush1.xpose.msra.mxu0 0.0
        %866 = vmatprep.subr.mxu0 0.0
        %867 = vmatpush1.xpose.msra.mxu0 0.0
        %868 = vmatprep.subr.mxu0 0.0
        %869 = vmatpush1.xpose.msra.mxu0 0.0
        %870 = vmatprep.subr.mxu0 0.0
        %871 = vmatpush1.xpose.msra.mxu0 0.0
        %872 = vmatprep.subr.mxu0 0.0
        %873 = vmatpush1.xpose.msra.mxu0 0.0
        %874 = vmatprep.subr.mxu0 0.0
        %875 = vmatpush1.xpose.msra.mxu0 0.0
        %876 = vmatprep.subr.mxu0 0.0
        %877 = vmatpush1.xpose.msra.mxu0 0.0
        %878 = vmatprep.subr.mxu0 0.0
        %879 = vmatpush1.xpose.msra.mxu0 0.0
        %880 = vmatprep.subr.mxu0 0.0
        %881 = vmatpush1.xpose.msra.mxu0 0.0
        %882 = vmatprep.subr.mxu0 0.0
        %883 = vmatpush1.xpose.msra.mxu0 0.0
        %884 = vmatprep.subr.mxu0 0.0
        %885 = vmatpush1.xpose.msra.mxu0 0.0
        %886 = vmatprep.subr.mxu0 0.0
        %887 = vmatpush1.xpose.msra.mxu0 0.0
        %888 = vmatprep.subr.mxu0 0.0
        %889 = vmatpush1.xpose.msra.mxu0 0.0
        %890 = vmatprep.subr.mxu0 0.0
        %891 = vmatpush1.xpose.msra.mxu0 0.0
        %892 = vmatprep.subr.mxu0 0.0
        %893 = vmatpush1.xpose.msra.mxu0 0.0
        %894 = vmatprep.subr.mxu0 0.0
        %895 = vmatpush1.xpose.msra.mxu0 0.0
        %896 = vmatprep.subr.mxu0 0.0
        %897 = vmatpush1.xpose.msra.mxu0 0.0
        %898 = vmatprep.subr.mxu0 0.0
        %899 = vmatpush1.xpose.msra.mxu0 0.0
        %900 = vmatprep.subr.mxu0 0.0
        %901 = vmatpush1.xpose.msra.mxu0 0.0
        %902 = vmatprep.subr.mxu0 0.0
        %903 = vmatpush1.xpose.msra.mxu0 0.0
        %904 = vmatprep.subr.mxu0 0.0
        %905 = vmatpush1.xpose.msra.mxu0 0.0
        %906 = vmatprep.subr.mxu0 0.0
        %907 = vmatpush1.xpose.msra.mxu0 0.0
        %908 = vmatprep.subr.mxu0 0.0
        %909 = vmatpush1.xpose.msra.mxu0 0.0
        %910 = vmatprep.subr.mxu0 0.0
        %911 = vmatpush1.xpose.msra.mxu0 0.0
        %912 = vmatprep.subr.mxu0 0.0
        %913 = vmatpush1.xpose.msra.mxu0 0.0
        %914 = vmatprep.mubr.f32.mxu0 0.0
        %915 = vmatmul.mubr.f32.gmra.mrb[0].mxu0 %v842
        %v916 = vpop.f32.mrb[0].mxu0
        %v917 = vadd.f32 0.0, %v916
        %v918 = vpop.f32.mrb[0].mxu0
        %919 = vmatprep.mubr.f32.mxu0 0.0
        %920 = vmatmul.mubr.f32.gmra.mrb[0].mxu0 %v844
        %v921 = vpop.f32.mrb[0].mxu0
        %v922 = vadd.f32 0.0, %v921
        %v923 = vpop.f32.mrb[0].mxu0
        %924 = vdwg.mxu0
        %v925 = vsel %vm643, %v917, -inf
        %926 = vmax.xlane.f32.xlu0 %v925
        %v927 = vpop.xlane.xlu0 %926
        %v928 = vsel %vm643, %v922, -inf
        %929 = vmax.xlane.f32.xlu0 %v928
        %v930 = vpop.xlane.xlu0 %929
        %v931 = vsub.f32 %v917, %v927
        %v932 = vsub.f32 %v922, %v930
        %v933 = vmul.f32 %v931, 1.442695
        %v934 = vpow.pop %v933
        %v935 = vmul.f32 %v932, 1.442695
        %v936 = vpow.pop %v935
        %v937 = vsel %vm643, %v934, 0.0
        %938 = vadd.xlane.f32.xlu0 %v937
        %v939 = vpop.xlane.xlu0 %938
        %v940 = vsel %vm643, %v936, 0.0
        %941 = vadd.xlane.f32.xlu0 %v940
        %v942 = vpop.xlane.xlu0 %941
        %v943 = vrcp.pop %v939
        %v944 = vrcp.pop %v942
        %v945 = vmul.f32 %v934, %v943
        %v946 = vmul.f32 %v936, %v944
        %949 = vrot.lane.b32.xlu0 %v625, 112
        %v950 = vpop.permute.xlu0 %949
        %951 = vrot.lane.b32.xlu0 %v630, 112
        %v952 = vpop.permute.xlu0 %951
        %v956 = vsel %vm643, %v945, 0
        %v959 = vsel %vm643, %v946, 0
        %961 = vmatprep.subr.mxu0 0.0
        %962 = vmatpush1.msra.mxu0 %v950
        %963 = vmatprep.subr.mxu0 0.0
        %964 = vmatpush1.msra.mxu0 %v952
        %965 = vmatprep.subr.mxu0 0.0
        %966 = vmatpush1.msra.mxu0 0.0
        %967 = vmatprep.subr.mxu0 0.0
        %968 = vmatpush1.msra.mxu0 0.0
        %969 = vmatprep.subr.mxu0 0.0
        %970 = vmatpush1.msra.mxu0 0.0
        %971 = vmatprep.subr.mxu0 0.0
        %972 = vmatpush1.msra.mxu0 0.0
        %973 = vmatprep.subr.mxu0 0.0
        %974 = vmatpush1.msra.mxu0 0.0
        %975 = vmatprep.subr.mxu0 0.0
        %976 = vmatpush1.msra.mxu0 0.0
        %977 = vmatprep.subr.mxu0 0.0
        %978 = vmatpush1.msra.mxu0 0.0
        %979 = vmatprep.subr.mxu0 0.0
        %980 = vmatpush1.msra.mxu0 0.0
        %981 = vmatprep.subr.mxu0 0.0
        %982 = vmatpush1.msra.mxu0 0.0
        %983 = vmatprep.subr.mxu0 0.0
        %984 = vmatpush1.msra.mxu0 0.0
        %985 = vmatprep.subr.mxu0 0.0
        %986 = vmatpush1.msra.mxu0 0.0
        %987 = vmatprep.subr.mxu0 0.0
        %988 = vmatpush1.msra.mxu0 0.0
        %989 = vmatprep.subr.mxu0 0.0
        %990 = vmatpush1.msra.mxu0 0.0
        %991 = vmatprep.subr.mxu0 0.0
        %992 = vmatpush1.msra.mxu0 0.0
        %993 = vmatprep.subr.mxu0 0.0
        %994 = vmatpush1.msra.mxu0 0.0
        %995 = vmatprep.subr.mxu0 0.0
        %996 = vmatpush1.msra.mxu0 0.0
        %997 = vmatprep.subr.mxu0 0.0
        %998 = vmatpush1.msra.mxu0 0.0
        %999 = vmatprep.subr.mxu0 0.0
        %1000 = vmatpush1.msra.mxu0 0.0
        %1001 = vmatprep.subr.mxu0 0.0
        %1002 = vmatpush1.msra.mxu0 0.0
        %1003 = vmatprep.subr.mxu0 0.0
        %1004 = vmatpush1.msra.mxu0 0.0
        %1005 = vmatprep.subr.mxu0 0.0
        %1006 = vmatpush1.msra.mxu0 0.0
        %1007 = vmatprep.subr.mxu0 0.0
        %1008 = vmatpush1.msra.mxu0 0.0
        %1009 = vmatprep.subr.mxu0 0.0
        %1010 = vmatpush1.msra.mxu0 0.0
        %1011 = vmatprep.subr.mxu0 0.0
        %1012 = vmatpush1.msra.mxu0 0.0
        %1013 = vmatprep.subr.mxu0 0.0
        %1014 = vmatpush1.msra.mxu0 0.0
        %1015 = vmatprep.subr.mxu0 0.0
        %1016 = vmatpush1.msra.mxu0 0.0
        %1017 = vmatprep.subr.mxu0 0.0
        %1018 = vmatpush1.msra.mxu0 0.0
        %1019 = vmatprep.subr.mxu0 0.0
        %1020 = vmatpush1.msra.mxu0 0.0
        %1021 = vmatprep.subr.mxu0 0.0
        %1022 = vmatpush1.msra.mxu0 0.0
        %1023 = vmatprep.subr.mxu0 0.0
        %1024 = vmatpush1.msra.mxu0 0.0
        %1025 = vmatprep.mubr.f32.mxu0 0.0
        %1026 = vmatmul.mubr.f32.gmra.mrb[0].mxu0 %v956
        %v1027 = vpop.f32.mrb[0].mxu0
        %v1028 = vadd.f32 0.0, %v1027
        %v1029 = vpop.f32.mrb[0].mxu0
        %1030 = vmatprep.mubr.f32.mxu0 0.0
        %1031 = vmatmul.mubr.f32.gmra.mrb[0].mxu0 %v959
        %v1032 = vpop.f32.mrb[0].mxu0
        %v1033 = vadd.f32 0.0, %v1032
        %v1034 = vpop.f32.mrb[0].mxu0
        %1035 = vdwg.mxu0
        %1036 = vrot.lane.b32.xlu0 %v536, 96
        %v1037 = vpop.permute.xlu0 %1036
        %1038 = vrot.lane.b32.xlu0 %v542, 96
        %v1039 = vpop.permute.xlu0 %1038
        %1040 = vrot.lane.b32.xlu0 %v538, 96
        %v1041 = vpop.permute.xlu0 %1040
        %1042 = vrot.lane.b32.xlu0 %v544, 96
        %v1043 = vpop.permute.xlu0 %1042
        %v1044 = vsel %vm643, %v1037, 0
        %v1046 = vsel %vm643, %v1039, 0
        %v1048 = vsel %vm643, %v1041, 0
        %v1050 = vsel %vm643, %v1043, 0
        %1052 = vmatprep.subr.mxu0 0.0
        %1053 = vmatpush1.xpose.msra.mxu0 %v1048
        %1054 = vmatprep.subr.mxu0 0.0
        %1055 = vmatpush1.xpose.msra.mxu0 %v1050
        %1056 = vmatprep.subr.mxu0 0.0
        %1057 = vmatpush1.xpose.msra.mxu0 0.0
        %1058 = vmatprep.subr.mxu0 0.0
        %1059 = vmatpush1.xpose.msra.mxu0 0.0
        %1060 = vmatprep.subr.mxu0 0.0
        %1061 = vmatpush1.xpose.msra.mxu0 0.0
        %1062 = vmatprep.subr.mxu0 0.0
        %1063 = vmatpush1.xpose.msra.mxu0 0.0
        %1064 = vmatprep.subr.mxu0 0.0
        %1065 = vmatpush1.xpose.msra.mxu0 0.0
        %1066 = vmatprep.subr.mxu0 0.0
        %1067 = vmatpush1.xpose.msra.mxu0 0.0
        %1068 = vmatprep.subr.mxu0 0.0
        %1069 = vmatpush1.xpose.msra.mxu0 0.0
        %1070 = vmatprep.subr.mxu0 0.0
        %1071 = vmatpush1.xpose.msra.mxu0 0.0
        %1072 = vmatprep.subr.mxu0 0.0
        %1073 = vmatpush1.xpose.msra.mxu0 0.0
        %1074 = vmatprep.subr.mxu0 0.0
        %1075 = vmatpush1.xpose.msra.mxu0 0.0
        %1076 = vmatprep.subr.mxu0 0.0
        %1077 = vmatpush1.xpose.msra.mxu0 0.0
        %1078 = vmatprep.subr.mxu0 0.0
        %1079 = vmatpush1.xpose.msra.mxu0 0.0
        %1080 = vmatprep.subr.mxu0 0.0
        %1081 = vmatpush1.xpose.msra.mxu0 0.0
        %1082 = vmatprep.subr.mxu0 0.0
        %1083 = vmatpush1.xpose.msra.mxu0 0.0
        %1084 = vmatprep.subr.mxu0 0.0
        %1085 = vmatpush1.xpose.msra.mxu0 0.0
        %1086 = vmatprep.subr.mxu0 0.0
        %1087 = vmatpush1.xpose.msra.mxu0 0.0
        %1088 = vmatprep.subr.mxu0 0.0
        %1089 = vmatpush1.xpose.msra.mxu0 0.0
        %1090 = vmatprep.subr.mxu0 0.0
        %1091 = vmatpush1.xpose.msra.mxu0 0.0
        %1092 = vmatprep.subr.mxu0 0.0
        %1093 = vmatpush1.xpose.msra.mxu0 0.0
        %1094 = vmatprep.subr.mxu0 0.0
        %1095 = vmatpush1.xpose.msra.mxu0 0.0
        %1096 = vmatprep.subr.mxu0 0.0
        %1097 = vmatpush1.xpose.msra.mxu0 0.0
        %1098 = vmatprep.subr.mxu0 0.0
        %1099 = vmatpush1.xpose.msra.mxu0 0.0
        %1100 = vmatprep.subr.mxu0 0.0
        %1101 = vmatpush1.xpose.msra.mxu0 0.0
        %1102 = vmatprep.subr.mxu0 0.0
        %1103 = vmatpush1.xpose.msra.mxu0 0.0
        %1104 = vmatprep.subr.mxu0 0.0
        %1105 = vmatpush1.xpose.msra.mxu0 0.0
        %1106 = vmatprep.subr.mxu0 0.0
        %1107 = vmatpush1.xpose.msra.mxu0 0.0
        %1108 = vmatprep.subr.mxu0 0.0
        %1109 = vmatpush1.xpose.msra.mxu0 0.0
        %1110 = vmatprep.subr.mxu0 0.0
        %1111 = vmatpush1.xpose.msra.mxu0 0.0
        %1112 = vmatprep.subr.mxu0 0.0
        %1113 = vmatpush1.xpose.msra.mxu0 0.0
        %1114 = vmatprep.subr.mxu0 0.0
        %1115 = vmatpush1.xpose.msra.mxu0 0.0
        %1116 = vmatprep.mubr.f32.mxu0 0.0
        %1117 = vmatmul.mubr.f32.gmra.mrb[0].mxu0 %v1044
        %v1118 = vpop.f32.mrb[0].mxu0
        %v1119 = vadd.f32 0.0, %v1118
        %v1120 = vpop.f32.mrb[0].mxu0
        %1121 = vmatprep.mubr.f32.mxu0 0.0
        %1122 = vmatmul.mubr.f32.gmra.mrb[0].mxu0 %v1046
        %v1123 = vpop.f32.mrb[0].mxu0
        %v1124 = vadd.f32 0.0, %v1123
        %v1125 = vpop.f32.mrb[0].mxu0
        %1126 = vdwg.mxu0
        %v1127 = vsel %vm643, %v1119, -inf
        %1128 = vmax.xlane.f32.xlu0 %v1127
        %v1129 = vpop.xlane.xlu0 %1128
        %v1130 = vsel %vm643, %v1124, -inf
        %1131 = vmax.xlane.f32.xlu0 %v1130
        %v1132 = vpop.xlane.xlu0 %1131
        %v1133 = vsub.f32 %v1119, %v1129
        %v1134 = vsub.f32 %v1124, %v1132
        %v1135 = vmul.f32 %v1133, 1.442695
        %v1136 = vpow.pop %v1135
        %v1137 = vmul.f32 %v1134, 1.442695
        %v1138 = vpow.pop %v1137
        %v1139 = vsel %vm643, %v1136, 0.0
        %1140 = vadd.xlane.f32.xlu0 %v1139
        %v1141 = vpop.xlane.xlu0 %1140
        %v1142 = vsel %vm643, %v1138, 0.0
        %1143 = vadd.xlane.f32.xlu0 %v1142
        %v1144 = vpop.xlane.xlu0 %1143
        %v1145 = vrcp.pop %v1141
        %v1146 = vrcp.pop %v1144
        %v1147 = vmul.f32 %v1136, %v1145
        %v1148 = vmul.f32 %v1138, %v1146
        %1149 = vrot.lane.b32.xlu0 %v625, 96
        %v1150 = vpop.permute.xlu0 %1149
        %1151 = vrot.lane.b32.xlu0 %v630, 96
        %v1152 = vpop.permute.xlu0 %1151
        %v1156 = vsel %vm643, %v1147, 0
        %v1159 = vsel %vm643, %v1148, 0
        %1161 = vmatprep.subr.mxu0 0.0
        %1162 = vmatpush1.msra.mxu0 %v1150
        %1163 = vmatprep.subr.mxu0 0.0
        %1164 = vmatpush1.msra.mxu0 %v1152
        %1165 = vmatprep.subr.mxu0 0.0
        %1166 = vmatpush1.msra.mxu0 0.0
        %1167 = vmatprep.subr.mxu0 0.0
        %1168 = vmatpush1.msra.mxu0 0.0
        %1169 = vmatprep.subr.mxu0 0.0
        %1170 = vmatpush1.msra.mxu0 0.0
        %1171 = vmatprep.subr.mxu0 0.0
        %1172 = vmatpush1.msra.mxu0 0.0
        %1173 = vmatprep.subr.mxu0 0.0
        %1174 = vmatpush1.msra.mxu0 0.0
        %1175 = vmatprep.subr.mxu0 0.0
        %1176 = vmatpush1.msra.mxu0 0.0
        %1177 = vmatprep.subr.mxu0 0.0
        %1178 = vmatpush1.msra.mxu0 0.0
        %1179 = vmatprep.subr.mxu0 0.0
        %1180 = vmatpush1.msra.mxu0 0.0
        %1181 = vmatprep.subr.mxu0 0.0
        %1182 = vmatpush1.msra.mxu0 0.0
        %1183 = vmatprep.subr.mxu0 0.0
        %1184 = vmatpush1.msra.mxu0 0.0
        %1185 = vmatprep.subr.mxu0 0.0
        %1186 = vmatpush1.msra.mxu0 0.0
        %1187 = vmatprep.subr.mxu0 0.0
        %1188 = vmatpush1.msra.mxu0 0.0
        %1189 = vmatprep.subr.mxu0 0.0
        %1190 = vmatpush1.msra.mxu0 0.0
        %1191 = vmatprep.subr.mxu0 0.0
        %1192 = vmatpush1.msra.mxu0 0.0
        %1193 = vmatprep.subr.mxu0 0.0
        %1194 = vmatpush1.msra.mxu0 0.0
        %1195 = vmatprep.subr.mxu0 0.0
        %1196 = vmatpush1.msra.mxu0 0.0
        %1197 = vmatprep.subr.mxu0 0.0
        %1198 = vmatpush1.msra.mxu0 0.0
        %1199 = vmatprep.subr.mxu0 0.0
        %1200 = vmatpush1.msra.mxu0 0.0
        %1201 = vmatprep.subr.mxu0 0.0
        %1202 = vmatpush1.msra.mxu0 0.0
        %1203 = vmatprep.subr.mxu0 0.0
        %1204 = vmatpush1.msra.mxu0 0.0
        %1205 = vmatprep.subr.mxu0 0.0
        %1206 = vmatpush1.msra.mxu0 0.0
        %1207 = vmatprep.subr.mxu0 0.0
        %1208 = vmatpush1.msra.mxu0 0.0
        %1209 = vmatprep.subr.mxu0 0.0
        %1210 = vmatpush1.msra.mxu0 0.0
        %1211 = vmatprep.subr.mxu0 0.0
        %1212 = vmatpush1.msra.mxu0 0.0
        %1213 = vmatprep.subr.mxu0 0.0
        %1214 = vmatpush1.msra.mxu0 0.0
        %1215 = vmatprep.subr.mxu0 0.0
        %1216 = vmatpush1.msra.mxu0 0.0
        %1217 = vmatprep.subr.mxu0 0.0
        %1218 = vmatpush1.msra.mxu0 0.0
        %1219 = vmatprep.subr.mxu0 0.0
        %1220 = vmatpush1.msra.mxu0 0.0
        %1221 = vmatprep.subr.mxu0 0.0
        %1222 = vmatpush1.msra.mxu0 0.0
        %1223 = vmatprep.subr.mxu0 0.0
        %1224 = vmatpush1.msra.mxu0 0.0
        %1225 = vmatprep.mubr.f32.mxu0 0.0
        %1226 = vmatmul.mubr.f32.gmra.mrb[0].mxu0 %v1156
        %v1227 = vpop.f32.mrb[0].mxu0
        %v1228 = vadd.f32 0.0, %v1227
        %v1229 = vpop.f32.mrb[0].mxu0
        %1230 = vmatprep.mubr.f32.mxu0 0.0
        %1231 = vmatmul.mubr.f32.gmra.mrb[0].mxu0 %v1159
        %v1232 = vpop.f32.mrb[0].mxu0
        %v1233 = vadd.f32 0.0, %v1232
        %v1234 = vpop.f32.mrb[0].mxu0
        %1235 = vdwg.mxu0
        %1236 = vrot.lane.b32.xlu0 %v536, 80
        %v1237 = vpop.permute.xlu0 %1236
        %1238 = vrot.lane.b32.xlu0 %v542, 80
        %v1239 = vpop.permute.xlu0 %1238
        %1240 = vrot.lane.b32.xlu0 %v538, 80
        %v1241 = vpop.permute.xlu0 %1240
        %1242 = vrot.lane.b32.xlu0 %v544, 80
        %v1243 = vpop.permute.xlu0 %1242
        %v1244 = vsel %vm643, %v1237, 0
        %v1246 = vsel %vm643, %v1239, 0
        %v1248 = vsel %vm643, %v1241, 0
        %v1250 = vsel %vm643, %v1243, 0
        %1252 = vmatprep.subr.mxu0 0.0
        %1253 = vmatpush1.xpose.msra.mxu0 %v1248
        %1254 = vmatprep.subr.mxu0 0.0
        %1255 = vmatpush1.xpose.msra.mxu0 %v1250
        %1256 = vmatprep.subr.mxu0 0.0
        %1257 = vmatpush1.xpose.msra.mxu0 0.0
        %1258 = vmatprep.subr.mxu0 0.0
        %1259 = vmatpush1.xpose.msra.mxu0 0.0
        %1260 = vmatprep.subr.mxu0 0.0
        %1261 = vmatpush1.xpose.msra.mxu0 0.0
        %1262 = vmatprep.subr.mxu0 0.0
        %1263 = vmatpush1.xpose.msra.mxu0 0.0
        %1264 = vmatprep.subr.mxu0 0.0
        %1265 = vmatpush1.xpose.msra.mxu0 0.0
        %1266 = vmatprep.subr.mxu0 0.0
        %1267 = vmatpush1.xpose.msra.mxu0 0.0
        %1268 = vmatprep.subr.mxu0 0.0
        %1269 = vmatpush1.xpose.msra.mxu0 0.0
        %1270 = vmatprep.subr.mxu0 0.0
        %1271 = vmatpush1.xpose.msra.mxu0 0.0
        %1272 = vmatprep.subr.mxu0 0.0
        %1273 = vmatpush1.xpose.msra.mxu0 0.0
        %1274 = vmatprep.subr.mxu0 0.0
        %1275 = vmatpush1.xpose.msra.mxu0 0.0
        %1276 = vmatprep.subr.mxu0 0.0
        %1277 = vmatpush1.xpose.msra.mxu0 0.0
        %1278 = vmatprep.subr.mxu0 0.0
        %1279 = vmatpush1.xpose.msra.mxu0 0.0
        %1280 = vmatprep.subr.mxu0 0.0
        %1281 = vmatpush1.xpose.msra.mxu0 0.0
        %1282 = vmatprep.subr.mxu0 0.0
        %1283 = vmatpush1.xpose.msra.mxu0 0.0
        %1284 = vmatprep.subr.mxu0 0.0
        %1285 = vmatpush1.xpose.msra.mxu0 0.0
        %1286 = vmatprep.subr.mxu0 0.0
        %1287 = vmatpush1.xpose.msra.mxu0 0.0
        %1288 = vmatprep.subr.mxu0 0.0
        %1289 = vmatpush1.xpose.msra.mxu0 0.0
        %1290 = vmatprep.subr.mxu0 0.0
        %1291 = vmatpush1.xpose.msra.mxu0 0.0
        %1292 = vmatprep.subr.mxu0 0.0
        %1293 = vmatpush1.xpose.msra.mxu0 0.0
        %1294 = vmatprep.subr.mxu0 0.0
        %1295 = vmatpush1.xpose.msra.mxu0 0.0
        %1296 = vmatprep.subr.mxu0 0.0
        %1297 = vmatpush1.xpose.msra.mxu0 0.0
        %1298 = vmatprep.subr.mxu0 0.0
        %1299 = vmatpush1.xpose.msra.mxu0 0.0
        %1300 = vmatprep.subr.mxu0 0.0
        %1301 = vmatpush1.xpose.msra.mxu0 0.0
        %1302 = vmatprep.subr.mxu0 0.0
        %1303 = vmatpush1.xpose.msra.mxu0 0.0
        %1304 = vmatprep.subr.mxu0 0.0
        %1305 = vmatpush1.xpose.msra.mxu0 0.0
        %1306 = vmatprep.subr.mxu0 0.0
        %1307 = vmatpush1.xpose.msra.mxu0 0.0
        %1308 = vmatprep.subr.mxu0 0.0
        %1309 = vmatpush1.xpose.msra.mxu0 0.0
        %1310 = vmatprep.subr.mxu0 0.0
        %1311 = vmatpush1.xpose.msra.mxu0 0.0
        %1312 = vmatprep.subr.mxu0 0.0
        %1313 = vmatpush1.xpose.msra.mxu0 0.0
        %1314 = vmatprep.subr.mxu0 0.0
        %1315 = vmatpush1.xpose.msra.mxu0 0.0
        %1316 = vmatprep.mubr.f32.mxu0 0.0
        %1317 = vmatmul.mubr.f32.gmra.mrb[0].mxu0 %v1244
        %v1318 = vpop.f32.mrb[0].mxu0
        %v1319 = vadd.f32 0.0, %v1318
        %v1320 = vpop.f32.mrb[0].mxu0
        %1321 = vmatprep.mubr.f32.mxu0 0.0
        %1322 = vmatmul.mubr.f32.gmra.mrb[0].mxu0 %v1246
        %v1323 = vpop.f32.mrb[0].mxu0
        %v1324 = vadd.f32 0.0, %v1323
        %v1325 = vpop.f32.mrb[0].mxu0
        %1326 = vdwg.mxu0
        %v1327 = vsel %vm643, %v1319, -inf
        %1328 = vmax.xlane.f32.xlu0 %v1327
        %v1329 = vpop.xlane.xlu0 %1328
        %v1330 = vsel %vm643, %v1324, -inf
        %1331 = vmax.xlane.f32.xlu0 %v1330
        %v1332 = vpop.xlane.xlu0 %1331
        %v1333 = vsub.f32 %v1319, %v1329
        %v1334 = vsub.f32 %v1324, %v1332
        %v1335 = vmul.f32 %v1333, 1.442695
        %v1336 = vpow.pop %v1335
        %v1337 = vmul.f32 %v1334, 1.442695
        %v1338 = vpow.pop %v1337
        %v1339 = vsel %vm643, %v1336, 0.0
        %1340 = vadd.xlane.f32.xlu0 %v1339
        %v1341 = vpop.xlane.xlu0 %1340
        %v1342 = vsel %vm643, %v1338, 0.0
        %1343 = vadd.xlane.f32.xlu0 %v1342
        %v1344 = vpop.xlane.xlu0 %1343
        %v1345 = vrcp.pop %v1341
        %v1346 = vrcp.pop %v1344
        %v1347 = vmul.f32 %v1336, %v1345
        %v1348 = vmul.f32 %v1338, %v1346
        %1349 = vrot.lane.b32.xlu0 %v625, 80
        %v1350 = vpop.permute.xlu0 %1349
        %1351 = vrot.lane.b32.xlu0 %v630, 80
        %v1352 = vpop.permute.xlu0 %1351
        %v1356 = vsel %vm643, %v1347, 0
        %v1359 = vsel %vm643, %v1348, 0
        %1361 = vmatprep.subr.mxu0 0.0
        %1362 = vmatpush1.msra.mxu0 %v1350
        %1363 = vmatprep.subr.mxu0 0.0
        %1364 = vmatpush1.msra.mxu0 %v1352
        %1365 = vmatprep.subr.mxu0 0.0
        %1366 = vmatpush1.msra.mxu0 0.0
        %1367 = vmatprep.subr.mxu0 0.0
        %1368 = vmatpush1.msra.mxu0 0.0
        %1369 = vmatprep.subr.mxu0 0.0
        %1370 = vmatpush1.msra.mxu0 0.0
        %1371 = vmatprep.subr.mxu0 0.0
        %1372 = vmatpush1.msra.mxu0 0.0
        %1373 = vmatprep.subr.mxu0 0.0
        %1374 = vmatpush1.msra.mxu0 0.0
        %1375 = vmatprep.subr.mxu0 0.0
        %1376 = vmatpush1.msra.mxu0 0.0
        %1377 = vmatprep.subr.mxu0 0.0
        %1378 = vmatpush1.msra.mxu0 0.0
        %1379 = vmatprep.subr.mxu0 0.0
        %1380 = vmatpush1.msra.mxu0 0.0
        %1381 = vmatprep.subr.mxu0 0.0
        %1382 = vmatpush1.msra.mxu0 0.0
        %1383 = vmatprep.subr.mxu0 0.0
        %1384 = vmatpush1.msra.mxu0 0.0
        %1385 = vmatprep.subr.mxu0 0.0
        %1386 = vmatpush1.msra.mxu0 0.0
        %1387 = vmatprep.subr.mxu0 0.0
        %1388 = vmatpush1.msra.mxu0 0.0
        %1389 = vmatprep.subr.mxu0 0.0
        %1390 = vmatpush1.msra.mxu0 0.0
        %1391 = vmatprep.subr.mxu0 0.0
        %1392 = vmatpush1.msra.mxu0 0.0
        %1393 = vmatprep.subr.mxu0 0.0
        %1394 = vmatpush1.msra.mxu0 0.0
        %1395 = vmatprep.subr.mxu0 0.0
        %1396 = vmatpush1.msra.mxu0 0.0
        %1397 = vmatprep.subr.mxu0 0.0
        %1398 = vmatpush1.msra.mxu0 0.0
        %1399 = vmatprep.subr.mxu0 0.0
        %1400 = vmatpush1.msra.mxu0 0.0
        %1401 = vmatprep.subr.mxu0 0.0
        %1402 = vmatpush1.msra.mxu0 0.0
        %1403 = vmatprep.subr.mxu0 0.0
        %1404 = vmatpush1.msra.mxu0 0.0
        %1405 = vmatprep.subr.mxu0 0.0
        %1406 = vmatpush1.msra.mxu0 0.0
        %1407 = vmatprep.subr.mxu0 0.0
        %1408 = vmatpush1.msra.mxu0 0.0
        %1409 = vmatprep.subr.mxu0 0.0
        %1410 = vmatpush1.msra.mxu0 0.0
        %1411 = vmatprep.subr.mxu0 0.0
        %1412 = vmatpush1.msra.mxu0 0.0
        %1413 = vmatprep.subr.mxu0 0.0
        %1414 = vmatpush1.msra.mxu0 0.0
        %1415 = vmatprep.subr.mxu0 0.0
        %1416 = vmatpush1.msra.mxu0 0.0
        %1417 = vmatprep.subr.mxu0 0.0
        %1418 = vmatpush1.msra.mxu0 0.0
        %1419 = vmatprep.subr.mxu0 0.0
        %1420 = vmatpush1.msra.mxu0 0.0
        %1421 = vmatprep.subr.mxu0 0.0
        %1422 = vmatpush1.msra.mxu0 0.0
        %1423 = vmatprep.subr.mxu0 0.0
        %1424 = vmatpush1.msra.mxu0 0.0
        %1425 = vmatprep.mubr.f32.mxu0 0.0
        %1426 = vmatmul.mubr.f32.gmra.mrb[0].mxu0 %v1356
        %v1427 = vpop.f32.mrb[0].mxu0
        %v1428 = vadd.f32 0.0, %v1427
        %v1429 = vpop.f32.mrb[0].mxu0
        %1430 = vmatprep.mubr.f32.mxu0 0.0
        %1431 = vmatmul.mubr.f32.gmra.mrb[0].mxu0 %v1359
        %v1432 = vpop.f32.mrb[0].mxu0
        %v1433 = vadd.f32 0.0, %v1432
        %v1434 = vpop.f32.mrb[0].mxu0
        %1435 = vdwg.mxu0
        %1436 = vrot.lane.b32.xlu0 %v536, 64
        %v1437 = vpop.permute.xlu0 %1436
        %1438 = vrot.lane.b32.xlu0 %v542, 64
        %v1439 = vpop.permute.xlu0 %1438
        %1440 = vrot.lane.b32.xlu0 %v538, 64
        %v1441 = vpop.permute.xlu0 %1440
        %1442 = vrot.lane.b32.xlu0 %v544, 64
        %v1443 = vpop.permute.xlu0 %1442
        %v1444 = vsel %vm643, %v1437, 0
        %v1446 = vsel %vm643, %v1439, 0
        %v1448 = vsel %vm643, %v1441, 0
        %v1450 = vsel %vm643, %v1443, 0
        %1452 = vmatprep.subr.mxu0 0.0
        %1453 = vmatpush1.xpose.msra.mxu0 %v1448
        %1454 = vmatprep.subr.mxu0 0.0
        %1455 = vmatpush1.xpose.msra.mxu0 %v1450
        %1456 = vmatprep.subr.mxu0 0.0
        %1457 = vmatpush1.xpose.msra.mxu0 0.0
        %1458 = vmatprep.subr.mxu0 0.0
        %1459 = vmatpush1.xpose.msra.mxu0 0.0
        %1460 = vmatprep.subr.mxu0 0.0
        %1461 = vmatpush1.xpose.msra.mxu0 0.0
        %1462 = vmatprep.subr.mxu0 0.0
        %1463 = vmatpush1.xpose.msra.mxu0 0.0
        %1464 = vmatprep.subr.mxu0 0.0
        %1465 = vmatpush1.xpose.msra.mxu0 0.0
        %1466 = vmatprep.subr.mxu0 0.0
        %1467 = vmatpush1.xpose.msra.mxu0 0.0
        %1468 = vmatprep.subr.mxu0 0.0
        %1469 = vmatpush1.xpose.msra.mxu0 0.0
        %1470 = vmatprep.subr.mxu0 0.0
        %1471 = vmatpush1.xpose.msra.mxu0 0.0
        %1472 = vmatprep.subr.mxu0 0.0
        %1473 = vmatpush1.xpose.msra.mxu0 0.0
        %1474 = vmatprep.subr.mxu0 0.0
        %1475 = vmatpush1.xpose.msra.mxu0 0.0
        %1476 = vmatprep.subr.mxu0 0.0
        %1477 = vmatpush1.xpose.msra.mxu0 0.0
        %1478 = vmatprep.subr.mxu0 0.0
        %1479 = vmatpush1.xpose.msra.mxu0 0.0
        %1480 = vmatprep.subr.mxu0 0.0
        %1481 = vmatpush1.xpose.msra.mxu0 0.0
        %1482 = vmatprep.subr.mxu0 0.0
        %1483 = vmatpush1.xpose.msra.mxu0 0.0
        %1484 = vmatprep.subr.mxu0 0.0
        %1485 = vmatpush1.xpose.msra.mxu0 0.0
        %1486 = vmatprep.subr.mxu0 0.0
        %1487 = vmatpush1.xpose.msra.mxu0 0.0
        %1488 = vmatprep.subr.mxu0 0.0
        %1489 = vmatpush1.xpose.msra.mxu0 0.0
        %1490 = vmatprep.subr.mxu0 0.0
        %1491 = vmatpush1.xpose.msra.mxu0 0.0
        %1492 = vmatprep.subr.mxu0 0.0
        %1493 = vmatpush1.xpose.msra.mxu0 0.0
        %1494 = vmatprep.subr.mxu0 0.0
        %1495 = vmatpush1.xpose.msra.mxu0 0.0
        %1496 = vmatprep.subr.mxu0 0.0
        %1497 = vmatpush1.xpose.msra.mxu0 0.0
        %1498 = vmatprep.subr.mxu0 0.0
        %1499 = vmatpush1.xpose.msra.mxu0 0.0
        %1500 = vmatprep.subr.mxu0 0.0
        %1501 = vmatpush1.xpose.msra.mxu0 0.0
        %1502 = vmatprep.subr.mxu0 0.0
        %1503 = vmatpush1.xpose.msra.mxu0 0.0
        %1504 = vmatprep.subr.mxu0 0.0
        %1505 = vmatpush1.xpose.msra.mxu0 0.0
        %1506 = vmatprep.subr.mxu0 0.0
        %1507 = vmatpush1.xpose.msra.mxu0 0.0
        %1508 = vmatprep.subr.mxu0 0.0
        %1509 = vmatpush1.xpose.msra.mxu0 0.0
        %1510 = vmatprep.subr.mxu0 0.0
        %1511 = vmatpush1.xpose.msra.mxu0 0.0
        %1512 = vmatprep.subr.mxu0 0.0
        %1513 = vmatpush1.xpose.msra.mxu0 0.0
        %1514 = vmatprep.subr.mxu0 0.0
        %1515 = vmatpush1.xpose.msra.mxu0 0.0
        %1516 = vmatprep.mubr.f32.mxu0 0.0
        %1517 = vmatmul.mubr.f32.gmra.mrb[0].mxu0 %v1444
        %v1518 = vpop.f32.mrb[0].mxu0
        %v1519 = vadd.f32 0.0, %v1518
        %v1520 = vpop.f32.mrb[0].mxu0
        %1521 = vmatprep.mubr.f32.mxu0 0.0
        %1522 = vmatmul.mubr.f32.gmra.mrb[0].mxu0 %v1446
        %v1523 = vpop.f32.mrb[0].mxu0
        %v1524 = vadd.f32 0.0, %v1523
        %v1525 = vpop.f32.mrb[0].mxu0
        %1526 = vdwg.mxu0
        %v1527 = vsel %vm643, %v1519, -inf
        %1528 = vmax.xlane.f32.xlu0 %v1527
        %v1529 = vpop.xlane.xlu0 %1528
        %v1530 = vsel %vm643, %v1524, -inf
        %1531 = vmax.xlane.f32.xlu0 %v1530
        %v1532 = vpop.xlane.xlu0 %1531
        %v1533 = vsub.f32 %v1519, %v1529
        %v1534 = vsub.f32 %v1524, %v1532
        %v1535 = vmul.f32 %v1533, 1.442695
        %v1536 = vpow.pop %v1535
        %v1537 = vmul.f32 %v1534, 1.442695
        %v1538 = vpow.pop %v1537
        %v1539 = vsel %vm643, %v1536, 0.0
        %1540 = vadd.xlane.f32.xlu0 %v1539
        %v1541 = vpop.xlane.xlu0 %1540
        %v1542 = vsel %vm643, %v1538, 0.0
        %1543 = vadd.xlane.f32.xlu0 %v1542
        %v1544 = vpop.xlane.xlu0 %1543
        %v1545 = vrcp.pop %v1541
        %v1546 = vrcp.pop %v1544
        %v1547 = vmul.f32 %v1536, %v1545
        %v1548 = vmul.f32 %v1538, %v1546
        %1549 = vrot.lane.b32.xlu0 %v625, 64
        %v1550 = vpop.permute.xlu0 %1549
        %1551 = vrot.lane.b32.xlu0 %v630, 64
        %v1552 = vpop.permute.xlu0 %1551
        %v1556 = vsel %vm643, %v1547, 0
        %v1559 = vsel %vm643, %v1548, 0
        %1561 = vmatprep.subr.mxu0 0.0
        %1562 = vmatpush1.msra.mxu0 %v1550
        %1563 = vmatprep.subr.mxu0 0.0
        %1564 = vmatpush1.msra.mxu0 %v1552
        %1565 = vmatprep.subr.mxu0 0.0
        %1566 = vmatpush1.msra.mxu0 0.0
        %1567 = vmatprep.subr.mxu0 0.0
        %1568 = vmatpush1.msra.mxu0 0.0
        %1569 = vmatprep.subr.mxu0 0.0
        %1570 = vmatpush1.msra.mxu0 0.0
        %1571 = vmatprep.subr.mxu0 0.0
        %1572 = vmatpush1.msra.mxu0 0.0
        %1573 = vmatprep.subr.mxu0 0.0
        %1574 = vmatpush1.msra.mxu0 0.0
        %1575 = vmatprep.subr.mxu0 0.0
        %1576 = vmatpush1.msra.mxu0 0.0
        %1577 = vmatprep.subr.mxu0 0.0
        %1578 = vmatpush1.msra.mxu0 0.0
        %1579 = vmatprep.subr.mxu0 0.0
        %1580 = vmatpush1.msra.mxu0 0.0
        %1581 = vmatprep.subr.mxu0 0.0
        %1582 = vmatpush1.msra.mxu0 0.0
        %1583 = vmatprep.subr.mxu0 0.0
        %1584 = vmatpush1.msra.mxu0 0.0
        %1585 = vmatprep.subr.mxu0 0.0
        %1586 = vmatpush1.msra.mxu0 0.0
        %1587 = vmatprep.subr.mxu0 0.0
        %1588 = vmatpush1.msra.mxu0 0.0
        %1589 = vmatprep.subr.mxu0 0.0
        %1590 = vmatpush1.msra.mxu0 0.0
        %1591 = vmatprep.subr.mxu0 0.0
        %1592 = vmatpush1.msra.mxu0 0.0
        %1593 = vmatprep.subr.mxu0 0.0
        %1594 = vmatpush1.msra.mxu0 0.0
        %1595 = vmatprep.subr.mxu0 0.0
        %1596 = vmatpush1.msra.mxu0 0.0
        %1597 = vmatprep.subr.mxu0 0.0
        %1598 = vmatpush1.msra.mxu0 0.0
        %1599 = vmatprep.subr.mxu0 0.0
        %1600 = vmatpush1.msra.mxu0 0.0
        %1601 = vmatprep.subr.mxu0 0.0
        %1602 = vmatpush1.msra.mxu0 0.0
        %1603 = vmatprep.subr.mxu0 0.0
        %1604 = vmatpush1.msra.mxu0 0.0
        %1605 = vmatprep.subr.mxu0 0.0
        %1606 = vmatpush1.msra.mxu0 0.0
        %1607 = vmatprep.subr.mxu0 0.0
        %1608 = vmatpush1.msra.mxu0 0.0
        %1609 = vmatprep.subr.mxu0 0.0
        %1610 = vmatpush1.msra.mxu0 0.0
        %1611 = vmatprep.subr.mxu0 0.0
        %1612 = vmatpush1.msra.mxu0 0.0
        %1613 = vmatprep.subr.mxu0 0.0
        %1614 = vmatpush1.msra.mxu0 0.0
        %1615 = vmatprep.subr.mxu0 0.0
        %1616 = vmatpush1.msra.mxu0 0.0
        %1617 = vmatprep.subr.mxu0 0.0
        %1618 = vmatpush1.msra.mxu0 0.0
        %1619 = vmatprep.subr.mxu0 0.0
        %1620 = vmatpush1.msra.mxu0 0.0
        %1621 = vmatprep.subr.mxu0 0.0
        %1622 = vmatpush1.msra.mxu0 0.0
        %1623 = vmatprep.subr.mxu0 0.0
        %1624 = vmatpush1.msra.mxu0 0.0
        %1625 = vmatprep.mubr.f32.mxu0 0.0
        %1626 = vmatmul.mubr.f32.gmra.mrb[0].mxu0 %v1556
        %v1627 = vpop.f32.mrb[0].mxu0
        %v1628 = vadd.f32 0.0, %v1627
        %v1629 = vpop.f32.mrb[0].mxu0
        %1630 = vmatprep.mubr.f32.mxu0 0.0
        %1631 = vmatmul.mubr.f32.gmra.mrb[0].mxu0 %v1559
        %v1632 = vpop.f32.mrb[0].mxu0
        %v1633 = vadd.f32 0.0, %v1632
        %v1634 = vpop.f32.mrb[0].mxu0
        %1635 = vdwg.mxu0
        %1636 = vrot.lane.b32.xlu0 %v536, 48
        %v1637 = vpop.permute.xlu0 %1636
        %1638 = vrot.lane.b32.xlu0 %v542, 48
        %v1639 = vpop.permute.xlu0 %1638
        %1640 = vrot.lane.b32.xlu0 %v538, 48
        %v1641 = vpop.permute.xlu0 %1640
        %1642 = vrot.lane.b32.xlu0 %v544, 48
        %v1643 = vpop.permute.xlu0 %1642
        %v1644 = vsel %vm643, %v1637, 0
        %v1646 = vsel %vm643, %v1639, 0
        %v1648 = vsel %vm643, %v1641, 0
        %v1650 = vsel %vm643, %v1643, 0
        %1652 = vmatprep.subr.mxu0 0.0
        %1653 = vmatpush1.xpose.msra.mxu0 %v1648
        %1654 = vmatprep.subr.mxu0 0.0
        %1655 = vmatpush1.xpose.msra.mxu0 %v1650
        %1656 = vmatprep.subr.mxu0 0.0
        %1657 = vmatpush1.xpose.msra.mxu0 0.0
        %1658 = vmatprep.subr.mxu0 0.0
        %1659 = vmatpush1.xpose.msra.mxu0 0.0
        %1660 = vmatprep.subr.mxu0 0.0
        %1661 = vmatpush1.xpose.msra.mxu0 0.0
        %1662 = vmatprep.subr.mxu0 0.0
        %1663 = vmatpush1.xpose.msra.mxu0 0.0
        %1664 = vmatprep.subr.mxu0 0.0
        %1665 = vmatpush1.xpose.msra.mxu0 0.0
        %1666 = vmatprep.subr.mxu0 0.0
        %1667 = vmatpush1.xpose.msra.mxu0 0.0
        %1668 = vmatprep.subr.mxu0 0.0
        %1669 = vmatpush1.xpose.msra.mxu0 0.0
        %1670 = vmatprep.subr.mxu0 0.0
        %1671 = vmatpush1.xpose.msra.mxu0 0.0
        %1672 = vmatprep.subr.mxu0 0.0
        %1673 = vmatpush1.xpose.msra.mxu0 0.0
        %1674 = vmatprep.subr.mxu0 0.0
        %1675 = vmatpush1.xpose.msra.mxu0 0.0
        %1676 = vmatprep.subr.mxu0 0.0
        %1677 = vmatpush1.xpose.msra.mxu0 0.0
        %1678 = vmatprep.subr.mxu0 0.0
        %1679 = vmatpush1.xpose.msra.mxu0 0.0
        %1680 = vmatprep.subr.mxu0 0.0
        %1681 = vmatpush1.xpose.msra.mxu0 0.0
        %1682 = vmatprep.subr.mxu0 0.0
        %1683 = vmatpush1.xpose.msra.mxu0 0.0
        %1684 = vmatprep.subr.mxu0 0.0
        %1685 = vmatpush1.xpose.msra.mxu0 0.0
        %1686 = vmatprep.subr.mxu0 0.0
        %1687 = vmatpush1.xpose.msra.mxu0 0.0
        %1688 = vmatprep.subr.mxu0 0.0
        %1689 = vmatpush1.xpose.msra.mxu0 0.0
        %1690 = vmatprep.subr.mxu0 0.0
        %1691 = vmatpush1.xpose.msra.mxu0 0.0
        %1692 = vmatprep.subr.mxu0 0.0
        %1693 = vmatpush1.xpose.msra.mxu0 0.0
        %1694 = vmatprep.subr.mxu0 0.0
        %1695 = vmatpush1.xpose.msra.mxu0 0.0
        %1696 = vmatprep.subr.mxu0 0.0
        %1697 = vmatpush1.xpose.msra.mxu0 0.0
        %1698 = vmatprep.subr.mxu0 0.0
        %1699 = vmatpush1.xpose.msra.mxu0 0.0
        %1700 = vmatprep.subr.mxu0 0.0
        %1701 = vmatpush1.xpose.msra.mxu0 0.0
        %1702 = vmatprep.subr.mxu0 0.0
        %1703 = vmatpush1.xpose.msra.mxu0 0.0
        %1704 = vmatprep.subr.mxu0 0.0
        %1705 = vmatpush1.xpose.msra.mxu0 0.0
        %1706 = vmatprep.subr.mxu0 0.0
        %1707 = vmatpush1.xpose.msra.mxu0 0.0
        %1708 = vmatprep.subr.mxu0 0.0
        %1709 = vmatpush1.xpose.msra.mxu0 0.0
        %1710 = vmatprep.subr.mxu0 0.0
        %1711 = vmatpush1.xpose.msra.mxu0 0.0
        %1712 = vmatprep.subr.mxu0 0.0
        %1713 = vmatpush1.xpose.msra.mxu0 0.0
        %1714 = vmatprep.subr.mxu0 0.0
        %1715 = vmatpush1.xpose.msra.mxu0 0.0
        %1716 = vmatprep.mubr.f32.mxu0 0.0
        %1717 = vmatmul.mubr.f32.gmra.mrb[0].mxu0 %v1644
        %v1718 = vpop.f32.mrb[0].mxu0
        %v1719 = vadd.f32 0.0, %v1718
        %v1720 = vpop.f32.mrb[0].mxu0
        %1721 = vmatprep.mubr.f32.mxu0 0.0
        %1722 = vmatmul.mubr.f32.gmra.mrb[0].mxu0 %v1646
        %v1723 = vpop.f32.mrb[0].mxu0
        %v1724 = vadd.f32 0.0, %v1723
        %v1725 = vpop.f32.mrb[0].mxu0
        %1726 = vdwg.mxu0
        %v1727 = vsel %vm643, %v1719, -inf
        %1728 = vmax.xlane.f32.xlu0 %v1727
        %v1729 = vpop.xlane.xlu0 %1728
        %v1730 = vsel %vm643, %v1724, -inf
        %1731 = vmax.xlane.f32.xlu0 %v1730
        %v1732 = vpop.xlane.xlu0 %1731
        %v1733 = vsub.f32 %v1719, %v1729
        %v1734 = vsub.f32 %v1724, %v1732
        %v1735 = vmul.f32 %v1733, 1.442695
        %v1736 = vpow.pop %v1735
        %v1737 = vmul.f32 %v1734, 1.442695
        %v1738 = vpow.pop %v1737
        %v1739 = vsel %vm643, %v1736, 0.0
        %1740 = vadd.xlane.f32.xlu0 %v1739
        %v1741 = vpop.xlane.xlu0 %1740
        %v1742 = vsel %vm643, %v1738, 0.0
        %1743 = vadd.xlane.f32.xlu0 %v1742
        %v1744 = vpop.xlane.xlu0 %1743
        %v1745 = vrcp.pop %v1741
        %v1746 = vrcp.pop %v1744
        %v1747 = vmul.f32 %v1736, %v1745
        %v1748 = vmul.f32 %v1738, %v1746
        %1749 = vrot.lane.b32.xlu0 %v625, 48
        %v1750 = vpop.permute.xlu0 %1749
        %1751 = vrot.lane.b32.xlu0 %v630, 48
        %v1752 = vpop.permute.xlu0 %1751
        %v1756 = vsel %vm643, %v1747, 0
        %v1759 = vsel %vm643, %v1748, 0
        %1761 = vmatprep.subr.mxu0 0.0
        %1762 = vmatpush1.msra.mxu0 %v1750
        %1763 = vmatprep.subr.mxu0 0.0
        %1764 = vmatpush1.msra.mxu0 %v1752
        %1765 = vmatprep.subr.mxu0 0.0
        %1766 = vmatpush1.msra.mxu0 0.0
        %1767 = vmatprep.subr.mxu0 0.0
        %1768 = vmatpush1.msra.mxu0 0.0
        %1769 = vmatprep.subr.mxu0 0.0
        %1770 = vmatpush1.msra.mxu0 0.0
        %1771 = vmatprep.subr.mxu0 0.0
        %1772 = vmatpush1.msra.mxu0 0.0
        %1773 = vmatprep.subr.mxu0 0.0
        %1774 = vmatpush1.msra.mxu0 0.0
        %1775 = vmatprep.subr.mxu0 0.0
        %1776 = vmatpush1.msra.mxu0 0.0
        %1777 = vmatprep.subr.mxu0 0.0
        %1778 = vmatpush1.msra.mxu0 0.0
        %1779 = vmatprep.subr.mxu0 0.0
        %1780 = vmatpush1.msra.mxu0 0.0
        %1781 = vmatprep.subr.mxu0 0.0
        %1782 = vmatpush1.msra.mxu0 0.0
        %1783 = vmatprep.subr.mxu0 0.0
        %1784 = vmatpush1.msra.mxu0 0.0
        %1785 = vmatprep.subr.mxu0 0.0
        %1786 = vmatpush1.msra.mxu0 0.0
        %1787 = vmatprep.subr.mxu0 0.0
        %1788 = vmatpush1.msra.mxu0 0.0
        %1789 = vmatprep.subr.mxu0 0.0
        %1790 = vmatpush1.msra.mxu0 0.0
        %1791 = vmatprep.subr.mxu0 0.0
        %1792 = vmatpush1.msra.mxu0 0.0
        %1793 = vmatprep.subr.mxu0 0.0
        %1794 = vmatpush1.msra.mxu0 0.0
        %1795 = vmatprep.subr.mxu0 0.0
        %1796 = vmatpush1.msra.mxu0 0.0
        %1797 = vmatprep.subr.mxu0 0.0
        %1798 = vmatpush1.msra.mxu0 0.0
        %1799 = vmatprep.subr.mxu0 0.0
        %1800 = vmatpush1.msra.mxu0 0.0
        %1801 = vmatprep.subr.mxu0 0.0
        %1802 = vmatpush1.msra.mxu0 0.0
        %1803 = vmatprep.subr.mxu0 0.0
        %1804 = vmatpush1.msra.mxu0 0.0
        %1805 = vmatprep.subr.mxu0 0.0
        %1806 = vmatpush1.msra.mxu0 0.0
        %1807 = vmatprep.subr.mxu0 0.0
        %1808 = vmatpush1.msra.mxu0 0.0
        %1809 = vmatprep.subr.mxu0 0.0
        %1810 = vmatpush1.msra.mxu0 0.0
        %1811 = vmatprep.subr.mxu0 0.0
        %1812 = vmatpush1.msra.mxu0 0.0
        %1813 = vmatprep.subr.mxu0 0.0
        %1814 = vmatpush1.msra.mxu0 0.0
        %1815 = vmatprep.subr.mxu0 0.0
        %1816 = vmatpush1.msra.mxu0 0.0
        %1817 = vmatprep.subr.mxu0 0.0
        %1818 = vmatpush1.msra.mxu0 0.0
        %1819 = vmatprep.subr.mxu0 0.0
        %1820 = vmatpush1.msra.mxu0 0.0
        %1821 = vmatprep.subr.mxu0 0.0
        %1822 = vmatpush1.msra.mxu0 0.0
        %1823 = vmatprep.subr.mxu0 0.0
        %1824 = vmatpush1.msra.mxu0 0.0
        %1825 = vmatprep.mubr.f32.mxu0 0.0
        %1826 = vmatmul.mubr.f32.gmra.mrb[0].mxu0 %v1756
        %v1827 = vpop.f32.mrb[0].mxu0
        %v1828 = vadd.f32 0.0, %v1827
        %v1829 = vpop.f32.mrb[0].mxu0
        %1830 = vmatprep.mubr.f32.mxu0 0.0
        %1831 = vmatmul.mubr.f32.gmra.mrb[0].mxu0 %v1759
        %v1832 = vpop.f32.mrb[0].mxu0
        %v1833 = vadd.f32 0.0, %v1832
        %v1834 = vpop.f32.mrb[0].mxu0
        %1835 = vdwg.mxu0
        %1836 = vrot.lane.b32.xlu0 %v536, 32
        %v1837 = vpop.permute.xlu0 %1836
        %1838 = vrot.lane.b32.xlu0 %v542, 32
        %v1839 = vpop.permute.xlu0 %1838
        %1840 = vrot.lane.b32.xlu0 %v538, 32
        %v1841 = vpop.permute.xlu0 %1840
        %1842 = vrot.lane.b32.xlu0 %v544, 32
        %v1843 = vpop.permute.xlu0 %1842
        %v1844 = vsel %vm643, %v1837, 0
        %v1846 = vsel %vm643, %v1839, 0
        %v1848 = vsel %vm643, %v1841, 0
        %v1850 = vsel %vm643, %v1843, 0
        %1852 = vmatprep.subr.mxu0 0.0
        %1853 = vmatpush1.xpose.msra.mxu0 %v1848
        %1854 = vmatprep.subr.mxu0 0.0
        %1855 = vmatpush1.xpose.msra.mxu0 %v1850
        %1856 = vmatprep.subr.mxu0 0.0
        %1857 = vmatpush1.xpose.msra.mxu0 0.0
        %1858 = vmatprep.subr.mxu0 0.0
        %1859 = vmatpush1.xpose.msra.mxu0 0.0
        %1860 = vmatprep.subr.mxu0 0.0
        %1861 = vmatpush1.xpose.msra.mxu0 0.0
        %1862 = vmatprep.subr.mxu0 0.0
        %1863 = vmatpush1.xpose.msra.mxu0 0.0
        %1864 = vmatprep.subr.mxu0 0.0
        %1865 = vmatpush1.xpose.msra.mxu0 0.0
        %1866 = vmatprep.subr.mxu0 0.0
        %1867 = vmatpush1.xpose.msra.mxu0 0.0
        %1868 = vmatprep.subr.mxu0 0.0
        %1869 = vmatpush1.xpose.msra.mxu0 0.0
        %1870 = vmatprep.subr.mxu0 0.0
        %1871 = vmatpush1.xpose.msra.mxu0 0.0
        %1872 = vmatprep.subr.mxu0 0.0
        %1873 = vmatpush1.xpose.msra.mxu0 0.0
        %1874 = vmatprep.subr.mxu0 0.0
        %1875 = vmatpush1.xpose.msra.mxu0 0.0
        %1876 = vmatprep.subr.mxu0 0.0
        %1877 = vmatpush1.xpose.msra.mxu0 0.0
        %1878 = vmatprep.subr.mxu0 0.0
        %1879 = vmatpush1.xpose.msra.mxu0 0.0
        %1880 = vmatprep.subr.mxu0 0.0
        %1881 = vmatpush1.xpose.msra.mxu0 0.0
        %1882 = vmatprep.subr.mxu0 0.0
        %1883 = vmatpush1.xpose.msra.mxu0 0.0
        %1884 = vmatprep.subr.mxu0 0.0
        %1885 = vmatpush1.xpose.msra.mxu0 0.0
        %1886 = vmatprep.subr.mxu0 0.0
        %1887 = vmatpush1.xpose.msra.mxu0 0.0
        %1888 = vmatprep.subr.mxu0 0.0
        %1889 = vmatpush1.xpose.msra.mxu0 0.0
        %1890 = vmatprep.subr.mxu0 0.0
        %1891 = vmatpush1.xpose.msra.mxu0 0.0
        %1892 = vmatprep.subr.mxu0 0.0
        %1893 = vmatpush1.xpose.msra.mxu0 0.0
        %1894 = vmatprep.subr.mxu0 0.0
        %1895 = vmatpush1.xpose.msra.mxu0 0.0
        %1896 = vmatprep.subr.mxu0 0.0
        %1897 = vmatpush1.xpose.msra.mxu0 0.0
        %1898 = vmatprep.subr.mxu0 0.0
        %1899 = vmatpush1.xpose.msra.mxu0 0.0
        %1900 = vmatprep.subr.mxu0 0.0
        %1901 = vmatpush1.xpose.msra.mxu0 0.0
        %1902 = vmatprep.subr.mxu0 0.0
        %1903 = vmatpush1.xpose.msra.mxu0 0.0
        %1904 = vmatprep.subr.mxu0 0.0
        %1905 = vmatpush1.xpose.msra.mxu0 0.0
        %1906 = vmatprep.subr.mxu0 0.0
        %1907 = vmatpush1.xpose.msra.mxu0 0.0
        %1908 = vmatprep.subr.mxu0 0.0
        %1909 = vmatpush1.xpose.msra.mxu0 0.0
        %1910 = vmatprep.subr.mxu0 0.0
        %1911 = vmatpush1.xpose.msra.mxu0 0.0
        %1912 = vmatprep.subr.mxu0 0.0
        %1913 = vmatpush1.xpose.msra.mxu0 0.0
        %1914 = vmatprep.subr.mxu0 0.0
        %1915 = vmatpush1.xpose.msra.mxu0 0.0
        %1916 = vmatprep.mubr.f32.mxu0 0.0
        %1917 = vmatmul.mubr.f32.gmra.mrb[0].mxu0 %v1844
        %v1918 = vpop.f32.mrb[0].mxu0
        %v1919 = vadd.f32 0.0, %v1918
        %v1920 = vpop.f32.mrb[0].mxu0
        %1921 = vmatprep.mubr.f32.mxu0 0.0
        %1922 = vmatmul.mubr.f32.gmra.mrb[0].mxu0 %v1846
        %v1923 = vpop.f32.mrb[0].mxu0
        %v1924 = vadd.f32 0.0, %v1923
        %v1925 = vpop.f32.mrb[0].mxu0
        %1926 = vdwg.mxu0
        %v1927 = vsel %vm643, %v1919, -inf
        %1928 = vmax.xlane.f32.xlu0 %v1927
        %v1929 = vpop.xlane.xlu0 %1928
        %v1930 = vsel %vm643, %v1924, -inf
        %1931 = vmax.xlane.f32.xlu0 %v1930
        %v1932 = vpop.xlane.xlu0 %1931
        %v1933 = vsub.f32 %v1919, %v1929
        %v1934 = vsub.f32 %v1924, %v1932
        %v1935 = vmul.f32 %v1933, 1.442695
        %v1936 = vpow.pop %v1935
        %v1937 = vmul.f32 %v1934, 1.442695
        %v1938 = vpow.pop %v1937
        %v1939 = vsel %vm643, %v1936, 0.0
        %1940 = vadd.xlane.f32.xlu0 %v1939
        %v1941 = vpop.xlane.xlu0 %1940
        %v1942 = vsel %vm643, %v1938, 0.0
        %1943 = vadd.xlane.f32.xlu0 %v1942
        %v1944 = vpop.xlane.xlu0 %1943
        %v1945 = vrcp.pop %v1941
        %v1946 = vrcp.pop %v1944
        %v1947 = vmul.f32 %v1936, %v1945
        %v1948 = vmul.f32 %v1938, %v1946
        %1949 = vrot.lane.b32.xlu0 %v625, 32
        %v1950 = vpop.permute.xlu0 %1949
        %1951 = vrot.lane.b32.xlu0 %v630, 32
        %v1952 = vpop.permute.xlu0 %1951
        %v1956 = vsel %vm643, %v1947, 0
        %v1959 = vsel %vm643, %v1948, 0
        %1961 = vmatprep.subr.mxu0 0.0
        %1962 = vmatpush1.msra.mxu0 %v1950
        %1963 = vmatprep.subr.mxu0 0.0
        %1964 = vmatpush1.msra.mxu0 %v1952
        %1965 = vmatprep.subr.mxu0 0.0
        %1966 = vmatpush1.msra.mxu0 0.0
        %1967 = vmatprep.subr.mxu0 0.0
        %1968 = vmatpush1.msra.mxu0 0.0
        %1969 = vmatprep.subr.mxu0 0.0
        %1970 = vmatpush1.msra.mxu0 0.0
        %1971 = vmatprep.subr.mxu0 0.0
        %1972 = vmatpush1.msra.mxu0 0.0
        %1973 = vmatprep.subr.mxu0 0.0
        %1974 = vmatpush1.msra.mxu0 0.0
        %1975 = vmatprep.subr.mxu0 0.0
        %1976 = vmatpush1.msra.mxu0 0.0
        %1977 = vmatprep.subr.mxu0 0.0
        %1978 = vmatpush1.msra.mxu0 0.0
        %1979 = vmatprep.subr.mxu0 0.0
        %1980 = vmatpush1.msra.mxu0 0.0
        %1981 = vmatprep.subr.mxu0 0.0
        %1982 = vmatpush1.msra.mxu0 0.0
        %1983 = vmatprep.subr.mxu0 0.0
        %1984 = vmatpush1.msra.mxu0 0.0
        %1985 = vmatprep.subr.mxu0 0.0
        %1986 = vmatpush1.msra.mxu0 0.0
        %1987 = vmatprep.subr.mxu0 0.0
        %1988 = vmatpush1.msra.mxu0 0.0
        %1989 = vmatprep.subr.mxu0 0.0
        %1990 = vmatpush1.msra.mxu0 0.0
        %1991 = vmatprep.subr.mxu0 0.0
        %1992 = vmatpush1.msra.mxu0 0.0
        %1993 = vmatprep.subr.mxu0 0.0
        %1994 = vmatpush1.msra.mxu0 0.0
        %1995 = vmatprep.subr.mxu0 0.0
        %1996 = vmatpush1.msra.mxu0 0.0
        %1997 = vmatprep.subr.mxu0 0.0
        %1998 = vmatpush1.msra.mxu0 0.0
        %1999 = vmatprep.subr.mxu0 0.0
        %2000 = vmatpush1.msra.mxu0 0.0
        %2001 = vmatprep.subr.mxu0 0.0
        %2002 = vmatpush1.msra.mxu0 0.0
        %2003 = vmatprep.subr.mxu0 0.0
        %2004 = vmatpush1.msra.mxu0 0.0
        %2005 = vmatprep.subr.mxu0 0.0
        %2006 = vmatpush1.msra.mxu0 0.0
        %2007 = vmatprep.subr.mxu0 0.0
        %2008 = vmatpush1.msra.mxu0 0.0
        %2009 = vmatprep.subr.mxu0 0.0
        %2010 = vmatpush1.msra.mxu0 0.0
        %2011 = vmatprep.subr.mxu0 0.0
        %2012 = vmatpush1.msra.mxu0 0.0
        %2013 = vmatprep.subr.mxu0 0.0
        %2014 = vmatpush1.msra.mxu0 0.0
        %2015 = vmatprep.subr.mxu0 0.0
        %2016 = vmatpush1.msra.mxu0 0.0
        %2017 = vmatprep.subr.mxu0 0.0
        %2018 = vmatpush1.msra.mxu0 0.0
        %2019 = vmatprep.subr.mxu0 0.0
        %2020 = vmatpush1.msra.mxu0 0.0
        %2021 = vmatprep.subr.mxu0 0.0
        %2022 = vmatpush1.msra.mxu0 0.0
        %2023 = vmatprep.subr.mxu0 0.0
        %2024 = vmatpush1.msra.mxu0 0.0
        %2025 = vmatprep.mubr.f32.mxu0 0.0
        %2026 = vmatmul.mubr.f32.gmra.mrb[0].mxu0 %v1956
        %v2027 = vpop.f32.mrb[0].mxu0
        %v2028 = vadd.f32 0.0, %v2027
        %v2029 = vpop.f32.mrb[0].mxu0
        %2030 = vmatprep.mubr.f32.mxu0 0.0
        %2031 = vmatmul.mubr.f32.gmra.mrb[0].mxu0 %v1959
        %v2032 = vpop.f32.mrb[0].mxu0
        %v2033 = vadd.f32 0.0, %v2032
        %v2034 = vpop.f32.mrb[0].mxu0
        %2035 = vdwg.mxu0
        %2036 = vrot.lane.b32.xlu0 %v536, 16
        %v2037 = vpop.permute.xlu0 %2036
        %2038 = vrot.lane.b32.xlu0 %v542, 16
        %v2039 = vpop.permute.xlu0 %2038
        %2040 = vrot.lane.b32.xlu0 %v538, 16
        %v2041 = vpop.permute.xlu0 %2040
        %2042 = vrot.lane.b32.xlu0 %v544, 16
        %v2043 = vpop.permute.xlu0 %2042
        %v2044 = vsel %vm643, %v2037, 0
        %v2046 = vsel %vm643, %v2039, 0
        %v2048 = vsel %vm643, %v2041, 0
        %v2050 = vsel %vm643, %v2043, 0
        %2052 = vmatprep.subr.mxu0 0.0
        %2053 = vmatpush1.xpose.msra.mxu0 %v2048
        %2054 = vmatprep.subr.mxu0 0.0
        %2055 = vmatpush1.xpose.msra.mxu0 %v2050
        %2056 = vmatprep.subr.mxu0 0.0
        %2057 = vmatpush1.xpose.msra.mxu0 0.0
        %2058 = vmatprep.subr.mxu0 0.0
        %2059 = vmatpush1.xpose.msra.mxu0 0.0
        %2060 = vmatprep.subr.mxu0 0.0
        %2061 = vmatpush1.xpose.msra.mxu0 0.0
        %2062 = vmatprep.subr.mxu0 0.0
        %2063 = vmatpush1.xpose.msra.mxu0 0.0
        %2064 = vmatprep.subr.mxu0 0.0
        %2065 = vmatpush1.xpose.msra.mxu0 0.0
        %2066 = vmatprep.subr.mxu0 0.0
        %2067 = vmatpush1.xpose.msra.mxu0 0.0
        %2068 = vmatprep.subr.mxu0 0.0
        %2069 = vmatpush1.xpose.msra.mxu0 0.0
        %2070 = vmatprep.subr.mxu0 0.0
        %2071 = vmatpush1.xpose.msra.mxu0 0.0
        %2072 = vmatprep.subr.mxu0 0.0
        %2073 = vmatpush1.xpose.msra.mxu0 0.0
        %2074 = vmatprep.subr.mxu0 0.0
        %2075 = vmatpush1.xpose.msra.mxu0 0.0
        %2076 = vmatprep.subr.mxu0 0.0
        %2077 = vmatpush1.xpose.msra.mxu0 0.0
        %2078 = vmatprep.subr.mxu0 0.0
        %2079 = vmatpush1.xpose.msra.mxu0 0.0
        %2080 = vmatprep.subr.mxu0 0.0
        %2081 = vmatpush1.xpose.msra.mxu0 0.0
        %2082 = vmatprep.subr.mxu0 0.0
        %2083 = vmatpush1.xpose.msra.mxu0 0.0
        %2084 = vmatprep.subr.mxu0 0.0
        %2085 = vmatpush1.xpose.msra.mxu0 0.0
        %2086 = vmatprep.subr.mxu0 0.0
        %2087 = vmatpush1.xpose.msra.mxu0 0.0
        %2088 = vmatprep.subr.mxu0 0.0
        %2089 = vmatpush1.xpose.msra.mxu0 0.0
        %2090 = vmatprep.subr.mxu0 0.0
        %2091 = vmatpush1.xpose.msra.mxu0 0.0
        %2092 = vmatprep.subr.mxu0 0.0
        %2093 = vmatpush1.xpose.msra.mxu0 0.0
        %2094 = vmatprep.subr.mxu0 0.0
        %2095 = vmatpush1.xpose.msra.mxu0 0.0
        %2096 = vmatprep.subr.mxu0 0.0
        %2097 = vmatpush1.xpose.msra.mxu0 0.0
        %2098 = vmatprep.subr.mxu0 0.0
        %2099 = vmatpush1.xpose.msra.mxu0 0.0
        %2100 = vmatprep.subr.mxu0 0.0
        %2101 = vmatpush1.xpose.msra.mxu0 0.0
        %2102 = vmatprep.subr.mxu0 0.0
        %2103 = vmatpush1.xpose.msra.mxu0 0.0
        %2104 = vmatprep.subr.mxu0 0.0
        %2105 = vmatpush1.xpose.msra.mxu0 0.0
        %2106 = vmatprep.subr.mxu0 0.0
        %2107 = vmatpush1.xpose.msra.mxu0 0.0
        %2108 = vmatprep.subr.mxu0 0.0
        %2109 = vmatpush1.xpose.msra.mxu0 0.0
        %2110 = vmatprep.subr.mxu0 0.0
        %2111 = vmatpush1.xpose.msra.mxu0 0.0
        %2112 = vmatprep.subr.mxu0 0.0
        %2113 = vmatpush1.xpose.msra.mxu0 0.0
        %2114 = vmatprep.subr.mxu0 0.0
        %2115 = vmatpush1.xpose.msra.mxu0 0.0
        %2116 = vmatprep.mubr.f32.mxu0 0.0
        %2117 = vmatmul.mubr.f32.gmra.mrb[0].mxu0 %v2044
        %v2118 = vpop.f32.mrb[0].mxu0
        %v2119 = vadd.f32 0.0, %v2118
        %v2120 = vpop.f32.mrb[0].mxu0
        %2121 = vmatprep.mubr.f32.mxu0 0.0
        %2122 = vmatmul.mubr.f32.gmra.mrb[0].mxu0 %v2046
        %v2123 = vpop.f32.mrb[0].mxu0
        %v2124 = vadd.f32 0.0, %v2123
        %v2125 = vpop.f32.mrb[0].mxu0
        %2126 = vdwg.mxu0
        %v2127 = vsel %vm643, %v2119, -inf
        %2128 = vmax.xlane.f32.xlu0 %v2127
        %v2129 = vpop.xlane.xlu0 %2128
        %v2130 = vsel %vm643, %v2124, -inf
        %2131 = vmax.xlane.f32.xlu0 %v2130
        %v2132 = vpop.xlane.xlu0 %2131
        %v2133 = vsub.f32 %v2119, %v2129
        %v2134 = vsub.f32 %v2124, %v2132
        %v2135 = vmul.f32 %v2133, 1.442695
        %v2136 = vpow.pop %v2135
        %v2137 = vmul.f32 %v2134, 1.442695
        %v2138 = vpow.pop %v2137
        %v2139 = vsel %vm643, %v2136, 0.0
        %2140 = vadd.xlane.f32.xlu0 %v2139
        %v2141 = vpop.xlane.xlu0 %2140
        %v2142 = vsel %vm643, %v2138, 0.0
        %2143 = vadd.xlane.f32.xlu0 %v2142
        %v2144 = vpop.xlane.xlu0 %2143
        %v2145 = vrcp.pop %v2141
        %v2146 = vrcp.pop %v2144
        %v2147 = vmul.f32 %v2136, %v2145
        %v2148 = vmul.f32 %v2138, %v2146
        %2149 = vrot.lane.b32.xlu0 %v625, 16
        %v2150 = vpop.permute.xlu0 %2149
        %2151 = vrot.lane.b32.xlu0 %v630, 16
        %v2152 = vpop.permute.xlu0 %2151
        %v2156 = vsel %vm643, %v2147, 0
        %v2159 = vsel %vm643, %v2148, 0
        %2161 = vmatprep.subr.mxu0 0.0
        %2162 = vmatpush1.msra.mxu0 %v2150
        %2163 = vmatprep.subr.mxu0 0.0
        %2164 = vmatpush1.msra.mxu0 %v2152
        %2165 = vmatprep.subr.mxu0 0.0
        %2166 = vmatpush1.msra.mxu0 0.0
        %2167 = vmatprep.subr.mxu0 0.0
        %2168 = vmatpush1.msra.mxu0 0.0
        %2169 = vmatprep.subr.mxu0 0.0
        %2170 = vmatpush1.msra.mxu0 0.0
        %2171 = vmatprep.subr.mxu0 0.0
        %2172 = vmatpush1.msra.mxu0 0.0
        %2173 = vmatprep.subr.mxu0 0.0
        %2174 = vmatpush1.msra.mxu0 0.0
        %2175 = vmatprep.subr.mxu0 0.0
        %2176 = vmatpush1.msra.mxu0 0.0
        %2177 = vmatprep.subr.mxu0 0.0
        %2178 = vmatpush1.msra.mxu0 0.0
        %2179 = vmatprep.subr.mxu0 0.0
        %2180 = vmatpush1.msra.mxu0 0.0
        %2181 = vmatprep.subr.mxu0 0.0
        %2182 = vmatpush1.msra.mxu0 0.0
        %2183 = vmatprep.subr.mxu0 0.0
        %2184 = vmatpush1.msra.mxu0 0.0
        %2185 = vmatprep.subr.mxu0 0.0
        %2186 = vmatpush1.msra.mxu0 0.0
        %2187 = vmatprep.subr.mxu0 0.0
        %2188 = vmatpush1.msra.mxu0 0.0
        %2189 = vmatprep.subr.mxu0 0.0
        %2190 = vmatpush1.msra.mxu0 0.0
        %2191 = vmatprep.subr.mxu0 0.0
        %2192 = vmatpush1.msra.mxu0 0.0
        %2193 = vmatprep.subr.mxu0 0.0
        %2194 = vmatpush1.msra.mxu0 0.0
        %2195 = vmatprep.subr.mxu0 0.0
        %2196 = vmatpush1.msra.mxu0 0.0
        %2197 = vmatprep.subr.mxu0 0.0
        %2198 = vmatpush1.msra.mxu0 0.0
        %2199 = vmatprep.subr.mxu0 0.0
        %2200 = vmatpush1.msra.mxu0 0.0
        %2201 = vmatprep.subr.mxu0 0.0
        %2202 = vmatpush1.msra.mxu0 0.0
        %2203 = vmatprep.subr.mxu0 0.0
        %2204 = vmatpush1.msra.mxu0 0.0
        %2205 = vmatprep.subr.mxu0 0.0
        %2206 = vmatpush1.msra.mxu0 0.0
        %2207 = vmatprep.subr.mxu0 0.0
        %2208 = vmatpush1.msra.mxu0 0.0
        %2209 = vmatprep.subr.mxu0 0.0
        %2210 = vmatpush1.msra.mxu0 0.0
        %2211 = vmatprep.subr.mxu0 0.0
        %2212 = vmatpush1.msra.mxu0 0.0
        %2213 = vmatprep.subr.mxu0 0.0
        %2214 = vmatpush1.msra.mxu0 0.0
        %2215 = vmatprep.subr.mxu0 0.0
        %2216 = vmatpush1.msra.mxu0 0.0
        %2217 = vmatprep.subr.mxu0 0.0
        %2218 = vmatpush1.msra.mxu0 0.0
        %2219 = vmatprep.subr.mxu0 0.0
        %2220 = vmatpush1.msra.mxu0 0.0
        %2221 = vmatprep.subr.mxu0 0.0
        %2222 = vmatpush1.msra.mxu0 0.0
        %2223 = vmatprep.subr.mxu0 0.0
        %2224 = vmatpush1.msra.mxu0 0.0
        %2225 = vmatprep.mubr.f32.mxu0 0.0
        %2226 = vmatmul.mubr.f32.gmra.mrb[0].mxu0 %v2156
        %v2227 = vpop.f32.mrb[0].mxu0
        %v2228 = vadd.f32 0.0, %v2227
        %v2229 = vpop.f32.mrb[0].mxu0
        %2230 = vmatprep.mubr.f32.mxu0 0.0
        %2231 = vmatmul.mubr.f32.gmra.mrb[0].mxu0 %v2159
        %v2232 = vpop.f32.mrb[0].mxu0
        %v2233 = vadd.f32 0.0, %v2232
        %v2234 = vpop.f32.mrb[0].mxu0
        %2235 = vdwg.mxu0
        %2238 = vrot.lane.b32.xlu0 %v1028, 16
        %v2239 = vpop.permute.xlu0 %2238
        %2240 = vrot.lane.b32.xlu0 %v1033, 16
        %v2241 = vpop.permute.xlu0 %2240
        %2246 = vrot.lane.b32.xlu0 %v1228, 32
        %v2247 = vpop.permute.xlu0 %2246
        %2248 = vrot.lane.b32.xlu0 %v1233, 32
        %v2249 = vpop.permute.xlu0 %2248
        %2254 = vrot.lane.b32.xlu0 %v1428, 48
        %v2255 = vpop.permute.xlu0 %2254
        %2256 = vrot.lane.b32.xlu0 %v1433, 48
        %v2257 = vpop.permute.xlu0 %2256
        %2262 = vrot.lane.b32.xlu0 %v1628, 64
        %v2263 = vpop.permute.xlu0 %2262
        %2264 = vrot.lane.b32.xlu0 %v1633, 64
        %v2265 = vpop.permute.xlu0 %2264
        %2270 = vrot.lane.b32.xlu0 %v1828, 80
        %v2271 = vpop.permute.xlu0 %2270
        %2272 = vrot.lane.b32.xlu0 %v1833, 80
        %v2273 = vpop.permute.xlu0 %2272
        %2278 = vrot.lane.b32.xlu0 %v2028, 96
        %v2279 = vpop.permute.xlu0 %2278
        %2280 = vrot.lane.b32.xlu0 %v2033, 96
        %v2281 = vpop.permute.xlu0 %2280
        %2286 = vrot.lane.b32.xlu0 %v2228, 112
        %v2287 = vpop.permute.xlu0 %2286
        %2288 = vrot.lane.b32.xlu0 %v2233, 112
        %v2289 = vpop.permute.xlu0 %2288
        %v2292 = vsel %vm643, %v826, %v2239
        %v2293 = vsel %vm643, %v831, %v2241
        %vm2294 = vcmask 261120
        %v2295 = vsel %vm2294, %v2292, %v2247
        %v2296 = vsel %vm2294, %v2293, %v2249
        %vm2297 = vcmask 392192
        %v2298 = vsel %vm2297, %v2295, %v2255
        %v2299 = vsel %vm2297, %v2296, %v2257
        %vm2300 = vcmask 523264
        %v2301 = vsel %vm2300, %v2298, %v2263
        %v2302 = vsel %vm2300, %v2299, %v2265
        %vm2303 = vcmask 654336
        %v2304 = vsel %vm2303, %v2301, %v2271
        %v2305 = vsel %vm2303, %v2302, %v2273
        %vm2306 = vcmask 785408
        %v2307 = vsel %vm2306, %v2304, %v2279
        %v2308 = vsel %vm2306, %v2305, %v2281
        %vm2309 = vcmask 916480
        %v2310 = vsel %vm2309, %v2307, %v2287
        %v2311 = vsel %vm2309, %v2308, %v2289
        %v2313 = vsel %vm643, %v548, 0
        %v2316 = vsel %vm643, %v554, 0
        %v2319 = vsel %vm643, %v550, 0
        %v2322 = vsel %vm643, %v556, 0
        %2324 = vmatprep.subr.mxu0 0.0
        %2325 = vmatpush1.xpose.msra.mxu0 %v2319
        %2326 = vmatprep.subr.mxu0 0.0
        %2327 = vmatpush1.xpose.msra.mxu0 %v2322
        %2328 = vmatprep.subr.mxu0 0.0
        %2329 = vmatpush1.xpose.msra.mxu0 0.0
        %2330 = vmatprep.subr.mxu0 0.0
        %2331 = vmatpush1.xpose.msra.mxu0 0.0
        %2332 = vmatprep.subr.mxu0 0.0
        %2333 = vmatpush1.xpose.msra.mxu0 0.0
        %2334 = vmatprep.subr.mxu0 0.0
        %2335 = vmatpush1.xpose.msra.mxu0 0.0
        %2336 = vmatprep.subr.mxu0 0.0
        %2337 = vmatpush1.xpose.msra.mxu0 0.0
        %2338 = vmatprep.subr.mxu0 0.0
        %2339 = vmatpush1.xpose.msra.mxu0 0.0
        %2340 = vmatprep.subr.mxu0 0.0
        %2341 = vmatpush1.xpose.msra.mxu0 0.0
        %2342 = vmatprep.subr.mxu0 0.0
        %2343 = vmatpush1.xpose.msra.mxu0 0.0
        %2344 = vmatprep.subr.mxu0 0.0
        %2345 = vmatpush1.xpose.msra.mxu0 0.0
        %2346 = vmatprep.subr.mxu0 0.0
        %2347 = vmatpush1.xpose.msra.mxu0 0.0
        %2348 = vmatprep.subr.mxu0 0.0
        %2349 = vmatpush1.xpose.msra.mxu0 0.0
        %2350 = vmatprep.subr.mxu0 0.0
        %2351 = vmatpush1.xpose.msra.mxu0 0.0
        %2352 = vmatprep.subr.mxu0 0.0
        %2353 = vmatpush1.xpose.msra.mxu0 0.0
        %2354 = vmatprep.subr.mxu0 0.0
        %2355 = vmatpush1.xpose.msra.mxu0 0.0
        %2356 = vmatprep.subr.mxu0 0.0
        %2357 = vmatpush1.xpose.msra.mxu0 0.0
        %2358 = vmatprep.subr.mxu0 0.0
        %2359 = vmatpush1.xpose.msra.mxu0 0.0
        %2360 = vmatprep.subr.mxu0 0.0
        %2361 = vmatpush1.xpose.msra.mxu0 0.0
        %2362 = vmatprep.subr.mxu0 0.0
        %2363 = vmatpush1.xpose.msra.mxu0 0.0
        %2364 = vmatprep.subr.mxu0 0.0
        %2365 = vmatpush1.xpose.msra.mxu0 0.0
        %2366 = vmatprep.subr.mxu0 0.0
        %2367 = vmatpush1.xpose.msra.mxu0 0.0
        %2368 = vmatprep.subr.mxu0 0.0
        %2369 = vmatpush1.xpose.msra.mxu0 0.0
        %2370 = vmatprep.subr.mxu0 0.0
        %2371 = vmatpush1.xpose.msra.mxu0 0.0
        %2372 = vmatprep.subr.mxu0 0.0
        %2373 = vmatpush1.xpose.msra.mxu0 0.0
        %2374 = vmatprep.subr.mxu0 0.0
        %2375 = vmatpush1.xpose.msra.mxu0 0.0
        %2376 = vmatprep.subr.mxu0 0.0
        %2377 = vmatpush1.xpose.msra.mxu0 0.0
        %2378 = vmatprep.subr.mxu0 0.0
        %2379 = vmatpush1.xpose.msra.mxu0 0.0
        %2380 = vmatprep.subr.mxu0 0.0
        %2381 = vmatpush1.xpose.msra.mxu0 0.0
        %2382 = vmatprep.subr.mxu0 0.0
        %2383 = vmatpush1.xpose.msra.mxu0 0.0
        %2384 = vmatprep.subr.mxu0 0.0
        %2385 = vmatpush1.xpose.msra.mxu0 0.0
        %2386 = vmatprep.subr.mxu0 0.0
        %2387 = vmatpush1.xpose.msra.mxu0 0.0
        %2388 = vmatprep.mubr.f32.mxu0 0.0
        %2389 = vmatmul.mubr.f32.gmra.mrb[0].mxu0 %v2313
        %v2390 = vpop.f32.mrb[0].mxu0
        %v2391 = vadd.f32 0.0, %v2390
        %v2392 = vpop.f32.mrb[0].mxu0
        %2393 = vmatprep.mubr.f32.mxu0 0.0
        %2394 = vmatmul.mubr.f32.gmra.mrb[0].mxu0 %v2316
        %v2395 = vpop.f32.mrb[0].mxu0
        %v2396 = vadd.f32 0.0, %v2395
        %v2397 = vpop.f32.mrb[0].mxu0
        %2398 = vdwg.mxu0
        %v2399 = vsel %vm643, %v2391, -inf
        %2400 = vmax.xlane.f32.xlu0 %v2399
        %v2401 = vpop.xlane.xlu0 %2400
        %v2402 = vsel %vm643, %v2396, -inf
        %2403 = vmax.xlane.f32.xlu0 %v2402
        %v2404 = vpop.xlane.xlu0 %2403
        %v2405 = vsub.f32 %v2391, %v2401
        %v2406 = vsub.f32 %v2396, %v2404
        %v2407 = vmul.f32 %v2405, 1.442695
        %v2408 = vpow.pop %v2407
        %v2409 = vmul.f32 %v2406, 1.442695
        %v2410 = vpow.pop %v2409
        %v2411 = vsel %vm643, %v2408, 0.0
        %2412 = vadd.xlane.f32.xlu0 %v2411
        %v2413 = vpop.xlane.xlu0 %2412
        %v2414 = vsel %vm643, %v2410, 0.0
        %2415 = vadd.xlane.f32.xlu0 %v2414
        %v2416 = vpop.xlane.xlu0 %2415
        %v2417 = vrcp.pop %v2413
        %v2418 = vrcp.pop %v2416
        %v2419 = vmul.f32 %v2408, %v2417
        %v2420 = vmul.f32 %v2410, %v2418
        %v2422 = vsel %vm643, %v2419, 0
        %v2425 = vsel %vm643, %v2420, 0
        %2427 = vmatprep.subr.mxu0 0.0
        %2428 = vmatpush1.msra.mxu0 %v635
        %2429 = vmatprep.subr.mxu0 0.0
        %2430 = vmatpush1.msra.mxu0 %v640
        %2431 = vmatprep.subr.mxu0 0.0
        %2432 = vmatpush1.msra.mxu0 0.0
        %2433 = vmatprep.subr.mxu0 0.0
        %2434 = vmatpush1.msra.mxu0 0.0
        %2435 = vmatprep.subr.mxu0 0.0
        %2436 = vmatpush1.msra.mxu0 0.0
        %2437 = vmatprep.subr.mxu0 0.0
        %2438 = vmatpush1.msra.mxu0 0.0
        %2439 = vmatprep.subr.mxu0 0.0
        %2440 = vmatpush1.msra.mxu0 0.0
        %2441 = vmatprep.subr.mxu0 0.0
        %2442 = vmatpush1.msra.mxu0 0.0
        %2443 = vmatprep.subr.mxu0 0.0
        %2444 = vmatpush1.msra.mxu0 0.0
        %2445 = vmatprep.subr.mxu0 0.0
        %2446 = vmatpush1.msra.mxu0 0.0
        %2447 = vmatprep.subr.mxu0 0.0
        %2448 = vmatpush1.msra.mxu0 0.0
        %2449 = vmatprep.subr.mxu0 0.0
        %2450 = vmatpush1.msra.mxu0 0.0
        %2451 = vmatprep.subr.mxu0 0.0
        %2452 = vmatpush1.msra.mxu0 0.0
        %2453 = vmatprep.subr.mxu0 0.0
        %2454 = vmatpush1.msra.mxu0 0.0
        %2455 = vmatprep.subr.mxu0 0.0
        %2456 = vmatpush1.msra.mxu0 0.0
        %2457 = vmatprep.subr.mxu0 0.0
        %2458 = vmatpush1.msra.mxu0 0.0
        %2459 = vmatprep.subr.mxu0 0.0
        %2460 = vmatpush1.msra.mxu0 0.0
        %2461 = vmatprep.subr.mxu0 0.0
        %2462 = vmatpush1.msra.mxu0 0.0
        %2463 = vmatprep.subr.mxu0 0.0
        %2464 = vmatpush1.msra.mxu0 0.0
        %2465 = vmatprep.subr.mxu0 0.0
        %2466 = vmatpush1.msra.mxu0 0.0
        %2467 = vmatprep.subr.mxu0 0.0
        %2468 = vmatpush1.msra.mxu0 0.0
        %2469 = vmatprep.subr.mxu0 0.0
        %2470 = vmatpush1.msra.mxu0 0.0
        %2471 = vmatprep.subr.mxu0 0.0
        %2472 = vmatpush1.msra.mxu0 0.0
        %2473 = vmatprep.subr.mxu0 0.0
        %2474 = vmatpush1.msra.mxu0 0.0
        %2475 = vmatprep.subr.mxu0 0.0
        %2476 = vmatpush1.msra.mxu0 0.0
        %2477 = vmatprep.subr.mxu0 0.0
        %2478 = vmatpush1.msra.mxu0 0.0
        %2479 = vmatprep.subr.mxu0 0.0
        %2480 = vmatpush1.msra.mxu0 0.0
        %2481 = vmatprep.subr.mxu0 0.0
        %2482 = vmatpush1.msra.mxu0 0.0
        %2483 = vmatprep.subr.mxu0 0.0
        %2484 = vmatpush1.msra.mxu0 0.0
        %2485 = vmatprep.subr.mxu0 0.0
        %2486 = vmatpush1.msra.mxu0 0.0
        %2487 = vmatprep.subr.mxu0 0.0
        %2488 = vmatpush1.msra.mxu0 0.0
        %2489 = vmatprep.subr.mxu0 0.0
        %2490 = vmatpush1.msra.mxu0 0.0
        %2491 = vmatprep.mubr.f32.mxu0 0.0
        %2492 = vmatmul.mubr.f32.gmra.mrb[0].mxu0 %v2422
        %v2493 = vpop.f32.mrb[0].mxu0
        %v2494 = vadd.f32 0.0, %v2493
        %v2495 = vpop.f32.mrb[0].mxu0
        %2496 = vmatprep.mubr.f32.mxu0 0.0
        %2497 = vmatmul.mubr.f32.gmra.mrb[0].mxu0 %v2425
        %v2498 = vpop.f32.mrb[0].mxu0
        %v2499 = vadd.f32 0.0, %v2498
        %v2500 = vpop.f32.mrb[0].mxu0
        %2501 = vdwg.mxu0
        %2502 = vrot.lane.b32.xlu0 %v548, 112
        %v2503 = vpop.permute.xlu0 %2502
        %2504 = vrot.lane.b32.xlu0 %v554, 112
        %v2505 = vpop.permute.xlu0 %2504
        %2506 = vrot.lane.b32.xlu0 %v550, 112
        %v2507 = vpop.permute.xlu0 %2506
        %2508 = vrot.lane.b32.xlu0 %v556, 112
        %v2509 = vpop.permute.xlu0 %2508
        %v2510 = vsel %vm643, %v2503, 0
        %v2512 = vsel %vm643, %v2505, 0
        %v2514 = vsel %vm643, %v2507, 0
        %v2516 = vsel %vm643, %v2509, 0
        %2518 = vmatprep.subr.mxu0 0.0
        %2519 = vmatpush1.xpose.msra.mxu0 %v2514
        %2520 = vmatprep.subr.mxu0 0.0
        %2521 = vmatpush1.xpose.msra.mxu0 %v2516
        %2522 = vmatprep.subr.mxu0 0.0
        %2523 = vmatpush1.xpose.msra.mxu0 0.0
        %2524 = vmatprep.subr.mxu0 0.0
        %2525 = vmatpush1.xpose.msra.mxu0 0.0
        %2526 = vmatprep.subr.mxu0 0.0
        %2527 = vmatpush1.xpose.msra.mxu0 0.0
        %2528 = vmatprep.subr.mxu0 0.0
        %2529 = vmatpush1.xpose.msra.mxu0 0.0
        %2530 = vmatprep.subr.mxu0 0.0
        %2531 = vmatpush1.xpose.msra.mxu0 0.0
        %2532 = vmatprep.subr.mxu0 0.0
        %2533 = vmatpush1.xpose.msra.mxu0 0.0
        %2534 = vmatprep.subr.mxu0 0.0
        %2535 = vmatpush1.xpose.msra.mxu0 0.0
        %2536 = vmatprep.subr.mxu0 0.0
        %2537 = vmatpush1.xpose.msra.mxu0 0.0
        %2538 = vmatprep.subr.mxu0 0.0
        %2539 = vmatpush1.xpose.msra.mxu0 0.0
        %2540 = vmatprep.subr.mxu0 0.0
        %2541 = vmatpush1.xpose.msra.mxu0 0.0
        %2542 = vmatprep.subr.mxu0 0.0
        %2543 = vmatpush1.xpose.msra.mxu0 0.0
        %2544 = vmatprep.subr.mxu0 0.0
        %2545 = vmatpush1.xpose.msra.mxu0 0.0
        %2546 = vmatprep.subr.mxu0 0.0
        %2547 = vmatpush1.xpose.msra.mxu0 0.0
        %2548 = vmatprep.subr.mxu0 0.0
        %2549 = vmatpush1.xpose.msra.mxu0 0.0
        %2550 = vmatprep.subr.mxu0 0.0
        %2551 = vmatpush1.xpose.msra.mxu0 0.0
        %2552 = vmatprep.subr.mxu0 0.0
        %2553 = vmatpush1.xpose.msra.mxu0 0.0
        %2554 = vmatprep.subr.mxu0 0.0
        %2555 = vmatpush1.xpose.msra.mxu0 0.0
        %2556 = vmatprep.subr.mxu0 0.0
        %2557 = vmatpush1.xpose.msra.mxu0 0.0
        %2558 = vmatprep.subr.mxu0 0.0
        %2559 = vmatpush1.xpose.msra.mxu0 0.0
        %2560 = vmatprep.subr.mxu0 0.0
        %2561 = vmatpush1.xpose.msra.mxu0 0.0
        %2562 = vmatprep.subr.mxu0 0.0
        %2563 = vmatpush1.xpose.msra.mxu0 0.0
        %2564 = vmatprep.subr.mxu0 0.0
        %2565 = vmatpush1.xpose.msra.mxu0 0.0
        %2566 = vmatprep.subr.mxu0 0.0
        %2567 = vmatpush1.xpose.msra.mxu0 0.0
        %2568 = vmatprep.subr.mxu0 0.0
        %2569 = vmatpush1.xpose.msra.mxu0 0.0
        %2570 = vmatprep.subr.mxu0 0.0
        %2571 = vmatpush1.xpose.msra.mxu0 0.0
        %2572 = vmatprep.subr.mxu0 0.0
        %2573 = vmatpush1.xpose.msra.mxu0 0.0
        %2574 = vmatprep.subr.mxu0 0.0
        %2575 = vmatpush1.xpose.msra.mxu0 0.0
        %2576 = vmatprep.subr.mxu0 0.0
        %2577 = vmatpush1.xpose.msra.mxu0 0.0
        %2578 = vmatprep.subr.mxu0 0.0
        %2579 = vmatpush1.xpose.msra.mxu0 0.0
        %2580 = vmatprep.subr.mxu0 0.0
        %2581 = vmatpush1.xpose.msra.mxu0 0.0
        %2582 = vmatprep.mubr.f32.mxu0 0.0
        %2583 = vmatmul.mubr.f32.gmra.mrb[0].mxu0 %v2510
        %v2584 = vpop.f32.mrb[0].mxu0
        %v2585 = vadd.f32 0.0, %v2584
        %v2586 = vpop.f32.mrb[0].mxu0
        %2587 = vmatprep.mubr.f32.mxu0 0.0
        %2588 = vmatmul.mubr.f32.gmra.mrb[0].mxu0 %v2512
        %v2589 = vpop.f32.mrb[0].mxu0
        %v2590 = vadd.f32 0.0, %v2589
        %v2591 = vpop.f32.mrb[0].mxu0
        %2592 = vdwg.mxu0
        %v2593 = vsel %vm643, %v2585, -inf
        %2594 = vmax.xlane.f32.xlu0 %v2593
        %v2595 = vpop.xlane.xlu0 %2594
        %v2596 = vsel %vm643, %v2590, -inf
        %2597 = vmax.xlane.f32.xlu0 %v2596
        %v2598 = vpop.xlane.xlu0 %2597
        %v2599 = vsub.f32 %v2585, %v2595
        %v2600 = vsub.f32 %v2590, %v2598
        %v2601 = vmul.f32 %v2599, 1.442695
        %v2602 = vpow.pop %v2601
        %v2603 = vmul.f32 %v2600, 1.442695
        %v2604 = vpow.pop %v2603
        %v2605 = vsel %vm643, %v2602, 0.0
        %2606 = vadd.xlane.f32.xlu0 %v2605
        %v2607 = vpop.xlane.xlu0 %2606
        %v2608 = vsel %vm643, %v2604, 0.0
        %2609 = vadd.xlane.f32.xlu0 %v2608
        %v2610 = vpop.xlane.xlu0 %2609
        %v2611 = vrcp.pop %v2607
        %v2612 = vrcp.pop %v2610
        %v2613 = vmul.f32 %v2602, %v2611
        %v2614 = vmul.f32 %v2604, %v2612
        %2617 = vrot.lane.b32.xlu0 %v635, 112
        %v2618 = vpop.permute.xlu0 %2617
        %2619 = vrot.lane.b32.xlu0 %v640, 112
        %v2620 = vpop.permute.xlu0 %2619
        %v2624 = vsel %vm643, %v2613, 0
        %v2627 = vsel %vm643, %v2614, 0
        %2629 = vmatprep.subr.mxu0 0.0
        %2630 = vmatpush1.msra.mxu0 %v2618
        %2631 = vmatprep.subr.mxu0 0.0
        %2632 = vmatpush1.msra.mxu0 %v2620
        %2633 = vmatprep.subr.mxu0 0.0
        %2634 = vmatpush1.msra.mxu0 0.0
        %2635 = vmatprep.subr.mxu0 0.0
        %2636 = vmatpush1.msra.mxu0 0.0
        %2637 = vmatprep.subr.mxu0 0.0
        %2638 = vmatpush1.msra.mxu0 0.0
        %2639 = vmatprep.subr.mxu0 0.0
        %2640 = vmatpush1.msra.mxu0 0.0
        %2641 = vmatprep.subr.mxu0 0.0
        %2642 = vmatpush1.msra.mxu0 0.0
        %2643 = vmatprep.subr.mxu0 0.0
        %2644 = vmatpush1.msra.mxu0 0.0
        %2645 = vmatprep.subr.mxu0 0.0
        %2646 = vmatpush1.msra.mxu0 0.0
        %2647 = vmatprep.subr.mxu0 0.0
        %2648 = vmatpush1.msra.mxu0 0.0
        %2649 = vmatprep.subr.mxu0 0.0
        %2650 = vmatpush1.msra.mxu0 0.0
        %2651 = vmatprep.subr.mxu0 0.0
        %2652 = vmatpush1.msra.mxu0 0.0
        %2653 = vmatprep.subr.mxu0 0.0
        %2654 = vmatpush1.msra.mxu0 0.0
        %2655 = vmatprep.subr.mxu0 0.0
        %2656 = vmatpush1.msra.mxu0 0.0
        %2657 = vmatprep.subr.mxu0 0.0
        %2658 = vmatpush1.msra.mxu0 0.0
        %2659 = vmatprep.subr.mxu0 0.0
        %2660 = vmatpush1.msra.mxu0 0.0
        %2661 = vmatprep.subr.mxu0 0.0
        %2662 = vmatpush1.msra.mxu0 0.0
        %2663 = vmatprep.subr.mxu0 0.0
        %2664 = vmatpush1.msra.mxu0 0.0
        %2665 = vmatprep.subr.mxu0 0.0
        %2666 = vmatpush1.msra.mxu0 0.0
        %2667 = vmatprep.subr.mxu0 0.0
        %2668 = vmatpush1.msra.mxu0 0.0
        %2669 = vmatprep.subr.mxu0 0.0
        %2670 = vmatpush1.msra.mxu0 0.0
        %2671 = vmatprep.subr.mxu0 0.0
        %2672 = vmatpush1.msra.mxu0 0.0
        %2673 = vmatprep.subr.mxu0 0.0
        %2674 = vmatpush1.msra.mxu0 0.0
        %2675 = vmatprep.subr.mxu0 0.0
        %2676 = vmatpush1.msra.mxu0 0.0
        %2677 = vmatprep.subr.mxu0 0.0
        %2678 = vmatpush1.msra.mxu0 0.0
        %2679 = vmatprep.subr.mxu0 0.0
        %2680 = vmatpush1.msra.mxu0 0.0
        %2681 = vmatprep.subr.mxu0 0.0
        %2682 = vmatpush1.msra.mxu0 0.0
        %2683 = vmatprep.subr.mxu0 0.0
        %2684 = vmatpush1.msra.mxu0 0.0
        %2685 = vmatprep.subr.mxu0 0.0
        %2686 = vmatpush1.msra.mxu0 0.0
        %2687 = vmatprep.subr.mxu0 0.0
        %2688 = vmatpush1.msra.mxu0 0.0
        %2689 = vmatprep.subr.mxu0 0.0
        %2690 = vmatpush1.msra.mxu0 0.0
        %2691 = vmatprep.subr.mxu0 0.0
        %2692 = vmatpush1.msra.mxu0 0.0
        %2693 = vmatprep.mubr.f32.mxu0 0.0
        %2694 = vmatmul.mubr.f32.gmra.mrb[0].mxu0 %v2624
        %v2695 = vpop.f32.mrb[0].mxu0
        %v2696 = vadd.f32 0.0, %v2695
        %v2697 = vpop.f32.mrb[0].mxu0
        %2698 = vmatprep.mubr.f32.mxu0 0.0
        %2699 = vmatmul.mubr.f32.gmra.mrb[0].mxu0 %v2627
        %v2700 = vpop.f32.mrb[0].mxu0
        %v2701 = vadd.f32 0.0, %v2700
        %v2702 = vpop.f32.mrb[0].mxu0
        %2703 = vdwg.mxu0
        %2704 = vrot.lane.b32.xlu0 %v548, 96
        %v2705 = vpop.permute.xlu0 %2704
        %2706 = vrot.lane.b32.xlu0 %v554, 96
        %v2707 = vpop.permute.xlu0 %2706
        %2708 = vrot.lane.b32.xlu0 %v550, 96
        %v2709 = vpop.permute.xlu0 %2708
        %2710 = vrot.lane.b32.xlu0 %v556, 96
        %v2711 = vpop.permute.xlu0 %2710
        %v2712 = vsel %vm643, %v2705, 0
        %v2714 = vsel %vm643, %v2707, 0
        %v2716 = vsel %vm643, %v2709, 0
        %v2718 = vsel %vm643, %v2711, 0
        %2720 = vmatprep.subr.mxu0 0.0
        %2721 = vmatpush1.xpose.msra.mxu0 %v2716
        %2722 = vmatprep.subr.mxu0 0.0
        %2723 = vmatpush1.xpose.msra.mxu0 %v2718
        %2724 = vmatprep.subr.mxu0 0.0
        %2725 = vmatpush1.xpose.msra.mxu0 0.0
        %2726 = vmatprep.subr.mxu0 0.0
        %2727 = vmatpush1.xpose.msra.mxu0 0.0
        %2728 = vmatprep.subr.mxu0 0.0
        %2729 = vmatpush1.xpose.msra.mxu0 0.0
        %2730 = vmatprep.subr.mxu0 0.0
        %2731 = vmatpush1.xpose.msra.mxu0 0.0
        %2732 = vmatprep.subr.mxu0 0.0
        %2733 = vmatpush1.xpose.msra.mxu0 0.0
        %2734 = vmatprep.subr.mxu0 0.0
        %2735 = vmatpush1.xpose.msra.mxu0 0.0
        %2736 = vmatprep.subr.mxu0 0.0
        %2737 = vmatpush1.xpose.msra.mxu0 0.0
        %2738 = vmatprep.subr.mxu0 0.0
        %2739 = vmatpush1.xpose.msra.mxu0 0.0
        %2740 = vmatprep.subr.mxu0 0.0
        %2741 = vmatpush1.xpose.msra.mxu0 0.0
        %2742 = vmatprep.subr.mxu0 0.0
        %2743 = vmatpush1.xpose.msra.mxu0 0.0
        %2744 = vmatprep.subr.mxu0 0.0
        %2745 = vmatpush1.xpose.msra.mxu0 0.0
        %2746 = vmatprep.subr.mxu0 0.0
        %2747 = vmatpush1.xpose.msra.mxu0 0.0
        %2748 = vmatprep.subr.mxu0 0.0
        %2749 = vmatpush1.xpose.msra.mxu0 0.0
        %2750 = vmatprep.subr.mxu0 0.0
        %2751 = vmatpush1.xpose.msra.mxu0 0.0
        %2752 = vmatprep.subr.mxu0 0.0
        %2753 = vmatpush1.xpose.msra.mxu0 0.0
        %2754 = vmatprep.subr.mxu0 0.0
        %2755 = vmatpush1.xpose.msra.mxu0 0.0
        %2756 = vmatprep.subr.mxu0 0.0
        %2757 = vmatpush1.xpose.msra.mxu0 0.0
        %2758 = vmatprep.subr.mxu0 0.0
        %2759 = vmatpush1.xpose.msra.mxu0 0.0
        %2760 = vmatprep.subr.mxu0 0.0
        %2761 = vmatpush1.xpose.msra.mxu0 0.0
        %2762 = vmatprep.subr.mxu0 0.0
        %2763 = vmatpush1.xpose.msra.mxu0 0.0
        %2764 = vmatprep.subr.mxu0 0.0
        %2765 = vmatpush1.xpose.msra.mxu0 0.0
        %2766 = vmatprep.subr.mxu0 0.0
        %2767 = vmatpush1.xpose.msra.mxu0 0.0
        %2768 = vmatprep.subr.mxu0 0.0
        %2769 = vmatpush1.xpose.msra.mxu0 0.0
        %2770 = vmatprep.subr.mxu0 0.0
        %2771 = vmatpush1.xpose.msra.mxu0 0.0
        %2772 = vmatprep.subr.mxu0 0.0
        %2773 = vmatpush1.xpose.msra.mxu0 0.0
        %2774 = vmatprep.subr.mxu0 0.0
        %2775 = vmatpush1.xpose.msra.mxu0 0.0
        %2776 = vmatprep.subr.mxu0 0.0
        %2777 = vmatpush1.xpose.msra.mxu0 0.0
        %2778 = vmatprep.subr.mxu0 0.0
        %2779 = vmatpush1.xpose.msra.mxu0 0.0
        %2780 = vmatprep.subr.mxu0 0.0
        %2781 = vmatpush1.xpose.msra.mxu0 0.0
        %2782 = vmatprep.subr.mxu0 0.0
        %2783 = vmatpush1.xpose.msra.mxu0 0.0
        %2784 = vmatprep.mubr.f32.mxu0 0.0
        %2785 = vmatmul.mubr.f32.gmra.mrb[0].mxu0 %v2712
        %v2786 = vpop.f32.mrb[0].mxu0
        %v2787 = vadd.f32 0.0, %v2786
        %v2788 = vpop.f32.mrb[0].mxu0
        %2789 = vmatprep.mubr.f32.mxu0 0.0
        %2790 = vmatmul.mubr.f32.gmra.mrb[0].mxu0 %v2714
        %v2791 = vpop.f32.mrb[0].mxu0
        %v2792 = vadd.f32 0.0, %v2791
        %v2793 = vpop.f32.mrb[0].mxu0
        %2794 = vdwg.mxu0
        %v2795 = vsel %vm643, %v2787, -inf
        %2796 = vmax.xlane.f32.xlu0 %v2795
        %v2797 = vpop.xlane.xlu0 %2796
        %v2798 = vsel %vm643, %v2792, -inf
        %2799 = vmax.xlane.f32.xlu0 %v2798
        %v2800 = vpop.xlane.xlu0 %2799
        %v2801 = vsub.f32 %v2787, %v2797
        %v2802 = vsub.f32 %v2792, %v2800
        %v2803 = vmul.f32 %v2801, 1.442695
        %v2804 = vpow.pop %v2803
        %v2805 = vmul.f32 %v2802, 1.442695
        %v2806 = vpow.pop %v2805
        %v2807 = vsel %vm643, %v2804, 0.0
        %2808 = vadd.xlane.f32.xlu0 %v2807
        %v2809 = vpop.xlane.xlu0 %2808
        %v2810 = vsel %vm643, %v2806, 0.0
        %2811 = vadd.xlane.f32.xlu0 %v2810
        %v2812 = vpop.xlane.xlu0 %2811
        %v2813 = vrcp.pop %v2809
        %v2814 = vrcp.pop %v2812
        %v2815 = vmul.f32 %v2804, %v2813
        %v2816 = vmul.f32 %v2806, %v2814
        %2817 = vrot.lane.b32.xlu0 %v635, 96
        %v2818 = vpop.permute.xlu0 %2817
        %2819 = vrot.lane.b32.xlu0 %v640, 96
        %v2820 = vpop.permute.xlu0 %2819
        %v2824 = vsel %vm643, %v2815, 0
        %v2827 = vsel %vm643, %v2816, 0
        %2829 = vmatprep.subr.mxu0 0.0
        %2830 = vmatpush1.msra.mxu0 %v2818
        %2831 = vmatprep.subr.mxu0 0.0
        %2832 = vmatpush1.msra.mxu0 %v2820
        %2833 = vmatprep.subr.mxu0 0.0
        %2834 = vmatpush1.msra.mxu0 0.0
        %2835 = vmatprep.subr.mxu0 0.0
        %2836 = vmatpush1.msra.mxu0 0.0
        %2837 = vmatprep.subr.mxu0 0.0
        %2838 = vmatpush1.msra.mxu0 0.0
        %2839 = vmatprep.subr.mxu0 0.0
        %2840 = vmatpush1.msra.mxu0 0.0
        %2841 = vmatprep.subr.mxu0 0.0
        %2842 = vmatpush1.msra.mxu0 0.0
        %2843 = vmatprep.subr.mxu0 0.0
        %2844 = vmatpush1.msra.mxu0 0.0
        %2845 = vmatprep.subr.mxu0 0.0
        %2846 = vmatpush1.msra.mxu0 0.0
        %2847 = vmatprep.subr.mxu0 0.0
        %2848 = vmatpush1.msra.mxu0 0.0
        %2849 = vmatprep.subr.mxu0 0.0
        %2850 = vmatpush1.msra.mxu0 0.0
        %2851 = vmatprep.subr.mxu0 0.0
        %2852 = vmatpush1.msra.mxu0 0.0
        %2853 = vmatprep.subr.mxu0 0.0
        %2854 = vmatpush1.msra.mxu0 0.0
        %2855 = vmatprep.subr.mxu0 0.0
        %2856 = vmatpush1.msra.mxu0 0.0
        %2857 = vmatprep.subr.mxu0 0.0
        %2858 = vmatpush1.msra.mxu0 0.0
        %2859 = vmatprep.subr.mxu0 0.0
        %2860 = vmatpush1.msra.mxu0 0.0
        %2861 = vmatprep.subr.mxu0 0.0
        %2862 = vmatpush1.msra.mxu0 0.0
        %2863 = vmatprep.subr.mxu0 0.0
        %2864 = vmatpush1.msra.mxu0 0.0
        %2865 = vmatprep.subr.mxu0 0.0
        %2866 = vmatpush1.msra.mxu0 0.0
        %2867 = vmatprep.subr.mxu0 0.0
        %2868 = vmatpush1.msra.mxu0 0.0
        %2869 = vmatprep.subr.mxu0 0.0
        %2870 = vmatpush1.msra.mxu0 0.0
        %2871 = vmatprep.subr.mxu0 0.0
        %2872 = vmatpush1.msra.mxu0 0.0
        %2873 = vmatprep.subr.mxu0 0.0
        %2874 = vmatpush1.msra.mxu0 0.0
        %2875 = vmatprep.subr.mxu0 0.0
        %2876 = vmatpush1.msra.mxu0 0.0
        %2877 = vmatprep.subr.mxu0 0.0
        %2878 = vmatpush1.msra.mxu0 0.0
        %2879 = vmatprep.subr.mxu0 0.0
        %2880 = vmatpush1.msra.mxu0 0.0
        %2881 = vmatprep.subr.mxu0 0.0
        %2882 = vmatpush1.msra.mxu0 0.0
        %2883 = vmatprep.subr.mxu0 0.0
        %2884 = vmatpush1.msra.mxu0 0.0
        %2885 = vmatprep.subr.mxu0 0.0
        %2886 = vmatpush1.msra.mxu0 0.0
        %2887 = vmatprep.subr.mxu0 0.0
        %2888 = vmatpush1.msra.mxu0 0.0
        %2889 = vmatprep.subr.mxu0 0.0
        %2890 = vmatpush1.msra.mxu0 0.0
        %2891 = vmatprep.subr.mxu0 0.0
        %2892 = vmatpush1.msra.mxu0 0.0
        %2893 = vmatprep.mubr.f32.mxu0 0.0
        %2894 = vmatmul.mubr.f32.gmra.mrb[0].mxu0 %v2824
        %v2895 = vpop.f32.mrb[0].mxu0
        %v2896 = vadd.f32 0.0, %v2895
        %v2897 = vpop.f32.mrb[0].mxu0
        %2898 = vmatprep.mubr.f32.mxu0 0.0
        %2899 = vmatmul.mubr.f32.gmra.mrb[0].mxu0 %v2827
        %v2900 = vpop.f32.mrb[0].mxu0
        %v2901 = vadd.f32 0.0, %v2900
        %v2902 = vpop.f32.mrb[0].mxu0
        %2903 = vdwg.mxu0
        %2904 = vrot.lane.b32.xlu0 %v548, 80
        %v2905 = vpop.permute.xlu0 %2904
        %2906 = vrot.lane.b32.xlu0 %v554, 80
        %v2907 = vpop.permute.xlu0 %2906
        %2908 = vrot.lane.b32.xlu0 %v550, 80
        %v2909 = vpop.permute.xlu0 %2908
        %2910 = vrot.lane.b32.xlu0 %v556, 80
        %v2911 = vpop.permute.xlu0 %2910
        %v2912 = vsel %vm643, %v2905, 0
        %v2914 = vsel %vm643, %v2907, 0
        %v2916 = vsel %vm643, %v2909, 0
        %v2918 = vsel %vm643, %v2911, 0
        %2920 = vmatprep.subr.mxu0 0.0
        %2921 = vmatpush1.xpose.msra.mxu0 %v2916
        %2922 = vmatprep.subr.mxu0 0.0
        %2923 = vmatpush1.xpose.msra.mxu0 %v2918
        %2924 = vmatprep.subr.mxu0 0.0
        %2925 = vmatpush1.xpose.msra.mxu0 0.0
        %2926 = vmatprep.subr.mxu0 0.0
        %2927 = vmatpush1.xpose.msra.mxu0 0.0
        %2928 = vmatprep.subr.mxu0 0.0
        %2929 = vmatpush1.xpose.msra.mxu0 0.0
        %2930 = vmatprep.subr.mxu0 0.0
        %2931 = vmatpush1.xpose.msra.mxu0 0.0
        %2932 = vmatprep.subr.mxu0 0.0
        %2933 = vmatpush1.xpose.msra.mxu0 0.0
        %2934 = vmatprep.subr.mxu0 0.0
        %2935 = vmatpush1.xpose.msra.mxu0 0.0
        %2936 = vmatprep.subr.mxu0 0.0
        %2937 = vmatpush1.xpose.msra.mxu0 0.0
        %2938 = vmatprep.subr.mxu0 0.0
        %2939 = vmatpush1.xpose.msra.mxu0 0.0
        %2940 = vmatprep.subr.mxu0 0.0
        %2941 = vmatpush1.xpose.msra.mxu0 0.0
        %2942 = vmatprep.subr.mxu0 0.0
        %2943 = vmatpush1.xpose.msra.mxu0 0.0
        %2944 = vmatprep.subr.mxu0 0.0
        %2945 = vmatpush1.xpose.msra.mxu0 0.0
        %2946 = vmatprep.subr.mxu0 0.0
        %2947 = vmatpush1.xpose.msra.mxu0 0.0
        %2948 = vmatprep.subr.mxu0 0.0
        %2949 = vmatpush1.xpose.msra.mxu0 0.0
        %2950 = vmatprep.subr.mxu0 0.0
        %2951 = vmatpush1.xpose.msra.mxu0 0.0
        %2952 = vmatprep.subr.mxu0 0.0
        %2953 = vmatpush1.xpose.msra.mxu0 0.0
        %2954 = vmatprep.subr.mxu0 0.0
        %2955 = vmatpush1.xpose.msra.mxu0 0.0
        %2956 = vmatprep.subr.mxu0 0.0
        %2957 = vmatpush1.xpose.msra.mxu0 0.0
        %2958 = vmatprep.subr.mxu0 0.0
        %2959 = vmatpush1.xpose.msra.mxu0 0.0
        %2960 = vmatprep.subr.mxu0 0.0
        %2961 = vmatpush1.xpose.msra.mxu0 0.0
        %2962 = vmatprep.subr.mxu0 0.0
        %2963 = vmatpush1.xpose.msra.mxu0 0.0
        %2964 = vmatprep.subr.mxu0 0.0
        %2965 = vmatpush1.xpose.msra.mxu0 0.0
        %2966 = vmatprep.subr.mxu0 0.0
        %2967 = vmatpush1.xpose.msra.mxu0 0.0
        %2968 = vmatprep.subr.mxu0 0.0
        %2969 = vmatpush1.xpose.msra.mxu0 0.0
        %2970 = vmatprep.subr.mxu0 0.0
        %2971 = vmatpush1.xpose.msra.mxu0 0.0
        %2972 = vmatprep.subr.mxu0 0.0
        %2973 = vmatpush1.xpose.msra.mxu0 0.0
        %2974 = vmatprep.subr.mxu0 0.0
        %2975 = vmatpush1.xpose.msra.mxu0 0.0
        %2976 = vmatprep.subr.mxu0 0.0
        %2977 = vmatpush1.xpose.msra.mxu0 0.0
        %2978 = vmatprep.subr.mxu0 0.0
        %2979 = vmatpush1.xpose.msra.mxu0 0.0
        %2980 = vmatprep.subr.mxu0 0.0
        %2981 = vmatpush1.xpose.msra.mxu0 0.0
        %2982 = vmatprep.subr.mxu0 0.0
        %2983 = vmatpush1.xpose.msra.mxu0 0.0
        %2984 = vmatprep.mubr.f32.mxu0 0.0
        %2985 = vmatmul.mubr.f32.gmra.mrb[0].mxu0 %v2912
        %v2986 = vpop.f32.mrb[0].mxu0
        %v2987 = vadd.f32 0.0, %v2986
        %v2988 = vpop.f32.mrb[0].mxu0
        %2989 = vmatprep.mubr.f32.mxu0 0.0
        %2990 = vmatmul.mubr.f32.gmra.mrb[0].mxu0 %v2914
        %v2991 = vpop.f32.mrb[0].mxu0
        %v2992 = vadd.f32 0.0, %v2991
        %v2993 = vpop.f32.mrb[0].mxu0
        %2994 = vdwg.mxu0
        %v2995 = vsel %vm643, %v2987, -inf
        %2996 = vmax.xlane.f32.xlu0 %v2995
        %v2997 = vpop.xlane.xlu0 %2996
        %v2998 = vsel %vm643, %v2992, -inf
        %2999 = vmax.xlane.f32.xlu0 %v2998
        %v3000 = vpop.xlane.xlu0 %2999
        %v3001 = vsub.f32 %v2987, %v2997
        %v3002 = vsub.f32 %v2992, %v3000
        %v3003 = vmul.f32 %v3001, 1.442695
        %v3004 = vpow.pop %v3003
        %v3005 = vmul.f32 %v3002, 1.442695
        %v3006 = vpow.pop %v3005
        %v3007 = vsel %vm643, %v3004, 0.0
        %3008 = vadd.xlane.f32.xlu0 %v3007
        %v3009 = vpop.xlane.xlu0 %3008
        %v3010 = vsel %vm643, %v3006, 0.0
        %3011 = vadd.xlane.f32.xlu0 %v3010
        %v3012 = vpop.xlane.xlu0 %3011
        %v3013 = vrcp.pop %v3009
        %v3014 = vrcp.pop %v3012
        %v3015 = vmul.f32 %v3004, %v3013
        %v3016 = vmul.f32 %v3006, %v3014
        %3017 = vrot.lane.b32.xlu0 %v635, 80
        %v3018 = vpop.permute.xlu0 %3017
        %3019 = vrot.lane.b32.xlu0 %v640, 80
        %v3020 = vpop.permute.xlu0 %3019
        %v3024 = vsel %vm643, %v3015, 0
        %v3027 = vsel %vm643, %v3016, 0
        %3029 = vmatprep.subr.mxu0 0.0
        %3030 = vmatpush1.msra.mxu0 %v3018
        %3031 = vmatprep.subr.mxu0 0.0
        %3032 = vmatpush1.msra.mxu0 %v3020
        %3033 = vmatprep.subr.mxu0 0.0
        %3034 = vmatpush1.msra.mxu0 0.0
        %3035 = vmatprep.subr.mxu0 0.0
        %3036 = vmatpush1.msra.mxu0 0.0
        %3037 = vmatprep.subr.mxu0 0.0
        %3038 = vmatpush1.msra.mxu0 0.0
        %3039 = vmatprep.subr.mxu0 0.0
        %3040 = vmatpush1.msra.mxu0 0.0
        %3041 = vmatprep.subr.mxu0 0.0
        %3042 = vmatpush1.msra.mxu0 0.0
        %3043 = vmatprep.subr.mxu0 0.0
        %3044 = vmatpush1.msra.mxu0 0.0
        %3045 = vmatprep.subr.mxu0 0.0
        %3046 = vmatpush1.msra.mxu0 0.0
        %3047 = vmatprep.subr.mxu0 0.0
        %3048 = vmatpush1.msra.mxu0 0.0
        %3049 = vmatprep.subr.mxu0 0.0
        %3050 = vmatpush1.msra.mxu0 0.0
        %3051 = vmatprep.subr.mxu0 0.0
        %3052 = vmatpush1.msra.mxu0 0.0
        %3053 = vmatprep.subr.mxu0 0.0
        %3054 = vmatpush1.msra.mxu0 0.0
        %3055 = vmatprep.subr.mxu0 0.0
        %3056 = vmatpush1.msra.mxu0 0.0
        %3057 = vmatprep.subr.mxu0 0.0
        %3058 = vmatpush1.msra.mxu0 0.0
        %3059 = vmatprep.subr.mxu0 0.0
        %3060 = vmatpush1.msra.mxu0 0.0
        %3061 = vmatprep.subr.mxu0 0.0
        %3062 = vmatpush1.msra.mxu0 0.0
        %3063 = vmatprep.subr.mxu0 0.0
        %3064 = vmatpush1.msra.mxu0 0.0
        %3065 = vmatprep.subr.mxu0 0.0
        %3066 = vmatpush1.msra.mxu0 0.0
        %3067 = vmatprep.subr.mxu0 0.0
        %3068 = vmatpush1.msra.mxu0 0.0
        %3069 = vmatprep.subr.mxu0 0.0
        %3070 = vmatpush1.msra.mxu0 0.0
        %3071 = vmatprep.subr.mxu0 0.0
        %3072 = vmatpush1.msra.mxu0 0.0
        %3073 = vmatprep.subr.mxu0 0.0
        %3074 = vmatpush1.msra.mxu0 0.0
        %3075 = vmatprep.subr.mxu0 0.0
        %3076 = vmatpush1.msra.mxu0 0.0
        %3077 = vmatprep.subr.mxu0 0.0
        %3078 = vmatpush1.msra.mxu0 0.0
        %3079 = vmatprep.subr.mxu0 0.0
        %3080 = vmatpush1.msra.mxu0 0.0
        %3081 = vmatprep.subr.mxu0 0.0
        %3082 = vmatpush1.msra.mxu0 0.0
        %3083 = vmatprep.subr.mxu0 0.0
        %3084 = vmatpush1.msra.mxu0 0.0
        %3085 = vmatprep.subr.mxu0 0.0
        %3086 = vmatpush1.msra.mxu0 0.0
        %3087 = vmatprep.subr.mxu0 0.0
        %3088 = vmatpush1.msra.mxu0 0.0
        %3089 = vmatprep.subr.mxu0 0.0
        %3090 = vmatpush1.msra.mxu0 0.0
        %3091 = vmatprep.subr.mxu0 0.0
        %3092 = vmatpush1.msra.mxu0 0.0
        %3093 = vmatprep.mubr.f32.mxu0 0.0
        %3094 = vmatmul.mubr.f32.gmra.mrb[0].mxu0 %v3024
        %v3095 = vpop.f32.mrb[0].mxu0
        %v3096 = vadd.f32 0.0, %v3095
        %v3097 = vpop.f32.mrb[0].mxu0
        %3098 = vmatprep.mubr.f32.mxu0 0.0
        %3099 = vmatmul.mubr.f32.gmra.mrb[0].mxu0 %v3027
        %v3100 = vpop.f32.mrb[0].mxu0
        %v3101 = vadd.f32 0.0, %v3100
        %v3102 = vpop.f32.mrb[0].mxu0
        %3103 = vdwg.mxu0
        %3104 = vrot.lane.b32.xlu0 %v548, 64
        %v3105 = vpop.permute.xlu0 %3104
        %3106 = vrot.lane.b32.xlu0 %v554, 64
        %v3107 = vpop.permute.xlu0 %3106
        %3108 = vrot.lane.b32.xlu0 %v550, 64
        %v3109 = vpop.permute.xlu0 %3108
        %3110 = vrot.lane.b32.xlu0 %v556, 64
        %v3111 = vpop.permute.xlu0 %3110
        %v3112 = vsel %vm643, %v3105, 0
        %v3114 = vsel %vm643, %v3107, 0
        %v3116 = vsel %vm643, %v3109, 0
        %v3118 = vsel %vm643, %v3111, 0
        %3120 = vmatprep.subr.mxu0 0.0
        %3121 = vmatpush1.xpose.msra.mxu0 %v3116
        %3122 = vmatprep.subr.mxu0 0.0
        %3123 = vmatpush1.xpose.msra.mxu0 %v3118
        %3124 = vmatprep.subr.mxu0 0.0
        %3125 = vmatpush1.xpose.msra.mxu0 0.0
        %3126 = vmatprep.subr.mxu0 0.0
        %3127 = vmatpush1.xpose.msra.mxu0 0.0
        %3128 = vmatprep.subr.mxu0 0.0
        %3129 = vmatpush1.xpose.msra.mxu0 0.0
        %3130 = vmatprep.subr.mxu0 0.0
        %3131 = vmatpush1.xpose.msra.mxu0 0.0
        %3132 = vmatprep.subr.mxu0 0.0
        %3133 = vmatpush1.xpose.msra.mxu0 0.0
        %3134 = vmatprep.subr.mxu0 0.0
        %3135 = vmatpush1.xpose.msra.mxu0 0.0
        %3136 = vmatprep.subr.mxu0 0.0
        %3137 = vmatpush1.xpose.msra.mxu0 0.0
        %3138 = vmatprep.subr.mxu0 0.0
        %3139 = vmatpush1.xpose.msra.mxu0 0.0
        %3140 = vmatprep.subr.mxu0 0.0
        %3141 = vmatpush1.xpose.msra.mxu0 0.0
        %3142 = vmatprep.subr.mxu0 0.0
        %3143 = vmatpush1.xpose.msra.mxu0 0.0
        %3144 = vmatprep.subr.mxu0 0.0
        %3145 = vmatpush1.xpose.msra.mxu0 0.0
        %3146 = vmatprep.subr.mxu0 0.0
        %3147 = vmatpush1.xpose.msra.mxu0 0.0
        %3148 = vmatprep.subr.mxu0 0.0
        %3149 = vmatpush1.xpose.msra.mxu0 0.0
        %3150 = vmatprep.subr.mxu0 0.0
        %3151 = vmatpush1.xpose.msra.mxu0 0.0
        %3152 = vmatprep.subr.mxu0 0.0
        %3153 = vmatpush1.xpose.msra.mxu0 0.0
        %3154 = vmatprep.subr.mxu0 0.0
        %3155 = vmatpush1.xpose.msra.mxu0 0.0
        %3156 = vmatprep.subr.mxu0 0.0
        %3157 = vmatpush1.xpose.msra.mxu0 0.0
        %3158 = vmatprep.subr.mxu0 0.0
        %3159 = vmatpush1.xpose.msra.mxu0 0.0
        %3160 = vmatprep.subr.mxu0 0.0
        %3161 = vmatpush1.xpose.msra.mxu0 0.0
        %3162 = vmatprep.subr.mxu0 0.0
        %3163 = vmatpush1.xpose.msra.mxu0 0.0
        %3164 = vmatprep.subr.mxu0 0.0
        %3165 = vmatpush1.xpose.msra.mxu0 0.0
        %3166 = vmatprep.subr.mxu0 0.0
        %3167 = vmatpush1.xpose.msra.mxu0 0.0
        %3168 = vmatprep.subr.mxu0 0.0
        %3169 = vmatpush1.xpose.msra.mxu0 0.0
        %3170 = vmatprep.subr.mxu0 0.0
        %3171 = vmatpush1.xpose.msra.mxu0 0.0
        %3172 = vmatprep.subr.mxu0 0.0
        %3173 = vmatpush1.xpose.msra.mxu0 0.0
        %3174 = vmatprep.subr.mxu0 0.0
        %3175 = vmatpush1.xpose.msra.mxu0 0.0
        %3176 = vmatprep.subr.mxu0 0.0
        %3177 = vmatpush1.xpose.msra.mxu0 0.0
        %3178 = vmatprep.subr.mxu0 0.0
        %3179 = vmatpush1.xpose.msra.mxu0 0.0
        %3180 = vmatprep.subr.mxu0 0.0
        %3181 = vmatpush1.xpose.msra.mxu0 0.0
        %3182 = vmatprep.subr.mxu0 0.0
        %3183 = vmatpush1.xpose.msra.mxu0 0.0
        %3184 = vmatprep.mubr.f32.mxu0 0.0
        %3185 = vmatmul.mubr.f32.gmra.mrb[0].mxu0 %v3112
        %v3186 = vpop.f32.mrb[0].mxu0
        %v3187 = vadd.f32 0.0, %v3186
        %v3188 = vpop.f32.mrb[0].mxu0
        %3189 = vmatprep.mubr.f32.mxu0 0.0
        %3190 = vmatmul.mubr.f32.gmra.mrb[0].mxu0 %v3114
        %v3191 = vpop.f32.mrb[0].mxu0
        %v3192 = vadd.f32 0.0, %v3191
        %v3193 = vpop.f32.mrb[0].mxu0
        %3194 = vdwg.mxu0
        %v3195 = vsel %vm643, %v3187, -inf
        %3196 = vmax.xlane.f32.xlu0 %v3195
        %v3197 = vpop.xlane.xlu0 %3196
        %v3198 = vsel %vm643, %v3192, -inf
        %3199 = vmax.xlane.f32.xlu0 %v3198
        %v3200 = vpop.xlane.xlu0 %3199
        %v3201 = vsub.f32 %v3187, %v3197
        %v3202 = vsub.f32 %v3192, %v3200
        %v3203 = vmul.f32 %v3201, 1.442695
        %v3204 = vpow.pop %v3203
        %v3205 = vmul.f32 %v3202, 1.442695
        %v3206 = vpow.pop %v3205
        %v3207 = vsel %vm643, %v3204, 0.0
        %3208 = vadd.xlane.f32.xlu0 %v3207
        %v3209 = vpop.xlane.xlu0 %3208
        %v3210 = vsel %vm643, %v3206, 0.0
        %3211 = vadd.xlane.f32.xlu0 %v3210
        %v3212 = vpop.xlane.xlu0 %3211
        %v3213 = vrcp.pop %v3209
        %v3214 = vrcp.pop %v3212
        %v3215 = vmul.f32 %v3204, %v3213
        %v3216 = vmul.f32 %v3206, %v3214
        %3217 = vrot.lane.b32.xlu0 %v635, 64
        %v3218 = vpop.permute.xlu0 %3217
        %3219 = vrot.lane.b32.xlu0 %v640, 64
        %v3220 = vpop.permute.xlu0 %3219
        %v3224 = vsel %vm643, %v3215, 0
        %v3227 = vsel %vm643, %v3216, 0
        %3229 = vmatprep.subr.mxu0 0.0
        %3230 = vmatpush1.msra.mxu0 %v3218
        %3231 = vmatprep.subr.mxu0 0.0
        %3232 = vmatpush1.msra.mxu0 %v3220
        %3233 = vmatprep.subr.mxu0 0.0
        %3234 = vmatpush1.msra.mxu0 0.0
        %3235 = vmatprep.subr.mxu0 0.0
        %3236 = vmatpush1.msra.mxu0 0.0
        %3237 = vmatprep.subr.mxu0 0.0
        %3238 = vmatpush1.msra.mxu0 0.0
        %3239 = vmatprep.subr.mxu0 0.0
        %3240 = vmatpush1.msra.mxu0 0.0
        %3241 = vmatprep.subr.mxu0 0.0
        %3242 = vmatpush1.msra.mxu0 0.0
        %3243 = vmatprep.subr.mxu0 0.0
        %3244 = vmatpush1.msra.mxu0 0.0
        %3245 = vmatprep.subr.mxu0 0.0
        %3246 = vmatpush1.msra.mxu0 0.0
        %3247 = vmatprep.subr.mxu0 0.0
        %3248 = vmatpush1.msra.mxu0 0.0
        %3249 = vmatprep.subr.mxu0 0.0
        %3250 = vmatpush1.msra.mxu0 0.0
        %3251 = vmatprep.subr.mxu0 0.0
        %3252 = vmatpush1.msra.mxu0 0.0
        %3253 = vmatprep.subr.mxu0 0.0
        %3254 = vmatpush1.msra.mxu0 0.0
        %3255 = vmatprep.subr.mxu0 0.0
        %3256 = vmatpush1.msra.mxu0 0.0
        %3257 = vmatprep.subr.mxu0 0.0
        %3258 = vmatpush1.msra.mxu0 0.0
        %3259 = vmatprep.subr.mxu0 0.0
        %3260 = vmatpush1.msra.mxu0 0.0
        %3261 = vmatprep.subr.mxu0 0.0
        %3262 = vmatpush1.msra.mxu0 0.0
        %3263 = vmatprep.subr.mxu0 0.0
        %3264 = vmatpush1.msra.mxu0 0.0
        %3265 = vmatprep.subr.mxu0 0.0
        %3266 = vmatpush1.msra.mxu0 0.0
        %3267 = vmatprep.subr.mxu0 0.0
        %3268 = vmatpush1.msra.mxu0 0.0
        %3269 = vmatprep.subr.mxu0 0.0
        %3270 = vmatpush1.msra.mxu0 0.0
        %3271 = vmatprep.subr.mxu0 0.0
        %3272 = vmatpush1.msra.mxu0 0.0
        %3273 = vmatprep.subr.mxu0 0.0
        %3274 = vmatpush1.msra.mxu0 0.0
        %3275 = vmatprep.subr.mxu0 0.0
        %3276 = vmatpush1.msra.mxu0 0.0
        %3277 = vmatprep.subr.mxu0 0.0
        %3278 = vmatpush1.msra.mxu0 0.0
        %3279 = vmatprep.subr.mxu0 0.0
        %3280 = vmatpush1.msra.mxu0 0.0
        %3281 = vmatprep.subr.mxu0 0.0
        %3282 = vmatpush1.msra.mxu0 0.0
        %3283 = vmatprep.subr.mxu0 0.0
        %3284 = vmatpush1.msra.mxu0 0.0
        %3285 = vmatprep.subr.mxu0 0.0
        %3286 = vmatpush1.msra.mxu0 0.0
        %3287 = vmatprep.subr.mxu0 0.0
        %3288 = vmatpush1.msra.mxu0 0.0
        %3289 = vmatprep.subr.mxu0 0.0
        %3290 = vmatpush1.msra.mxu0 0.0
        %3291 = vmatprep.subr.mxu0 0.0
        %3292 = vmatpush1.msra.mxu0 0.0
        %3293 = vmatprep.mubr.f32.mxu0 0.0
        %3294 = vmatmul.mubr.f32.gmra.mrb[0].mxu0 %v3224
        %v3295 = vpop.f32.mrb[0].mxu0
        %v3296 = vadd.f32 0.0, %v3295
        %v3297 = vpop.f32.mrb[0].mxu0
        %3298 = vmatprep.mubr.f32.mxu0 0.0
        %3299 = vmatmul.mubr.f32.gmra.mrb[0].mxu0 %v3227
        %v3300 = vpop.f32.mrb[0].mxu0
        %v3301 = vadd.f32 0.0, %v3300
        %v3302 = vpop.f32.mrb[0].mxu0
        %3303 = vdwg.mxu0
        %3304 = vrot.lane.b32.xlu0 %v548, 48
        %v3305 = vpop.permute.xlu0 %3304
        %3306 = vrot.lane.b32.xlu0 %v554, 48
        %v3307 = vpop.permute.xlu0 %3306
        %3308 = vrot.lane.b32.xlu0 %v550, 48
        %v3309 = vpop.permute.xlu0 %3308
        %3310 = vrot.lane.b32.xlu0 %v556, 48
        %v3311 = vpop.permute.xlu0 %3310
        %v3312 = vsel %vm643, %v3305, 0
        %v3314 = vsel %vm643, %v3307, 0
        %v3316 = vsel %vm643, %v3309, 0
        %v3318 = vsel %vm643, %v3311, 0
        %3320 = vmatprep.subr.mxu0 0.0
        %3321 = vmatpush1.xpose.msra.mxu0 %v3316
        %3322 = vmatprep.subr.mxu0 0.0
        %3323 = vmatpush1.xpose.msra.mxu0 %v3318
        %3324 = vmatprep.subr.mxu0 0.0
        %3325 = vmatpush1.xpose.msra.mxu0 0.0
        %3326 = vmatprep.subr.mxu0 0.0
        %3327 = vmatpush1.xpose.msra.mxu0 0.0
        %3328 = vmatprep.subr.mxu0 0.0
        %3329 = vmatpush1.xpose.msra.mxu0 0.0
        %3330 = vmatprep.subr.mxu0 0.0
        %3331 = vmatpush1.xpose.msra.mxu0 0.0
        %3332 = vmatprep.subr.mxu0 0.0
        %3333 = vmatpush1.xpose.msra.mxu0 0.0
        %3334 = vmatprep.subr.mxu0 0.0
        %3335 = vmatpush1.xpose.msra.mxu0 0.0
        %3336 = vmatprep.subr.mxu0 0.0
        %3337 = vmatpush1.xpose.msra.mxu0 0.0
        %3338 = vmatprep.subr.mxu0 0.0
        %3339 = vmatpush1.xpose.msra.mxu0 0.0
        %3340 = vmatprep.subr.mxu0 0.0
        %3341 = vmatpush1.xpose.msra.mxu0 0.0
        %3342 = vmatprep.subr.mxu0 0.0
        %3343 = vmatpush1.xpose.msra.mxu0 0.0
        %3344 = vmatprep.subr.mxu0 0.0
        %3345 = vmatpush1.xpose.msra.mxu0 0.0
        %3346 = vmatprep.subr.mxu0 0.0
        %3347 = vmatpush1.xpose.msra.mxu0 0.0
        %3348 = vmatprep.subr.mxu0 0.0
        %3349 = vmatpush1.xpose.msra.mxu0 0.0
        %3350 = vmatprep.subr.mxu0 0.0
        %3351 = vmatpush1.xpose.msra.mxu0 0.0
        %3352 = vmatprep.subr.mxu0 0.0
        %3353 = vmatpush1.xpose.msra.mxu0 0.0
        %3354 = vmatprep.subr.mxu0 0.0
        %3355 = vmatpush1.xpose.msra.mxu0 0.0
        %3356 = vmatprep.subr.mxu0 0.0
        %3357 = vmatpush1.xpose.msra.mxu0 0.0
        %3358 = vmatprep.subr.mxu0 0.0
        %3359 = vmatpush1.xpose.msra.mxu0 0.0
        %3360 = vmatprep.subr.mxu0 0.0
        %3361 = vmatpush1.xpose.msra.mxu0 0.0
        %3362 = vmatprep.subr.mxu0 0.0
        %3363 = vmatpush1.xpose.msra.mxu0 0.0
        %3364 = vmatprep.subr.mxu0 0.0
        %3365 = vmatpush1.xpose.msra.mxu0 0.0
        %3366 = vmatprep.subr.mxu0 0.0
        %3367 = vmatpush1.xpose.msra.mxu0 0.0
        %3368 = vmatprep.subr.mxu0 0.0
        %3369 = vmatpush1.xpose.msra.mxu0 0.0
        %3370 = vmatprep.subr.mxu0 0.0
        %3371 = vmatpush1.xpose.msra.mxu0 0.0
        %3372 = vmatprep.subr.mxu0 0.0
        %3373 = vmatpush1.xpose.msra.mxu0 0.0
        %3374 = vmatprep.subr.mxu0 0.0
        %3375 = vmatpush1.xpose.msra.mxu0 0.0
        %3376 = vmatprep.subr.mxu0 0.0
        %3377 = vmatpush1.xpose.msra.mxu0 0.0
        %3378 = vmatprep.subr.mxu0 0.0
        %3379 = vmatpush1.xpose.msra.mxu0 0.0
        %3380 = vmatprep.subr.mxu0 0.0
        %3381 = vmatpush1.xpose.msra.mxu0 0.0
        %3382 = vmatprep.subr.mxu0 0.0
        %3383 = vmatpush1.xpose.msra.mxu0 0.0
        %3384 = vmatprep.mubr.f32.mxu0 0.0
        %3385 = vmatmul.mubr.f32.gmra.mrb[0].mxu0 %v3312
        %v3386 = vpop.f32.mrb[0].mxu0
        %v3387 = vadd.f32 0.0, %v3386
        %v3388 = vpop.f32.mrb[0].mxu0
        %3389 = vmatprep.mubr.f32.mxu0 0.0
        %3390 = vmatmul.mubr.f32.gmra.mrb[0].mxu0 %v3314
        %v3391 = vpop.f32.mrb[0].mxu0
        %v3392 = vadd.f32 0.0, %v3391
        %v3393 = vpop.f32.mrb[0].mxu0
        %3394 = vdwg.mxu0
        %v3395 = vsel %vm643, %v3387, -inf
        %3396 = vmax.xlane.f32.xlu0 %v3395
        %v3397 = vpop.xlane.xlu0 %3396
        %v3398 = vsel %vm643, %v3392, -inf
        %3399 = vmax.xlane.f32.xlu0 %v3398
        %v3400 = vpop.xlane.xlu0 %3399
        %v3401 = vsub.f32 %v3387, %v3397
        %v3402 = vsub.f32 %v3392, %v3400
        %v3403 = vmul.f32 %v3401, 1.442695
        %v3404 = vpow.pop %v3403
        %v3405 = vmul.f32 %v3402, 1.442695
        %v3406 = vpow.pop %v3405
        %v3407 = vsel %vm643, %v3404, 0.0
        %3408 = vadd.xlane.f32.xlu0 %v3407
        %v3409 = vpop.xlane.xlu0 %3408
        %v3410 = vsel %vm643, %v3406, 0.0
        %3411 = vadd.xlane.f32.xlu0 %v3410
        %v3412 = vpop.xlane.xlu0 %3411
        %v3413 = vrcp.pop %v3409
        %v3414 = vrcp.pop %v3412
        %v3415 = vmul.f32 %v3404, %v3413
        %v3416 = vmul.f32 %v3406, %v3414
        %3417 = vrot.lane.b32.xlu0 %v635, 48
        %v3418 = vpop.permute.xlu0 %3417
        %3419 = vrot.lane.b32.xlu0 %v640, 48
        %v3420 = vpop.permute.xlu0 %3419
        %v3424 = vsel %vm643, %v3415, 0
        %v3427 = vsel %vm643, %v3416, 0
        %3429 = vmatprep.subr.mxu0 0.0
        %3430 = vmatpush1.msra.mxu0 %v3418
        %3431 = vmatprep.subr.mxu0 0.0
        %3432 = vmatpush1.msra.mxu0 %v3420
        %3433 = vmatprep.subr.mxu0 0.0
        %3434 = vmatpush1.msra.mxu0 0.0
        %3435 = vmatprep.subr.mxu0 0.0
        %3436 = vmatpush1.msra.mxu0 0.0
        %3437 = vmatprep.subr.mxu0 0.0
        %3438 = vmatpush1.msra.mxu0 0.0
        %3439 = vmatprep.subr.mxu0 0.0
        %3440 = vmatpush1.msra.mxu0 0.0
        %3441 = vmatprep.subr.mxu0 0.0
        %3442 = vmatpush1.msra.mxu0 0.0
        %3443 = vmatprep.subr.mxu0 0.0
        %3444 = vmatpush1.msra.mxu0 0.0
        %3445 = vmatprep.subr.mxu0 0.0
        %3446 = vmatpush1.msra.mxu0 0.0
        %3447 = vmatprep.subr.mxu0 0.0
        %3448 = vmatpush1.msra.mxu0 0.0
        %3449 = vmatprep.subr.mxu0 0.0
        %3450 = vmatpush1.msra.mxu0 0.0
        %3451 = vmatprep.subr.mxu0 0.0
        %3452 = vmatpush1.msra.mxu0 0.0
        %3453 = vmatprep.subr.mxu0 0.0
        %3454 = vmatpush1.msra.mxu0 0.0
        %3455 = vmatprep.subr.mxu0 0.0
        %3456 = vmatpush1.msra.mxu0 0.0
        %3457 = vmatprep.subr.mxu0 0.0
        %3458 = vmatpush1.msra.mxu0 0.0
        %3459 = vmatprep.subr.mxu0 0.0
        %3460 = vmatpush1.msra.mxu0 0.0
        %3461 = vmatprep.subr.mxu0 0.0
        %3462 = vmatpush1.msra.mxu0 0.0
        %3463 = vmatprep.subr.mxu0 0.0
        %3464 = vmatpush1.msra.mxu0 0.0
        %3465 = vmatprep.subr.mxu0 0.0
        %3466 = vmatpush1.msra.mxu0 0.0
        %3467 = vmatprep.subr.mxu0 0.0
        %3468 = vmatpush1.msra.mxu0 0.0
        %3469 = vmatprep.subr.mxu0 0.0
        %3470 = vmatpush1.msra.mxu0 0.0
        %3471 = vmatprep.subr.mxu0 0.0
        %3472 = vmatpush1.msra.mxu0 0.0
        %3473 = vmatprep.subr.mxu0 0.0
        %3474 = vmatpush1.msra.mxu0 0.0
        %3475 = vmatprep.subr.mxu0 0.0
        %3476 = vmatpush1.msra.mxu0 0.0
        %3477 = vmatprep.subr.mxu0 0.0
        %3478 = vmatpush1.msra.mxu0 0.0
        %3479 = vmatprep.subr.mxu0 0.0
        %3480 = vmatpush1.msra.mxu0 0.0
        %3481 = vmatprep.subr.mxu0 0.0
        %3482 = vmatpush1.msra.mxu0 0.0
        %3483 = vmatprep.subr.mxu0 0.0
        %3484 = vmatpush1.msra.mxu0 0.0
        %3485 = vmatprep.subr.mxu0 0.0
        %3486 = vmatpush1.msra.mxu0 0.0
        %3487 = vmatprep.subr.mxu0 0.0
        %3488 = vmatpush1.msra.mxu0 0.0
        %3489 = vmatprep.subr.mxu0 0.0
        %3490 = vmatpush1.msra.mxu0 0.0
        %3491 = vmatprep.subr.mxu0 0.0
        %3492 = vmatpush1.msra.mxu0 0.0
        %3493 = vmatprep.mubr.f32.mxu0 0.0
        %3494 = vmatmul.mubr.f32.gmra.mrb[0].mxu0 %v3424
        %v3495 = vpop.f32.mrb[0].mxu0
        %v3496 = vadd.f32 0.0, %v3495
        %v3497 = vpop.f32.mrb[0].mxu0
        %3498 = vmatprep.mubr.f32.mxu0 0.0
        %3499 = vmatmul.mubr.f32.gmra.mrb[0].mxu0 %v3427
        %v3500 = vpop.f32.mrb[0].mxu0
        %v3501 = vadd.f32 0.0, %v3500
        %v3502 = vpop.f32.mrb[0].mxu0
        %3503 = vdwg.mxu0
        %3504 = vrot.lane.b32.xlu0 %v548, 32
        %v3505 = vpop.permute.xlu0 %3504
        %3506 = vrot.lane.b32.xlu0 %v554, 32
        %v3507 = vpop.permute.xlu0 %3506
        %3508 = vrot.lane.b32.xlu0 %v550, 32
        %v3509 = vpop.permute.xlu0 %3508
        %3510 = vrot.lane.b32.xlu0 %v556, 32
        %v3511 = vpop.permute.xlu0 %3510
        %v3512 = vsel %vm643, %v3505, 0
        %v3514 = vsel %vm643, %v3507, 0
        %v3516 = vsel %vm643, %v3509, 0
        %v3518 = vsel %vm643, %v3511, 0
        %3520 = vmatprep.subr.mxu0 0.0
        %3521 = vmatpush1.xpose.msra.mxu0 %v3516
        %3522 = vmatprep.subr.mxu0 0.0
        %3523 = vmatpush1.xpose.msra.mxu0 %v3518
        %3524 = vmatprep.subr.mxu0 0.0
        %3525 = vmatpush1.xpose.msra.mxu0 0.0
        %3526 = vmatprep.subr.mxu0 0.0
        %3527 = vmatpush1.xpose.msra.mxu0 0.0
        %3528 = vmatprep.subr.mxu0 0.0
        %3529 = vmatpush1.xpose.msra.mxu0 0.0
        %3530 = vmatprep.subr.mxu0 0.0
        %3531 = vmatpush1.xpose.msra.mxu0 0.0
        %3532 = vmatprep.subr.mxu0 0.0
        %3533 = vmatpush1.xpose.msra.mxu0 0.0
        %3534 = vmatprep.subr.mxu0 0.0
        %3535 = vmatpush1.xpose.msra.mxu0 0.0
        %3536 = vmatprep.subr.mxu0 0.0
        %3537 = vmatpush1.xpose.msra.mxu0 0.0
        %3538 = vmatprep.subr.mxu0 0.0
        %3539 = vmatpush1.xpose.msra.mxu0 0.0
        %3540 = vmatprep.subr.mxu0 0.0
        %3541 = vmatpush1.xpose.msra.mxu0 0.0
        %3542 = vmatprep.subr.mxu0 0.0
        %3543 = vmatpush1.xpose.msra.mxu0 0.0
        %3544 = vmatprep.subr.mxu0 0.0
        %3545 = vmatpush1.xpose.msra.mxu0 0.0
        %3546 = vmatprep.subr.mxu0 0.0
        %3547 = vmatpush1.xpose.msra.mxu0 0.0
        %3548 = vmatprep.subr.mxu0 0.0
        %3549 = vmatpush1.xpose.msra.mxu0 0.0
        %3550 = vmatprep.subr.mxu0 0.0
        %3551 = vmatpush1.xpose.msra.mxu0 0.0
        %3552 = vmatprep.subr.mxu0 0.0
        %3553 = vmatpush1.xpose.msra.mxu0 0.0
        %3554 = vmatprep.subr.mxu0 0.0
        %3555 = vmatpush1.xpose.msra.mxu0 0.0
        %3556 = vmatprep.subr.mxu0 0.0
        %3557 = vmatpush1.xpose.msra.mxu0 0.0
        %3558 = vmatprep.subr.mxu0 0.0
        %3559 = vmatpush1.xpose.msra.mxu0 0.0
        %3560 = vmatprep.subr.mxu0 0.0
        %3561 = vmatpush1.xpose.msra.mxu0 0.0
        %3562 = vmatprep.subr.mxu0 0.0
        %3563 = vmatpush1.xpose.msra.mxu0 0.0
        %3564 = vmatprep.subr.mxu0 0.0
        %3565 = vmatpush1.xpose.msra.mxu0 0.0
        %3566 = vmatprep.subr.mxu0 0.0
        %3567 = vmatpush1.xpose.msra.mxu0 0.0
        %3568 = vmatprep.subr.mxu0 0.0
        %3569 = vmatpush1.xpose.msra.mxu0 0.0
        %3570 = vmatprep.subr.mxu0 0.0
        %3571 = vmatpush1.xpose.msra.mxu0 0.0
        %3572 = vmatprep.subr.mxu0 0.0
        %3573 = vmatpush1.xpose.msra.mxu0 0.0
        %3574 = vmatprep.subr.mxu0 0.0
        %3575 = vmatpush1.xpose.msra.mxu0 0.0
        %3576 = vmatprep.subr.mxu0 0.0
        %3577 = vmatpush1.xpose.msra.mxu0 0.0
        %3578 = vmatprep.subr.mxu0 0.0
        %3579 = vmatpush1.xpose.msra.mxu0 0.0
        %3580 = vmatprep.subr.mxu0 0.0
        %3581 = vmatpush1.xpose.msra.mxu0 0.0
        %3582 = vmatprep.subr.mxu0 0.0
        %3583 = vmatpush1.xpose.msra.mxu0 0.0
        %3584 = vmatprep.mubr.f32.mxu0 0.0
        %3585 = vmatmul.mubr.f32.gmra.mrb[0].mxu0 %v3512
        %v3586 = vpop.f32.mrb[0].mxu0
        %v3587 = vadd.f32 0.0, %v3586
        %v3588 = vpop.f32.mrb[0].mxu0
        %3589 = vmatprep.mubr.f32.mxu0 0.0
        %3590 = vmatmul.mubr.f32.gmra.mrb[0].mxu0 %v3514
        %v3591 = vpop.f32.mrb[0].mxu0
        %v3592 = vadd.f32 0.0, %v3591
        %v3593 = vpop.f32.mrb[0].mxu0
        %3594 = vdwg.mxu0
        %v3595 = vsel %vm643, %v3587, -inf
        %3596 = vmax.xlane.f32.xlu0 %v3595
        %v3597 = vpop.xlane.xlu0 %3596
        %v3598 = vsel %vm643, %v3592, -inf
        %3599 = vmax.xlane.f32.xlu0 %v3598
        %v3600 = vpop.xlane.xlu0 %3599
        %v3601 = vsub.f32 %v3587, %v3597
        %v3602 = vsub.f32 %v3592, %v3600
        %v3603 = vmul.f32 %v3601, 1.442695
        %v3604 = vpow.pop %v3603
        %v3605 = vmul.f32 %v3602, 1.442695
        %v3606 = vpow.pop %v3605
        %v3607 = vsel %vm643, %v3604, 0.0
        %3608 = vadd.xlane.f32.xlu0 %v3607
        %v3609 = vpop.xlane.xlu0 %3608
        %v3610 = vsel %vm643, %v3606, 0.0
        %3611 = vadd.xlane.f32.xlu0 %v3610
        %v3612 = vpop.xlane.xlu0 %3611
        %v3613 = vrcp.pop %v3609
        %v3614 = vrcp.pop %v3612
        %v3615 = vmul.f32 %v3604, %v3613
        %v3616 = vmul.f32 %v3606, %v3614
        %3617 = vrot.lane.b32.xlu0 %v635, 32
        %v3618 = vpop.permute.xlu0 %3617
        %3619 = vrot.lane.b32.xlu0 %v640, 32
        %v3620 = vpop.permute.xlu0 %3619
        %v3624 = vsel %vm643, %v3615, 0
        %v3627 = vsel %vm643, %v3616, 0
        %3629 = vmatprep.subr.mxu0 0.0
        %3630 = vmatpush1.msra.mxu0 %v3618
        %3631 = vmatprep.subr.mxu0 0.0
        %3632 = vmatpush1.msra.mxu0 %v3620
        %3633 = vmatprep.subr.mxu0 0.0
        %3634 = vmatpush1.msra.mxu0 0.0
        %3635 = vmatprep.subr.mxu0 0.0
        %3636 = vmatpush1.msra.mxu0 0.0
        %3637 = vmatprep.subr.mxu0 0.0
        %3638 = vmatpush1.msra.mxu0 0.0
        %3639 = vmatprep.subr.mxu0 0.0
        %3640 = vmatpush1.msra.mxu0 0.0
        %3641 = vmatprep.subr.mxu0 0.0
        %3642 = vmatpush1.msra.mxu0 0.0
        %3643 = vmatprep.subr.mxu0 0.0
        %3644 = vmatpush1.msra.mxu0 0.0
        %3645 = vmatprep.subr.mxu0 0.0
        %3646 = vmatpush1.msra.mxu0 0.0
        %3647 = vmatprep.subr.mxu0 0.0
        %3648 = vmatpush1.msra.mxu0 0.0
        %3649 = vmatprep.subr.mxu0 0.0
        %3650 = vmatpush1.msra.mxu0 0.0
        %3651 = vmatprep.subr.mxu0 0.0
        %3652 = vmatpush1.msra.mxu0 0.0
        %3653 = vmatprep.subr.mxu0 0.0
        %3654 = vmatpush1.msra.mxu0 0.0
        %3655 = vmatprep.subr.mxu0 0.0
        %3656 = vmatpush1.msra.mxu0 0.0
        %3657 = vmatprep.subr.mxu0 0.0
        %3658 = vmatpush1.msra.mxu0 0.0
        %3659 = vmatprep.subr.mxu0 0.0
        %3660 = vmatpush1.msra.mxu0 0.0
        %3661 = vmatprep.subr.mxu0 0.0
        %3662 = vmatpush1.msra.mxu0 0.0
        %3663 = vmatprep.subr.mxu0 0.0
        %3664 = vmatpush1.msra.mxu0 0.0
        %3665 = vmatprep.subr.mxu0 0.0
        %3666 = vmatpush1.msra.mxu0 0.0
        %3667 = vmatprep.subr.mxu0 0.0
        %3668 = vmatpush1.msra.mxu0 0.0
        %3669 = vmatprep.subr.mxu0 0.0
        %3670 = vmatpush1.msra.mxu0 0.0
        %3671 = vmatprep.subr.mxu0 0.0
        %3672 = vmatpush1.msra.mxu0 0.0
        %3673 = vmatprep.subr.mxu0 0.0
        %3674 = vmatpush1.msra.mxu0 0.0
        %3675 = vmatprep.subr.mxu0 0.0
        %3676 = vmatpush1.msra.mxu0 0.0
        %3677 = vmatprep.subr.mxu0 0.0
        %3678 = vmatpush1.msra.mxu0 0.0
        %3679 = vmatprep.subr.mxu0 0.0
        %3680 = vmatpush1.msra.mxu0 0.0
        %3681 = vmatprep.subr.mxu0 0.0
        %3682 = vmatpush1.msra.mxu0 0.0
        %3683 = vmatprep.subr.mxu0 0.0
        %3684 = vmatpush1.msra.mxu0 0.0
        %3685 = vmatprep.subr.mxu0 0.0
        %3686 = vmatpush1.msra.mxu0 0.0
        %3687 = vmatprep.subr.mxu0 0.0
        %3688 = vmatpush1.msra.mxu0 0.0
        %3689 = vmatprep.subr.mxu0 0.0
        %3690 = vmatpush1.msra.mxu0 0.0
        %3691 = vmatprep.subr.mxu0 0.0
        %3692 = vmatpush1.msra.mxu0 0.0
        %3693 = vmatprep.mubr.f32.mxu0 0.0
        %3694 = vmatmul.mubr.f32.gmra.mrb[0].mxu0 %v3624
        %v3695 = vpop.f32.mrb[0].mxu0
        %v3696 = vadd.f32 0.0, %v3695
        %v3697 = vpop.f32.mrb[0].mxu0
        %3698 = vmatprep.mubr.f32.mxu0 0.0
        %3699 = vmatmul.mubr.f32.gmra.mrb[0].mxu0 %v3627
        %v3700 = vpop.f32.mrb[0].mxu0
        %v3701 = vadd.f32 0.0, %v3700
        %v3702 = vpop.f32.mrb[0].mxu0
        %3703 = vdwg.mxu0
        %3704 = vrot.lane.b32.xlu0 %v548, 16
        %v3705 = vpop.permute.xlu0 %3704
        %3706 = vrot.lane.b32.xlu0 %v554, 16
        %v3707 = vpop.permute.xlu0 %3706
        %3708 = vrot.lane.b32.xlu0 %v550, 16
        %v3709 = vpop.permute.xlu0 %3708
        %3710 = vrot.lane.b32.xlu0 %v556, 16
        %v3711 = vpop.permute.xlu0 %3710
        %v3712 = vsel %vm643, %v3705, 0
        %v3714 = vsel %vm643, %v3707, 0
        %v3716 = vsel %vm643, %v3709, 0
        %v3718 = vsel %vm643, %v3711, 0
        %3720 = vmatprep.subr.mxu0 0.0
        %3721 = vmatpush1.xpose.msra.mxu0 %v3716
        %3722 = vmatprep.subr.mxu0 0.0
        %3723 = vmatpush1.xpose.msra.mxu0 %v3718
        %3724 = vmatprep.subr.mxu0 0.0
        %3725 = vmatpush1.xpose.msra.mxu0 0.0
        %3726 = vmatprep.subr.mxu0 0.0
        %3727 = vmatpush1.xpose.msra.mxu0 0.0
        %3728 = vmatprep.subr.mxu0 0.0
        %3729 = vmatpush1.xpose.msra.mxu0 0.0
        %3730 = vmatprep.subr.mxu0 0.0
        %3731 = vmatpush1.xpose.msra.mxu0 0.0
        %3732 = vmatprep.subr.mxu0 0.0
        %3733 = vmatpush1.xpose.msra.mxu0 0.0
        %3734 = vmatprep.subr.mxu0 0.0
        %3735 = vmatpush1.xpose.msra.mxu0 0.0
        %3736 = vmatprep.subr.mxu0 0.0
        %3737 = vmatpush1.xpose.msra.mxu0 0.0
        %3738 = vmatprep.subr.mxu0 0.0
        %3739 = vmatpush1.xpose.msra.mxu0 0.0
        %3740 = vmatprep.subr.mxu0 0.0
        %3741 = vmatpush1.xpose.msra.mxu0 0.0
        %3742 = vmatprep.subr.mxu0 0.0
        %3743 = vmatpush1.xpose.msra.mxu0 0.0
        %3744 = vmatprep.subr.mxu0 0.0
        %3745 = vmatpush1.xpose.msra.mxu0 0.0
        %3746 = vmatprep.subr.mxu0 0.0
        %3747 = vmatpush1.xpose.msra.mxu0 0.0
        %3748 = vmatprep.subr.mxu0 0.0
        %3749 = vmatpush1.xpose.msra.mxu0 0.0
        %3750 = vmatprep.subr.mxu0 0.0
        %3751 = vmatpush1.xpose.msra.mxu0 0.0
        %3752 = vmatprep.subr.mxu0 0.0
        %3753 = vmatpush1.xpose.msra.mxu0 0.0
        %3754 = vmatprep.subr.mxu0 0.0
        %3755 = vmatpush1.xpose.msra.mxu0 0.0
        %3756 = vmatprep.subr.mxu0 0.0
        %3757 = vmatpush1.xpose.msra.mxu0 0.0
        %3758 = vmatprep.subr.mxu0 0.0
        %3759 = vmatpush1.xpose.msra.mxu0 0.0
        %3760 = vmatprep.subr.mxu0 0.0
        %3761 = vmatpush1.xpose.msra.mxu0 0.0
        %3762 = vmatprep.subr.mxu0 0.0
        %3763 = vmatpush1.xpose.msra.mxu0 0.0
        %3764 = vmatprep.subr.mxu0 0.0
        %3765 = vmatpush1.xpose.msra.mxu0 0.0
        %3766 = vmatprep.subr.mxu0 0.0
        %3767 = vmatpush1.xpose.msra.mxu0 0.0
        %3768 = vmatprep.subr.mxu0 0.0
        %3769 = vmatpush1.xpose.msra.mxu0 0.0
        %3770 = vmatprep.subr.mxu0 0.0
        %3771 = vmatpush1.xpose.msra.mxu0 0.0
        %3772 = vmatprep.subr.mxu0 0.0
        %3773 = vmatpush1.xpose.msra.mxu0 0.0
        %3774 = vmatprep.subr.mxu0 0.0
        %3775 = vmatpush1.xpose.msra.mxu0 0.0
        %3776 = vmatprep.subr.mxu0 0.0
        %3777 = vmatpush1.xpose.msra.mxu0 0.0
        %3778 = vmatprep.subr.mxu0 0.0
        %3779 = vmatpush1.xpose.msra.mxu0 0.0
        %3780 = vmatprep.subr.mxu0 0.0
        %3781 = vmatpush1.xpose.msra.mxu0 0.0
        %3782 = vmatprep.subr.mxu0 0.0
        %3783 = vmatpush1.xpose.msra.mxu0 0.0
        %3784 = vmatprep.mubr.f32.mxu0 0.0
        %3785 = vmatmul.mubr.f32.gmra.mrb[0].mxu0 %v3712
        %v3786 = vpop.f32.mrb[0].mxu0
        %v3787 = vadd.f32 0.0, %v3786
        %v3788 = vpop.f32.mrb[0].mxu0
        %3789 = vmatprep.mubr.f32.mxu0 0.0
        %3790 = vmatmul.mubr.f32.gmra.mrb[0].mxu0 %v3714
        %v3791 = vpop.f32.mrb[0].mxu0
        %v3792 = vadd.f32 0.0, %v3791
        %v3793 = vpop.f32.mrb[0].mxu0
        %3794 = vdwg.mxu0
        %v3795 = vsel %vm643, %v3787, -inf
        %3796 = vmax.xlane.f32.xlu0 %v3795
        %v3797 = vpop.xlane.xlu0 %3796
        %v3798 = vsel %vm643, %v3792, -inf
        %3799 = vmax.xlane.f32.xlu0 %v3798
        %v3800 = vpop.xlane.xlu0 %3799
        %v3801 = vsub.f32 %v3787, %v3797
        %v3802 = vsub.f32 %v3792, %v3800
        %v3803 = vmul.f32 %v3801, 1.442695
        %v3804 = vpow.pop %v3803
        %v3805 = vmul.f32 %v3802, 1.442695
        %v3806 = vpow.pop %v3805
        %v3807 = vsel %vm643, %v3804, 0.0
        %3808 = vadd.xlane.f32.xlu0 %v3807
        %v3809 = vpop.xlane.xlu0 %3808
        %v3810 = vsel %vm643, %v3806, 0.0
        %3811 = vadd.xlane.f32.xlu0 %v3810
        %v3812 = vpop.xlane.xlu0 %3811
        %v3813 = vrcp.pop %v3809
        %v3814 = vrcp.pop %v3812
        %v3815 = vmul.f32 %v3804, %v3813
        %v3816 = vmul.f32 %v3806, %v3814
        %3817 = vrot.lane.b32.xlu0 %v635, 16
        %v3818 = vpop.permute.xlu0 %3817
        %3819 = vrot.lane.b32.xlu0 %v640, 16
        %v3820 = vpop.permute.xlu0 %3819
        %v3824 = vsel %vm643, %v3815, 0
        %v3827 = vsel %vm643, %v3816, 0
        %3829 = vmatprep.subr.mxu0 0.0
        %3830 = vmatpush1.msra.mxu0 %v3818
        %3831 = vmatprep.subr.mxu0 0.0
        %3832 = vmatpush1.msra.mxu0 %v3820
        %3833 = vmatprep.subr.mxu0 0.0
        %3834 = vmatpush1.msra.mxu0 0.0
        %3835 = vmatprep.subr.mxu0 0.0
        %3836 = vmatpush1.msra.mxu0 0.0
        %3837 = vmatprep.subr.mxu0 0.0
        %3838 = vmatpush1.msra.mxu0 0.0
        %3839 = vmatprep.subr.mxu0 0.0
        %3840 = vmatpush1.msra.mxu0 0.0
        %3841 = vmatprep.subr.mxu0 0.0
        %3842 = vmatpush1.msra.mxu0 0.0
        %3843 = vmatprep.subr.mxu0 0.0
        %3844 = vmatpush1.msra.mxu0 0.0
        %3845 = vmatprep.subr.mxu0 0.0
        %3846 = vmatpush1.msra.mxu0 0.0
        %3847 = vmatprep.subr.mxu0 0.0
        %3848 = vmatpush1.msra.mxu0 0.0
        %3849 = vmatprep.subr.mxu0 0.0
        %3850 = vmatpush1.msra.mxu0 0.0
        %3851 = vmatprep.subr.mxu0 0.0
        %3852 = vmatpush1.msra.mxu0 0.0
        %3853 = vmatprep.subr.mxu0 0.0
        %3854 = vmatpush1.msra.mxu0 0.0
        %3855 = vmatprep.subr.mxu0 0.0
        %3856 = vmatpush1.msra.mxu0 0.0
        %3857 = vmatprep.subr.mxu0 0.0
        %3858 = vmatpush1.msra.mxu0 0.0
        %3859 = vmatprep.subr.mxu0 0.0
        %3860 = vmatpush1.msra.mxu0 0.0
        %3861 = vmatprep.subr.mxu0 0.0
        %3862 = vmatpush1.msra.mxu0 0.0
        %3863 = vmatprep.subr.mxu0 0.0
        %3864 = vmatpush1.msra.mxu0 0.0
        %3865 = vmatprep.subr.mxu0 0.0
        %3866 = vmatpush1.msra.mxu0 0.0
        %3867 = vmatprep.subr.mxu0 0.0
        %3868 = vmatpush1.msra.mxu0 0.0
        %3869 = vmatprep.subr.mxu0 0.0
        %3870 = vmatpush1.msra.mxu0 0.0
        %3871 = vmatprep.subr.mxu0 0.0
        %3872 = vmatpush1.msra.mxu0 0.0
        %3873 = vmatprep.subr.mxu0 0.0
        %3874 = vmatpush1.msra.mxu0 0.0
        %3875 = vmatprep.subr.mxu0 0.0
        %3876 = vmatpush1.msra.mxu0 0.0
        %3877 = vmatprep.subr.mxu0 0.0
        %3878 = vmatpush1.msra.mxu0 0.0
        %3879 = vmatprep.subr.mxu0 0.0
        %3880 = vmatpush1.msra.mxu0 0.0
        %3881 = vmatprep.subr.mxu0 0.0
        %3882 = vmatpush1.msra.mxu0 0.0
        %3883 = vmatprep.subr.mxu0 0.0
        %3884 = vmatpush1.msra.mxu0 0.0
        %3885 = vmatprep.subr.mxu0 0.0
        %3886 = vmatpush1.msra.mxu0 0.0
        %3887 = vmatprep.subr.mxu0 0.0
        %3888 = vmatpush1.msra.mxu0 0.0
        %3889 = vmatprep.subr.mxu0 0.0
        %3890 = vmatpush1.msra.mxu0 0.0
        %3891 = vmatprep.subr.mxu0 0.0
        %3892 = vmatpush1.msra.mxu0 0.0
        %3893 = vmatprep.mubr.f32.mxu0 0.0
        %3894 = vmatmul.mubr.f32.gmra.mrb[0].mxu0 %v3824
        %v3895 = vpop.f32.mrb[0].mxu0
        %v3896 = vadd.f32 0.0, %v3895
        %v3897 = vpop.f32.mrb[0].mxu0
        %3898 = vmatprep.mubr.f32.mxu0 0.0
        %3899 = vmatmul.mubr.f32.gmra.mrb[0].mxu0 %v3827
        %v3900 = vpop.f32.mrb[0].mxu0
        %v3901 = vadd.f32 0.0, %v3900
        %v3902 = vpop.f32.mrb[0].mxu0
        %3903 = vdwg.mxu0
        %3906 = vrot.lane.b32.xlu0 %v2696, 16
        %v3907 = vpop.permute.xlu0 %3906
        %3908 = vrot.lane.b32.xlu0 %v2701, 16
        %v3909 = vpop.permute.xlu0 %3908
        %3914 = vrot.lane.b32.xlu0 %v2896, 32
        %v3915 = vpop.permute.xlu0 %3914
        %3916 = vrot.lane.b32.xlu0 %v2901, 32
        %v3917 = vpop.permute.xlu0 %3916
        %3922 = vrot.lane.b32.xlu0 %v3096, 48
        %v3923 = vpop.permute.xlu0 %3922
        %3924 = vrot.lane.b32.xlu0 %v3101, 48
        %v3925 = vpop.permute.xlu0 %3924
        %3930 = vrot.lane.b32.xlu0 %v3296, 64
        %v3931 = vpop.permute.xlu0 %3930
        %3932 = vrot.lane.b32.xlu0 %v3301, 64
        %v3933 = vpop.permute.xlu0 %3932
        %3938 = vrot.lane.b32.xlu0 %v3496, 80
        %v3939 = vpop.permute.xlu0 %3938
        %3940 = vrot.lane.b32.xlu0 %v3501, 80
        %v3941 = vpop.permute.xlu0 %3940
        %3946 = vrot.lane.b32.xlu0 %v3696, 96
        %v3947 = vpop.permute.xlu0 %3946
        %3948 = vrot.lane.b32.xlu0 %v3701, 96
        %v3949 = vpop.permute.xlu0 %3948
        %3954 = vrot.lane.b32.xlu0 %v3896, 112
        %v3955 = vpop.permute.xlu0 %3954
        %3956 = vrot.lane.b32.xlu0 %v3901, 112
        %v3957 = vpop.permute.xlu0 %3956
        %v3960 = vsel %vm643, %v2494, %v3907
        %v3961 = vsel %vm643, %v2499, %v3909
        %v3962 = vsel %vm2294, %v3960, %v3915
        %v3963 = vsel %vm2294, %v3961, %v3917
        %v3964 = vsel %vm2297, %v3962, %v3923
        %v3965 = vsel %vm2297, %v3963, %v3925
        %v3966 = vsel %vm2300, %v3964, %v3931
        %v3967 = vsel %vm2300, %v3965, %v3933
        %v3968 = vsel %vm2303, %v3966, %v3939
        %v3969 = vsel %vm2303, %v3967, %v3941
        %v3970 = vsel %vm2306, %v3968, %v3947
        %v3971 = vsel %vm2306, %v3969, %v3949
        %v3972 = vsel %vm2309, %v3970, %v3955
        %v3973 = vsel %vm2309, %v3971, %v3957
        %v3974 = vld [vmem:[%s300] sm:$0xff]
        %v3975 = vld [vmem:[%s300 + $0x8] sm:$0xff]
        %v3976 = vld [vmem:[%s300 + $0x10] sm:$0xff]
        %v3977 = vld [vmem:[%s300 + $0x18] sm:$0xff]
        %v3978 = vld [vmem:[%s300 + $0x20] sm:$0xff]
        %v3979 = vld [vmem:[%s300 + $0x28] sm:$0xff]
        %v3980 = vld [vmem:[%s300 + $0x30] sm:$0xff]
        %v3981 = vld [vmem:[%s300 + $0x38] sm:$0xff]
        %v3982 = vld [vmem:[%s300 + $0x40] sm:$0xff]
        %v3983 = vld [vmem:[%s300 + $0x48] sm:$0xff]
        %v3984 = vld [vmem:[%s300 + $0x50] sm:$0xff]
        %v3985 = vld [vmem:[%s300 + $0x58] sm:$0xff]
        %v3986 = vld [vmem:[%s300 + $0x60] sm:$0xff]
        %v3987 = vld [vmem:[%s300 + $0x68] sm:$0xff]
        %v3988 = vld [vmem:[%s300 + $0x70] sm:$0xff]
        %v3989 = vld [vmem:[%s300 + $0x78] sm:$0xff]
        %v3990 = vld [vmem:[%s303] sm:$0x1]
        %v3992 = vlaneseq
        %v3993 = vshrl.u32 %v3992, 7
        %v3994 = vsub.s32 0, %v3993
        %v3995 = vrot.slane %v3990, %v3994
        %3997 = vmatprep.subr.mxu0 0.0
        %3998 = vmatpush1.msra.mxu0 %v3974
        %3999 = vmatprep.subr.mxu0 0.0
        %4000 = vmatpush1.msra.mxu0 %v3975
        %4001 = vmatprep.subr.mxu0 0.0
        %4002 = vmatpush1.msra.mxu0 %v3976
        %4003 = vmatprep.subr.mxu0 0.0
        %4004 = vmatpush1.msra.mxu0 %v3977
        %4005 = vmatprep.subr.mxu0 0.0
        %4006 = vmatpush1.msra.mxu0 %v3978
        %4007 = vmatprep.subr.mxu0 0.0
        %4008 = vmatpush1.msra.mxu0 %v3979
        %4009 = vmatprep.subr.mxu0 0.0
        %4010 = vmatpush1.msra.mxu0 %v3980
        %4011 = vmatprep.subr.mxu0 0.0
        %4012 = vmatpush1.msra.mxu0 %v3981
        %4013 = vmatprep.subr.mxu0 0.0
        %4014 = vmatpush1.msra.mxu0 %v3982
        %4015 = vmatprep.subr.mxu0 0.0
        %4016 = vmatpush1.msra.mxu0 %v3983
        %4017 = vmatprep.subr.mxu0 0.0
        %4018 = vmatpush1.msra.mxu0 %v3984
        %4019 = vmatprep.subr.mxu0 0.0
        %4020 = vmatpush1.msra.mxu0 %v3985
        %4021 = vmatprep.subr.mxu0 0.0
        %4022 = vmatpush1.msra.mxu0 %v3986
        %4023 = vmatprep.subr.mxu0 0.0
        %4024 = vmatpush1.msra.mxu0 %v3987
        %4025 = vmatprep.subr.mxu0 0.0
        %4026 = vmatpush1.msra.mxu0 %v3988
        %4027 = vmatprep.subr.mxu0 0.0
        %4028 = vmatpush1.msra.mxu0 %v3989
        %4029 = vmatprep.subr.mxu0 0.0
        %4030 = vmatpush1.msra.mxu0 0.0
        %4031 = vmatprep.subr.mxu0 0.0
        %4032 = vmatpush1.msra.mxu0 0.0
        %4033 = vmatprep.subr.mxu0 0.0
        %4034 = vmatpush1.msra.mxu0 0.0
        %4035 = vmatprep.subr.mxu0 0.0
        %4036 = vmatpush1.msra.mxu0 0.0
        %4037 = vmatprep.subr.mxu0 0.0
        %4038 = vmatpush1.msra.mxu0 0.0
        %4039 = vmatprep.subr.mxu0 0.0
        %4040 = vmatpush1.msra.mxu0 0.0
        %4041 = vmatprep.subr.mxu0 0.0
        %4042 = vmatpush1.msra.mxu0 0.0
        %4043 = vmatprep.subr.mxu0 0.0
        %4044 = vmatpush1.msra.mxu0 0.0
        %4045 = vmatprep.subr.mxu0 0.0
        %4046 = vmatpush1.msra.mxu0 0.0
        %4047 = vmatprep.subr.mxu0 0.0
        %4048 = vmatpush1.msra.mxu0 0.0
        %4049 = vmatprep.subr.mxu0 0.0
        %4050 = vmatpush1.msra.mxu0 0.0
        %4051 = vmatprep.subr.mxu0 0.0
        %4052 = vmatpush1.msra.mxu0 0.0
        %4053 = vmatprep.subr.mxu0 0.0
        %4054 = vmatpush1.msra.mxu0 0.0
        %4055 = vmatprep.subr.mxu0 0.0
        %4056 = vmatpush1.msra.mxu0 0.0
        %4057 = vmatprep.subr.mxu0 0.0
        %4058 = vmatpush1.msra.mxu0 0.0
        %4059 = vmatprep.subr.mxu0 0.0
        %4060 = vmatpush1.msra.mxu0 0.0
        %4061 = vmatprep.mubr.f32.mxu0 0.0
        %4062 = vmatmul.mubr.f32.gmra.mrb[0].mxu0 %v2310
        %v4063 = vpop.f32.mrb[0].mxu0
        %v4064 = vadd.f32 %v3995, %v4063
        %v4065 = vpop.f32.mrb[0].mxu0
        %4066 = vmatprep.mubr.f32.mxu0 0.0
        %4067 = vmatmul.mubr.f32.gmra.mrb[0].mxu0 %v2311
        %v4068 = vpop.f32.mrb[0].mxu0
        %v4069 = vadd.f32 %v3995, %v4068
        %v4070 = vpop.f32.mrb[0].mxu0
        %4071 = vmatprep.mubr.f32.mxu0 0.0
        %4072 = vmatmul.mubr.f32.gmra.mrb[0].mxu0 %v3972
        %v4073 = vpop.f32.mrb[0].mxu0
        %v4074 = vadd.f32 %v3995, %v4073
        %v4075 = vpop.f32.mrb[0].mxu0
        %4076 = vmatprep.mubr.f32.mxu0 0.0
        %4077 = vmatmul.mubr.f32.gmra.mrb[0].mxu0 %v3973
        %v4078 = vpop.f32.mrb[0].mxu0
        %v4079 = vadd.f32 %v3995, %v4078
        %v4080 = vpop.f32.mrb[0].mxu0
        %4081 = vdwg.mxu0
        %4082 = vst [vmem:[#allocation2] sm:$0xff] %v4064
        %4083 = vst [vmem:[#allocation2 + $0x8] sm:$0xff] %v4069
        %4084 = vst [vmem:[#allocation2 + $0x10] sm:$0xff] %v4074
        %4085 = vst [vmem:[#allocation2 + $0x18] sm:$0xff] %v4079
        %p4086 = scmp.eq.s32.totalorder %s25, 1
        // Predicated region
        $region49: #{cvrp_encoder.1} parent=39 // pred_check
          %p4087 = pneg %p4086
        $region50: #{cvrp_encoder.1} parent=39 // pred_check_branch
          %4089 = sbr.rel (%p4087) target = $region52
        $region51: #{cvrp_encoder.1} parent=39 // pred_region
          %4090 = vst [vmem:[#allocation6] sm:$0xff] %v4064
          %4091 = vst [vmem:[#allocation6 + $0x8] sm:$0xff] %v4069
          %4092 = vst [vmem:[#allocation6 + $0x10] sm:$0xff] %v4074
          %4093 = vst [vmem:[#allocation6 + $0x18] sm:$0xff] %v4079
        $region52: #{cvrp_encoder.1} parent=39 // pred_fallthru
          _
        // Predicated region
        $region53: #{cvrp_encoder.1} parent=39 // pred_check
          %p4094 = pneg %p175
        $region54: #{cvrp_encoder.1} parent=39 // pred_check_branch
          %4096 = sbr.rel (%p4094) target = $region56
        $region55: #{cvrp_encoder.1} parent=39 // pred_region
          %s4097 = smul.u32 4, %s24
          %s4099 = ssub.s32 512, 512
          %4100 = vsyncadd [#allocation5], %s4099
          %s4101 = smul.addr %s4097, 128
          %s4102 = scalar_lea.hbm %s5, %s4101
          %s4103 = sshll.u32 [#allocation6], 4
          %s4104 = int_to_ptr.vmem [resolvable:$true] %s4103
          %4109 = dma.vmem_to_hbm [thread:$0]  %s4104, 512, %s4102, [#allocation5], 128, 128, 8
        $region56: #{cvrp_encoder.1} parent=39 // pred_fallthru
          _
        // Predicated region
        $region57: #{cvrp_encoder.1} parent=39 // pred_check
          %p4110 = pneg %p175
        $region58: #{cvrp_encoder.1} parent=39 // pred_check_branch
          %4112 = sbr.rel (%p4110) target = $region60
        $region59: #{cvrp_encoder.1} parent=39 // pred_region
          %4113 = dma.done [#allocation5], 512
        $region60: #{cvrp_encoder.1} parent=39 // pred_fallthru
          _
      $region40: #{cvrp_encoder.1} parent=5 // pred_fallthru
        _
      %p4114 = scmp.le.s32.totalorder 2, %s15
      // Predicated region
      $region61: #{cvrp_encoder.1} parent=5 // pred_check
        %p4115 = pneg %p4114
      $region62: #{cvrp_encoder.1} parent=5 // pred_check_branch
        %4117 = sbr.rel (%p4115) target = $region64
      $region63: #{cvrp_encoder.1} parent=5 // pred_region
        %s4118 = ssub.s32 %s15, 2
      $region64: #{cvrp_encoder.1} parent=5 // pred_fallthru
        _
    $region6: #{cvrp_encoder.1} parent=1 // loop_footer
      %s19 = sadd.s32 1, %s15
    $region7: #{cvrp_encoder.1} parent=1 // loop_footer_branch
      %14 = sbr.rel target = $region3
    $region8: #{cvrp_encoder.1} parent=1 // loop_exit
      _
    %4119 = vsyncpa [#allocation4], 1
    %s4120 = scalar_lea.sflag [#allocation4], 1
    %4121 = vsyncpa %s4120, 1
    %4122 = vsyncpa [#allocation5], 1
    %s4123 = scalar_lea.sflag [#allocation5], 1
    %4124 = vsyncpa %s4123, 1

</llo_original>
